<compile_context>
chip_gen: v7x
topology: tpu7x:2x2x1
jax: 0.10.0
libtpu: 0.0.40
codegen_flags: <defaults>
</compile_context>

<pallas_src>
import jax
import jax.numpy as jnp
from jax.experimental import pallas as pl
from jax.experimental.pallas import tpu as pltpu

LANE = 128      # feature dims padded to multiples of the lane width
TM_MAX = 512    # max destination-node tile
TK_MAX = 2048   # max source-node (reduction) tile


def _round_up(n, m):
    return ((n + m - 1) // m) * m


def _pad2d(x, rows, cols):
    r, c = x.shape
    return jnp.pad(x, ((0, rows - r), (0, cols - c)))


def _tpu_settings():
    """Return (tile_mult, vmem_limit_bytes) tuned per TPU generation.

    v5e and older : 128-aligned tiles (4x128x128 MXU), 128 MiB VMEM -> 96 MiB limit.
    v6e           : 256-aligned tiles (2x256x256 MXU), 128 MiB VMEM -> 96 MiB limit.
    v7x / unknown : 256-aligned tiles, only 64 MiB VMEM per TC -> conservative 48 MiB.
    """
    gen = 0
    try:
        kind = jax.devices()[0].device_kind.lower()
        for g in (7, 6, 5, 4, 3):
            if ("v%d" % g) in kind:
                gen = g
                break
    except Exception:
        gen = 0
    tile_mult = 128 if (gen and gen <= 5) else 256
    vmem_limit = (96 << 20) if gen in (5, 6) else (48 << 20)
    return tile_mult, vmem_limit


def _choose_tiles(n, tile_mult, tm_max=TM_MAX, tk_max=TK_MAX):
    """Pick (npad, tm, tk) so that tm | npad, tk | npad and tiles are big enough to
    amortize the per-grid-step overhead (small graphs collapse to one tile)."""
    npad = _round_up(n, tile_mult)
    if npad <= tm_max:
        return npad, npad, npad           # single dst tile, single src tile
    if npad <= tk_max:
        npad = _round_up(npad, tm_max)
        return npad, tm_max, npad         # whole src axis in one reduction step
    npad = _round_up(npad, tk_max)        # tm_max divides tk_max divides npad
    return npad, tm_max, tk_max


def _layer_body(a_ref, xsrc_ref, xdst_ref, ws_ref, wn_ref, b_ref,
                out_ref, acc_ref, deg_ref, *, apply_relu, project_first):
    """One SAGEConv (mean) layer step, tiled over (dst tile i, src tile k).

    acc[i] += A[i,k] @ xsrc[k]   (f32 VMEM accumulator over the reduction axis k)
    deg[i] += sum_k A[i,k]       (in-kernel degree; no wrapper pass over A)
    finalize: out[i] = xdst[i] @ Wself^T + g(acc[i]/deg[i]) + b
              g = identity if xsrc was pre-projected, else (.) @ Wneigh^T
    """
    k = pl.program_id(1)

    @pl.when(k == 0)
    def _():
        acc_ref[...] = jnp.zeros_like(acc_ref)
        deg_ref[...] = jnp.zeros_like(deg_ref)

    # int8 {0,1} -> f32 (exact) for the degree reduce, -> bf16 for the MXU.
    a_f32 = a_ref[...].astype(jnp.float32)
    deg_ref[...] += jnp.sum(a_f32, axis=1, keepdims=True)
    acc_ref[...] += jnp.dot(a_f32.astype(jnp.bfloat16), xsrc_ref[...],
                            preferred_element_type=jnp.float32)

    @pl.when(k == pl.num_programs(1) - 1)
    def _():
        inv_deg = 1.0 / jnp.maximum(deg_ref[...], 1.0)   # isolated nodes -> neigh = 0
        h = jnp.dot(xdst_ref[...], ws_ref[...], preferred_element_type=jnp.float32)
        if project_first:
            h = h + acc_ref[...] * inv_deg
        else:
            neigh = (acc_ref[...] * inv_deg).astype(jnp.bfloat16)
            h = h + jnp.dot(neigh, wn_ref[...], preferred_element_type=jnp.float32)
        h = h + b_ref[...]
        if apply_relu:
            h = jnp.maximum(h, 0.0)
        out_ref[...] = h.astype(out_ref.dtype)


def _make_kernel(*, apply_relu, project_first):
    if project_first:
        def kernel(a_ref, xsrc_ref, xdst_ref, ws_ref, b_ref, out_ref, acc_ref, deg_ref):
            _layer_body(a_ref, xsrc_ref, xdst_ref, ws_ref, None, b_ref,
                        out_ref, acc_ref, deg_ref,
                        apply_relu=apply_relu, project_first=True)
    else:
        def kernel(a_ref, xsrc_ref, xdst_ref, ws_ref, wn_ref, b_ref, out_ref, acc_ref, deg_ref):
            _layer_body(a_ref, xsrc_ref, xdst_ref, ws_ref, wn_ref, b_ref,
                        out_ref, acc_ref, deg_ref,
                        apply_relu=apply_relu, project_first=False)
    return kernel


def _sage_layer(adj_i8, x_p, w_self_t, w_neigh_t, b,
                *, apply_relu, out_dtype, tm, tk, vmem_limit):
    npad = adj_i8.shape[0]
    fin = x_p.shape[1]
    fout = w_self_t.shape[1]

    # Project-first when the output panel is no wider than the input panel:
    # mean_j(h_j) @ Wn^T == mean_j(h_j @ Wn^T), so aggregate at the narrower width.
    project_first = fout <= fin
    if project_first:
        xsrc = jnp.dot(x_p, w_neigh_t,
                       preferred_element_type=jnp.float32).astype(jnp.bfloat16)
        agg_width = fout
    else:
        xsrc = x_p
        agg_width = fin

    grid = (npad // tm, npad // tk)
    kernel = _make_kernel(apply_relu=apply_relu, project_first=project_first)

    in_specs = [
        pl.BlockSpec((tm, tk), lambda i, k: (i, k)),           # A tile (int8, 0/1)
        pl.BlockSpec((tk, agg_width), lambda i, k: (k, 0)),    # source feats (maybe projected)
        pl.BlockSpec((tm, fin), lambda i, k: (i, 0)),          # dest feats (self term)
        pl.BlockSpec((fin, fout), lambda i, k: (0, 0)),        # W_self^T (pre-transposed)
    ]
    operands = [adj_i8, xsrc, x_p, w_self_t]
    if not project_first:
        in_specs.append(pl.BlockSpec((fin, fout), lambda i, k: (0, 0)))   # W_neigh^T
        operands.append(w_neigh_t)
    in_specs.append(pl.BlockSpec((1, fout), lambda i, k: (0, 0)))         # bias (f32)
    operands.append(b)

    return pl.pallas_call(
        kernel,
        out_shape=jax.ShapeDtypeStruct((npad, fout), out_dtype),
        grid_spec=pltpu.PrefetchScalarGridSpec(
            num_scalar_prefetch=0,
            grid=grid,
            in_specs=in_specs,
            out_specs=pl.BlockSpec((tm, fout), lambda i, k: (i, 0)),
            scratch_shapes=[
                pltpu.VMEM((tm, agg_width), jnp.float32),   # neighbor-sum accumulator
                pltpu.VMEM((tm, 1), jnp.float32),           # degree accumulator
            ],
        ),
        compiler_params=pltpu.CompilerParams(
            dimension_semantics=("parallel", "arbitrary"),
            vmem_limit_bytes=vmem_limit,
        ),
    )(*operands)


def sage_forward(adj, x, params):
    """2-layer GraphSAGE forward. adj: [N, N] float (A[i,j]=1 iff edge j->i), x: [N, Fin]."""
    n, in_feats = x.shape
    hid_feats = params["w_self1"].shape[0]
    out_feats = params["w_self2"].shape[0]

    tile_mult, vmem_limit = _tpu_settings()
    npad, tm, tk = _choose_tiles(n, tile_mult)

    fin_p = _round_up(in_feats, LANE)
    hid_p = _round_up(hid_feats, LANE)
    out_p = _round_up(out_feats, LANE)

    # Pad + cast once (fused by XLA when this function is jitted). Adjacency is stored
    # int8 (0/1 is exact) -> half the HBM bytes of the dominant operand per kernel read.
    adj_i8 = _pad2d(adj, npad, npad).astype(jnp.int8)
    x_p = _pad2d(x, npad, fin_p).astype(jnp.bfloat16)

    # Pre-transposed, lane-padded weights: [in, out] bf16. Biases stay f32.
    ws1 = _pad2d(params["w_self1"].T, fin_p, hid_p).astype(jnp.bfloat16)
    wn1 = _pad2d(params["w_neigh1"].T, fin_p, hid_p).astype(jnp.bfloat16)
    b1 = _pad2d(params["b1"].reshape(1, -1).astype(jnp.float32), 1, hid_p)
    ws2 = _pad2d(params["w_self2"].T, hid_p, out_p).astype(jnp.bfloat16)
    wn2 = _pad2d(params["w_neigh2"].T, hid_p, out_p).astype(jnp.bfloat16)
    b2 = _pad2d(params["b2"].reshape(1, -1).astype(jnp.float32), 1, out_p)

    h1 = _sage_layer(adj_i8, x_p, ws1, wn1, b1, apply_relu=True,
                     out_dtype=jnp.bfloat16, tm=tm, tk=tk, vmem_limit=vmem_limit)
    h2 = _sage_layer(adj_i8, h1, ws2, wn2, b2, apply_relu=False,
                     out_dtype=jnp.float32, tm=tm, tk=tk, vmem_limit=vmem_limit)
    return h2[:n, :out_feats]


def sage_reference(adj, x, params):
    """Pure-JAX reference with matching bf16 operand / f32 accumulation casts and the
    same project-first-vs-aggregate-first choice as the kernel."""
    adj_bf = adj.astype(jnp.bfloat16)
    deg = jnp.sum(adj, axis=1, keepdims=True)
    inv_deg = 1.0 / jnp.maximum(deg, 1.0)

    def layer(h, w_self, w_neigh, b, relu):
        h_bf = h.astype(jnp.bfloat16)
        fin_p = _round_up(h.shape[1], LANE)
        fout_p = _round_up(w_self.shape[0], LANE)
        self_t = jnp.dot(h_bf, w_self.T.astype(jnp.bfloat16),
                         preferred_element_type=jnp.float32)
        if fout_p <= fin_p:   # project-first (matches kernel)
            xproj = jnp.dot(h_bf, w_neigh.T.astype(jnp.bfloat16),
                            preferred_element_type=jnp.float32).astype(jnp.bfloat16)
            neigh = jnp.dot(adj_bf, xproj, preferred_element_type=jnp.float32) * inv_deg
        else:                 # aggregate-first
            agg = jnp.dot(adj_bf, h_bf, preferred_element_type=jnp.float32) * inv_deg
            neigh = jnp.dot(agg.astype(jnp.bfloat16), w_neigh.T.astype(jnp.bfloat16),
                            preferred_element_type=jnp.float32)
        out = self_t + neigh + b.astype(jnp.float32)
        return jnp.maximum(out, 0.0) if relu else out

    h1 = layer(x, params["w_self1"], params["w_neigh1"], params["b1"], True)
    h2 = layer(h1, params["w_self2"], params["w_neigh2"], params["b2"], False)
    return h2


if __name__ == "__main__":
    # Small deterministic problem: 200 nodes (pads to a single 256-node tile),
    # in=8, hid=32, out=16 (each padded to one 128-lane panel).
    N, IN_FEATS, HID_FEATS, OUT_FEATS = 200, 8, 32, 16

    key = jax.random.PRNGKey(0)
    k_adj, k_x, k1, k2, k3, k4, kb1, kb2 = jax.random.split(key, 8)

    # Random directed graph as a dense float adjacency A[i, j] = edge j -> i.
    adj = (jax.random.uniform(k_adj, (N, N)) < 0.05).astype(jnp.float32)
    adj = adj * (1.0 - jnp.eye(N, dtype=jnp.float32))     # no self loops

    x = jax.random.normal(k_x, (N, IN_FEATS), dtype=jnp.float32)

    def lin_init(k, out_f, in_f):
        scale = 1.0 / jnp.sqrt(jnp.float32(in_f))
        return jax.random.normal(k, (out_f, in_f), dtype=jnp.float32) * scale

    params = {
        "w_self1":  lin_init(k1, HID_FEATS, IN_FEATS),
        "w_neigh1": lin_init(k2, HID_FEATS, IN_FEATS),
        "b1":       0.1 * jax.random.normal(kb1, (HID_FEATS,), dtype=jnp.float32),
        "w_self2":  lin_init(k3, OUT_FEATS, HID_FEATS),
        "w_neigh2": lin_init(k4, OUT_FEATS, HID_FEATS),
        "b2":       0.1 * jax.random.normal(kb2, (OUT_FEATS,), dtype=jnp.float32),
    }

    fwd = jax.jit(sage_forward)   # fuses the pad/cast/pre-projection wrapper passes
    out = jax.block_until_ready(fwd(adj, x, params))
    ref = jax.block_until_ready(sage_reference(adj, x, params))

    assert out.shape == (N, OUT_FEATS)
    assert jnp.allclose(out, ref, atol=2e-2, rtol=2e-2), (
        float(jnp.max(jnp.abs(out - ref))))
    print("KERNEL_OK")
</pallas_src>

<mosaic_0001>
module attributes {stable_mosaic.version = 11 : i64} {
  func.func @kernel(%arg0: i32, %arg1: i32, %arg2: memref<256x256xi8, #tpu.memory_space<vmem>>, %arg3: memref<256x128xbf16, #tpu.memory_space<vmem>>, %arg4: memref<256x128xbf16, #tpu.memory_space<vmem>>, %arg5: memref<128x128xbf16, #tpu.memory_space<vmem>>, %arg6: memref<1x128xf32, #tpu.memory_space<vmem>>, %arg7: memref<256x128xf32, #tpu.memory_space<vmem>>, %arg8: memref<256x128xf32, #tpu.memory_space<vmem>>, %arg9: memref<256x1xf32, #tpu.memory_space<vmem>>) attributes {dimension_semantics = [#tpu.dimension_semantics<parallel>, #tpu.dimension_semantics<arbitrary>], iteration_bounds = array<i64: 1, 1>, scalar_prefetch = 0 : i64, scratch_operands = 2 : i64, tpu.core_type = #tpu.core_type<tc>, window_params = [{transform_indices = @transform_0, window_bounds = array<i64: 256, 256>}, {transform_indices = @transform_1, window_bounds = array<i64: 256, 128>}, {transform_indices = @transform_2, window_bounds = array<i64: 256, 128>}, {pipeline_mode = #tpu.pipeline_mode<synchronous>, transform_indices = @transform_3, window_bounds = array<i64: 128, 128>}, {pipeline_mode = #tpu.pipeline_mode<synchronous>, transform_indices = @transform_4, window_bounds = array<i64: 1, 128>}, {transform_indices = @transform_5, window_bounds = array<i64: 256, 128>}]} {
    %c0_i32 = arith.constant 0 : i32
    %0 = arith.cmpi eq, %arg1, %c0_i32 : i32
    %1 = arith.extui %0 : i1 to i32
    %c0_i32_0 = arith.constant 0 : i32
    %2 = arith.cmpi ne, %1, %c0_i32_0 : i32
    scf.if %2 {
      %cst_15 = arith.constant 0.000000e+00 : f32
      %19 = vector.broadcast %cst_15 : f32 to vector<256x128xf32>
      %c0_16 = arith.constant 0 : index
      %c0_17 = arith.constant 0 : index
      %20 = vector.load %arg8[%c0_16, %c0_17] : memref<256x128xf32, #tpu.memory_space<vmem>>, vector<256x128xf32>
      tpu.vector_store %arg8[%c0_16, %c0_17], %19 {strides = array<i32>} : memref<256x128xf32, #tpu.memory_space<vmem>>, vector<256x128xf32>,
      %cst_18 = arith.constant 0.000000e+00 : f32
      %21 = vector.broadcast %cst_18 : f32 to vector<256x1xf32>
      %c0_19 = arith.constant 0 : index
      %c0_20 = arith.constant 0 : index
      %22 = vector.load %arg9[%c0_19, %c0_20] : memref<256x1xf32, #tpu.memory_space<vmem>>, vector<256x1xf32>
      tpu.vector_store %arg9[%c0_19, %c0_20], %21 {strides = array<i32>} : memref<256x1xf32, #tpu.memory_space<vmem>>, vector<256x1xf32>,
    } else {
    }
    %c0 = arith.constant 0 : index
    %c0_1 = arith.constant 0 : index
    %3 = vector.load %arg2[%c0, %c0_1] : memref<256x256xi8, #tpu.memory_space<vmem>>, vector<256x256xi8>
    %4 = arith.sitofp %3 : vector<256x256xi8> to vector<256x256xf32>
    %c0_2 = arith.constant 0 : index
    %c0_3 = arith.constant 0 : index
    %5 = vector.load %arg9[%c0_2, %c0_3] : memref<256x1xf32, #tpu.memory_space<vmem>>, vector<256x1xf32>
    %cst = arith.constant dense<0.000000e+00> : vector<256xf32>
    %6 = vector.multi_reduction <add>, %4, %cst [1] : vector<256x256xf32> to vector<256xf32>
    %7 = vector.shape_cast %6 : vector<256xf32> to vector<256x1xf32>
    %8 = arith.addf %5, %7 : vector<256x1xf32>
    %c0_4 = arith.constant 0 : index
    %c0_5 = arith.constant 0 : index
    %9 = vector.load %arg9[%c0_4, %c0_5] : memref<256x1xf32, #tpu.memory_space<vmem>>, vector<256x1xf32>
    tpu.vector_store %arg9[%c0_4, %c0_5], %8 {strides = array<i32>} : memref<256x1xf32, #tpu.memory_space<vmem>>, vector<256x1xf32>,
    %c0_6 = arith.constant 0 : index
    %c0_7 = arith.constant 0 : index
    %10 = vector.load %arg8[%c0_6, %c0_7] : memref<256x128xf32, #tpu.memory_space<vmem>>, vector<256x128xf32>
    %11 = arith.truncf %4 : vector<256x256xf32> to vector<256x256xbf16>
    %c0_8 = arith.constant 0 : index
    %c0_9 = arith.constant 0 : index
    %12 = vector.load %arg3[%c0_8, %c0_9] : memref<256x128xbf16, #tpu.memory_space<vmem>>, vector<256x128xbf16>
    %cst_10 = arith.constant dense<0.000000e+00> : vector<256x128xf32>
    %13 = tpu.matmul %11, %12, %cst_10 {dimension_numbers = #tpu.dot_dimension_numbers<[1], [0], [0], [1], [0, 0, 1, 1], [], []>} : vector<256x256xbf16>, vector<256x128xbf16>, vector<256x128xf32> -> vector<256x128xf32>
    %14 = arith.addf %10, %13 : vector<256x128xf32>
    %c0_11 = arith.constant 0 : index
    %c0_12 = arith.constant 0 : index
    %15 = vector.load %arg8[%c0_11, %c0_12] : memref<256x128xf32, #tpu.memory_space<vmem>>, vector<256x128xf32>
    tpu.vector_store %arg8[%c0_11, %c0_12], %14 {strides = array<i32>} : memref<256x128xf32, #tpu.memory_space<vmem>>, vector<256x128xf32>,
    %c0_i32_13 = arith.constant 0 : i32
    %16 = arith.cmpi eq, %arg1, %c0_i32_13 : i32
    %17 = arith.extui %16 : i1 to i32
    %c0_i32_14 = arith.constant 0 : i32
    %18 = arith.cmpi ne, %17, %c0_i32_14 : i32
    scf.if %18 {
      %c0_15 = arith.constant 0 : index
      %c0_16 = arith.constant 0 : index
      %19 = vector.load %arg9[%c0_15, %c0_16] : memref<256x1xf32, #tpu.memory_space<vmem>>, vector<256x1xf32>
      %cst_17 = arith.constant 1.000000e+00 : f32
      %20 = vector.broadcast %cst_17 : f32 to vector<256x1xf32>
      %21 = arith.maximumf %19, %20 : vector<256x1xf32>
      %cst_18 = arith.constant 1.000000e+00 : f32
      %22 = vector.broadcast %cst_18 : f32 to vector<256x1xf32>
      %23 = arith.divf %22, %21 : vector<256x1xf32>
      %c0_19 = arith.constant 0 : index
      %c0_20 = arith.constant 0 : index
      %24 = vector.load %arg4[%c0_19, %c0_20] : memref<256x128xbf16, #tpu.memory_space<vmem>>, vector<256x128xbf16>
      %c0_21 = arith.constant 0 : index
      %c0_22 = arith.constant 0 : index
      %25 = vector.load %arg5[%c0_21, %c0_22] : memref<128x128xbf16, #tpu.memory_space<vmem>>, vector<128x128xbf16>
      %cst_23 = arith.constant dense<0.000000e+00> : vector<256x128xf32>
      %26 = tpu.matmul %24, %25, %cst_23 {dimension_numbers = #tpu.dot_dimension_numbers<[1], [0], [0], [1], [0, 0, 1, 1], [], []>} : vector<256x128xbf16>, vector<128x128xbf16>, vector<256x128xf32> -> vector<256x128xf32>
      %c0_24 = arith.constant 0 : index
      %c0_25 = arith.constant 0 : index
      %27 = vector.load %arg8[%c0_24, %c0_25] : memref<256x128xf32, #tpu.memory_space<vmem>>, vector<256x128xf32>
      %28 = vector.broadcast %23 : vector<256x1xf32> to vector<256x128xf32>
      %29 = arith.mulf %27, %28 : vector<256x128xf32>
      %30 = arith.addf %26, %29 : vector<256x128xf32>
      %c0_26 = arith.constant 0 : index
      %c0_27 = arith.constant 0 : index
      %31 = vector.load %arg6[%c0_26, %c0_27] : memref<1x128xf32, #tpu.memory_space<vmem>>, vector<1x128xf32>
      %32 = vector.broadcast %31 : vector<1x128xf32> to vector<256x128xf32>
      %33 = arith.addf %30, %32 : vector<256x128xf32>
      %c0_28 = arith.constant 0 : index
      %c0_29 = arith.constant 0 : index
      %34 = vector.load %arg7[%c0_28, %c0_29] : memref<256x128xf32, #tpu.memory_space<vmem>>, vector<256x128xf32>
      tpu.vector_store %arg7[%c0_28, %c0_29], %33 {strides = array<i32>} : memref<256x128xf32, #tpu.memory_space<vmem>>, vector<256x128xf32>,
    } else {
    }
    return
  }
  func.func @transform_0(%arg0: i32, %arg1: i32) -> (i32, i32) {
    %c0_i32 = arith.constant 0 : i32
    return %arg0, %arg1 : i32, i32
  }
  func.func @transform_1(%arg0: i32, %arg1: i32) -> (i32, i32) {
    %c0_i32 = arith.constant 0 : i32
    %c0_i32_0 = arith.constant 0 : i32
    return %arg1, %c0_i32 : i32, i32
  }
  func.func @transform_2(%arg0: i32, %arg1: i32) -> (i32, i32) {
    %c0_i32 = arith.constant 0 : i32
    %c0_i32_0 = arith.constant 0 : i32
    return %arg0, %c0_i32 : i32, i32
  }
  func.func @transform_3(%arg0: i32, %arg1: i32) -> (i32, i32) {
    %c0_i32 = arith.constant 0 : i32
    %c0_i32_0 = arith.constant 0 : i32
    %c0_i32_1 = arith.constant 0 : i32
    return %c0_i32, %c0_i32_0 : i32, i32
  }
  func.func @transform_4(%arg0: i32, %arg1: i32) -> (i32, i32) {
    %c0_i32 = arith.constant 0 : i32
    %c0_i32_0 = arith.constant 0 : i32
    %c0_i32_1 = arith.constant 0 : i32
    return %c0_i32, %c0_i32_0 : i32, i32
  }
  func.func @transform_5(%arg0: i32, %arg1: i32) -> (i32, i32) {
    %c0_i32 = arith.constant 0 : i32
    %c0_i32_0 = arith.constant 0 : i32
    return %arg0, %c0_i32 : i32, i32
  }
}

module attributes {stable_mosaic.version = 11 : i64} {
  func.func @kernel(%arg0: i32, %arg1: i32, %arg2: memref<256x256xi8, #tpu.memory_space<vmem>>, %arg3: memref<256x128xbf16, #tpu.memory_space<vmem>>, %arg4: memref<256x128xbf16, #tpu.memory_space<vmem>>, %arg5: memref<128x128xbf16, #tpu.memory_space<vmem>>, %arg6: memref<1x128xf32, #tpu.memory_space<vmem>>, %arg7: memref<256x128xbf16, #tpu.memory_space<vmem>>, %arg8: memref<256x128xf32, #tpu.memory_space<vmem>>, %arg9: memref<256x1xf32, #tpu.memory_space<vmem>>) attributes {dimension_semantics = [#tpu.dimension_semantics<parallel>, #tpu.dimension_semantics<arbitrary>], iteration_bounds = array<i64: 1, 1>, scalar_prefetch = 0 : i64, scratch_operands = 2 : i64, tpu.core_type = #tpu.core_type<tc>, window_params = [{transform_indices = @transform_0, window_bounds = array<i64: 256, 256>}, {transform_indices = @transform_1, window_bounds = array<i64: 256, 128>}, {transform_indices = @transform_2, window_bounds = array<i64: 256, 128>}, {pipeline_mode = #tpu.pipeline_mode<synchronous>, transform_indices = @transform_3, window_bounds = array<i64: 128, 128>}, {pipeline_mode = #tpu.pipeline_mode<synchronous>, transform_indices = @transform_4, window_bounds = array<i64: 1, 128>}, {transform_indices = @transform_5, window_bounds = array<i64: 256, 128>}]} {
    %c0_i32 = arith.constant 0 : i32
    %0 = arith.cmpi eq, %arg1, %c0_i32 : i32
    %1 = arith.extui %0 : i1 to i32
    %c0_i32_0 = arith.constant 0 : i32
    %2 = arith.cmpi ne, %1, %c0_i32_0 : i32
    scf.if %2 {
      %cst_15 = arith.constant 0.000000e+00 : f32
      %19 = vector.broadcast %cst_15 : f32 to vector<256x128xf32>
      %c0_16 = arith.constant 0 : index
      %c0_17 = arith.constant 0 : index
      %20 = vector.load %arg8[%c0_16, %c0_17] : memref<256x128xf32, #tpu.memory_space<vmem>>, vector<256x128xf32>
      tpu.vector_store %arg8[%c0_16, %c0_17], %19 {strides = array<i32>} : memref<256x128xf32, #tpu.memory_space<vmem>>, vector<256x128xf32>,
      %cst_18 = arith.constant 0.000000e+00 : f32
      %21 = vector.broadcast %cst_18 : f32 to vector<256x1xf32>
      %c0_19 = arith.constant 0 : index
      %c0_20 = arith.constant 0 : index
      %22 = vector.load %arg9[%c0_19, %c0_20] : memref<256x1xf32, #tpu.memory_space<vmem>>, vector<256x1xf32>
      tpu.vector_store %arg9[%c0_19, %c0_20], %21 {strides = array<i32>} : memref<256x1xf32, #tpu.memory_space<vmem>>, vector<256x1xf32>,
    } else {
    }
    %c0 = arith.constant 0 : index
    %c0_1 = arith.constant 0 : index
    %3 = vector.load %arg2[%c0, %c0_1] : memref<256x256xi8, #tpu.memory_space<vmem>>, vector<256x256xi8>
    %4 = arith.sitofp %3 : vector<256x256xi8> to vector<256x256xf32>
    %c0_2 = arith.constant 0 : index
    %c0_3 = arith.constant 0 : index
    %5 = vector.load %arg9[%c0_2, %c0_3] : memref<256x1xf32, #tpu.memory_space<vmem>>, vector<256x1xf32>
    %cst = arith.constant dense<0.000000e+00> : vector<256xf32>
    %6 = vector.multi_reduction <add>, %4, %cst [1] : vector<256x256xf32> to vector<256xf32>
    %7 = vector.shape_cast %6 : vector<256xf32> to vector<256x1xf32>
    %8 = arith.addf %5, %7 : vector<256x1xf32>
    %c0_4 = arith.constant 0 : index
    %c0_5 = arith.constant 0 : index
    %9 = vector.load %arg9[%c0_4, %c0_5] : memref<256x1xf32, #tpu.memory_space<vmem>>, vector<256x1xf32>
    tpu.vector_store %arg9[%c0_4, %c0_5], %8 {strides = array<i32>} : memref<256x1xf32, #tpu.memory_space<vmem>>, vector<256x1xf32>,
    %c0_6 = arith.constant 0 : index
    %c0_7 = arith.constant 0 : index
    %10 = vector.load %arg8[%c0_6, %c0_7] : memref<256x128xf32, #tpu.memory_space<vmem>>, vector<256x128xf32>
    %11 = arith.truncf %4 : vector<256x256xf32> to vector<256x256xbf16>
    %c0_8 = arith.constant 0 : index
    %c0_9 = arith.constant 0 : index
    %12 = vector.load %arg3[%c0_8, %c0_9] : memref<256x128xbf16, #tpu.memory_space<vmem>>, vector<256x128xbf16>
    %cst_10 = arith.constant dense<0.000000e+00> : vector<256x128xf32>
    %13 = tpu.matmul %11, %12, %cst_10 {dimension_numbers = #tpu.dot_dimension_numbers<[1], [0], [0], [1], [0, 0, 1, 1], [], []>} : vector<256x256xbf16>, vector<256x128xbf16>, vector<256x128xf32> -> vector<256x128xf32>
    %14 = arith.addf %10, %13 : vector<256x128xf32>
    %c0_11 = arith.constant 0 : index
    %c0_12 = arith.constant 0 : index
    %15 = vector.load %arg8[%c0_11, %c0_12] : memref<256x128xf32, #tpu.memory_space<vmem>>, vector<256x128xf32>
    tpu.vector_store %arg8[%c0_11, %c0_12], %14 {strides = array<i32>} : memref<256x128xf32, #tpu.memory_space<vmem>>, vector<256x128xf32>,
    %c0_i32_13 = arith.constant 0 : i32
    %16 = arith.cmpi eq, %arg1, %c0_i32_13 : i32
    %17 = arith.extui %16 : i1 to i32
    %c0_i32_14 = arith.constant 0 : i32
    %18 = arith.cmpi ne, %17, %c0_i32_14 : i32
    scf.if %18 {
      %c0_15 = arith.constant 0 : index
      %c0_16 = arith.constant 0 : index
      %19 = vector.load %arg9[%c0_15, %c0_16] : memref<256x1xf32, #tpu.memory_space<vmem>>, vector<256x1xf32>
      %cst_17 = arith.constant 1.000000e+00 : f32
      %20 = vector.broadcast %cst_17 : f32 to vector<256x1xf32>
      %21 = arith.maximumf %19, %20 : vector<256x1xf32>
      %cst_18 = arith.constant 1.000000e+00 : f32
      %22 = vector.broadcast %cst_18 : f32 to vector<256x1xf32>
      %23 = arith.divf %22, %21 : vector<256x1xf32>
      %c0_19 = arith.constant 0 : index
      %c0_20 = arith.constant 0 : index
      %24 = vector.load %arg4[%c0_19, %c0_20] : memref<256x128xbf16, #tpu.memory_space<vmem>>, vector<256x128xbf16>
      %c0_21 = arith.constant 0 : index
      %c0_22 = arith.constant 0 : index
      %25 = vector.load %arg5[%c0_21, %c0_22] : memref<128x128xbf16, #tpu.memory_space<vmem>>, vector<128x128xbf16>
      %cst_23 = arith.constant dense<0.000000e+00> : vector<256x128xf32>
      %26 = tpu.matmul %24, %25, %cst_23 {dimension_numbers = #tpu.dot_dimension_numbers<[1], [0], [0], [1], [0, 0, 1, 1], [], []>} : vector<256x128xbf16>, vector<128x128xbf16>, vector<256x128xf32> -> vector<256x128xf32>
      %c0_24 = arith.constant 0 : index
      %c0_25 = arith.constant 0 : index
      %27 = vector.load %arg8[%c0_24, %c0_25] : memref<256x128xf32, #tpu.memory_space<vmem>>, vector<256x128xf32>
      %28 = vector.broadcast %23 : vector<256x1xf32> to vector<256x128xf32>
      %29 = arith.mulf %27, %28 : vector<256x128xf32>
      %30 = arith.addf %26, %29 : vector<256x128xf32>
      %c0_26 = arith.constant 0 : index
      %c0_27 = arith.constant 0 : index
      %31 = vector.load %arg6[%c0_26, %c0_27] : memref<1x128xf32, #tpu.memory_space<vmem>>, vector<1x128xf32>
      %32 = vector.broadcast %31 : vector<1x128xf32> to vector<256x128xf32>
      %33 = arith.addf %30, %32 : vector<256x128xf32>
      %cst_28 = arith.constant 0.000000e+00 : f32
      %34 = vector.broadcast %cst_28 : f32 to vector<256x128xf32>
      %35 = arith.maximumf %33, %34 : vector<256x128xf32>
      %36 = arith.truncf %35 : vector<256x128xf32> to vector<256x128xbf16>
      %c0_29 = arith.constant 0 : index
      %c0_30 = arith.constant 0 : index
      %37 = vector.load %arg7[%c0_29, %c0_30] : memref<256x128xbf16, #tpu.memory_space<vmem>>, vector<256x128xbf16>
      tpu.vector_store %arg7[%c0_29, %c0_30], %36 {strides = array<i32>} : memref<256x128xbf16, #tpu.memory_space<vmem>>, vector<256x128xbf16>,
    } else {
    }
    return
  }
  func.func @transform_0(%arg0: i32, %arg1: i32) -> (i32, i32) {
    %c0_i32 = arith.constant 0 : i32
    return %arg0, %arg1 : i32, i32
  }
  func.func @transform_1(%arg0: i32, %arg1: i32) -> (i32, i32) {
    %c0_i32 = arith.constant 0 : i32
    %c0_i32_0 = arith.constant 0 : i32
    return %arg1, %c0_i32 : i32, i32
  }
  func.func @transform_2(%arg0: i32, %arg1: i32) -> (i32, i32) {
    %c0_i32 = arith.constant 0 : i32
    %c0_i32_0 = arith.constant 0 : i32
    return %arg0, %c0_i32 : i32, i32
  }
  func.func @transform_3(%arg0: i32, %arg1: i32) -> (i32, i32) {
    %c0_i32 = arith.constant 0 : i32
    %c0_i32_0 = arith.constant 0 : i32
    %c0_i32_1 = arith.constant 0 : i32
    return %c0_i32, %c0_i32_0 : i32, i32
  }
  func.func @transform_4(%arg0: i32, %arg1: i32) -> (i32, i32) {
    %c0_i32 = arith.constant 0 : i32
    %c0_i32_0 = arith.constant 0 : i32
    %c0_i32_1 = arith.constant 0 : i32
    return %c0_i32, %c0_i32_0 : i32, i32
  }
  func.func @transform_5(%arg0: i32, %arg1: i32) -> (i32, i32) {
    %c0_i32 = arith.constant 0 : i32
    %c0_i32_0 = arith.constant 0 : i32
    return %arg0, %c0_i32 : i32, i32
  }
}

</mosaic_0001>

<llo_original>
// kernel: sage_forward.3
$region0: #{sage_forward.3}
  #allocation0 [shape = 'u32[]', space=smem, size = 0x4, offset = 0x4, fixed_abs, tag = 'smem constant byte address 0x4 - core index']
  #allocation1 [shape = 'u32[144,128]{1,0:T(1,128)}', space=vmem, size = 0x12000, scoped, tag = 'internal scratch']
  #allocation2 [shape = 'f32[256,128]{1,0:T(8,128)}', space=vmem, size = 0x20000, scoped, tag = 'scratch operand']
  #allocation3 [shape = 'f32[256,1]{1,0:T(8,128)}', space=vmem, size = 0x20000, scoped, tag = 'scratch operand']
  %s0 = inlined_call_operand.vmem [shape: s8[256,256], index: 0, kind: input, shape index: {}]
  %s1 = inlined_call_operand.vmem [shape: bf16[256,128], index: 1, kind: input, shape index: {}]
  %s2 = inlined_call_operand.vmem [shape: bf16[256,128], index: 2, kind: input, shape index: {}]
  %s3 = inlined_call_operand.vmem [shape: bf16[128,128], index: 3, kind: input, shape index: {}]
  %s4 = inlined_call_operand.vmem [shape: f32[1,128], index: 4, kind: input, shape index: {}]
  %s5 = inlined_call_operand.vmem [shape: f32[256,128], index: 5, kind: output, shape index: {}]
  %s6 = sld [smem:[#allocation0]]
  $region38: #{sage_forward.3} parent=0
    _
  %s8 = ssub.s32 1, %s6
  %s9 = scalar_select 0, %s8, %s6
  // Predicated region
  $region2: #{sage_forward.3} parent=0 // pred_check
    _
  $region3: #{sage_forward.3} parent=0 // pred_check_branch
    %11 = sbr.rel (0) target = $region5
  $region4: #{sage_forward.3} parent=0 // pred_region
    _
  $region5: #{sage_forward.3} parent=0 // pred_fallthru
    _
  // Predicated region
  $region6: #{sage_forward.3} parent=0 // pred_check
    _
  $region7: #{sage_forward.3} parent=0 // pred_check_branch
    %13 = sbr.rel (0) target = $region9
  $region8: #{sage_forward.3} parent=0 // pred_region
    _
  $region9: #{sage_forward.3} parent=0 // pred_fallthru
    _
  // Predicated region
  $region10: #{sage_forward.3} parent=0 // pred_check
    _
  $region11: #{sage_forward.3} parent=0 // pred_check_branch
    %15 = sbr.rel (0) target = $region13
  $region12: #{sage_forward.3} parent=0 // pred_region
    _
  $region13: #{sage_forward.3} parent=0 // pred_fallthru
    _
  // Predicated region
  $region14: #{sage_forward.3} parent=0 // pred_check
    _
  $region15: #{sage_forward.3} parent=0 // pred_check_branch
    %17 = sbr.rel (0) target = $region17
  $region16: #{sage_forward.3} parent=0 // pred_region
    _
  $region17: #{sage_forward.3} parent=0 // pred_fallthru
    _
  // Predicated region
  $region18: #{sage_forward.3} parent=0 // pred_check
    _
  $region19: #{sage_forward.3} parent=0 // pred_check_branch
    %19 = sbr.rel (0) target = $region21
  $region20: #{sage_forward.3} parent=0 // pred_region
    _
  $region21: #{sage_forward.3} parent=0 // pred_fallthru
    _
  %p21 = scmp.eq.s32.totalorder 0, 0
  // Predicated region
  $region22: #{sage_forward.3} parent=0 // pred_check
    %p22 = pneg %p21
  $region23: #{sage_forward.3} parent=0 // pred_check_branch
    %24 = sbr.rel (%p22) target = $region25
  $region24: #{sage_forward.3} parent=0 // pred_region
    %25 = vst [vmem:[#allocation2] sm:$0xff] 0.0
    %26 = vst [vmem:[#allocation2 + $0x8] sm:$0xff] 0.0
    %27 = vst [vmem:[#allocation2 + $0x10] sm:$0xff] 0.0
    %28 = vst [vmem:[#allocation2 + $0x18] sm:$0xff] 0.0
    %29 = vst [vmem:[#allocation2 + $0x20] sm:$0xff] 0.0
    %30 = vst [vmem:[#allocation2 + $0x28] sm:$0xff] 0.0
    %31 = vst [vmem:[#allocation2 + $0x30] sm:$0xff] 0.0
    %32 = vst [vmem:[#allocation2 + $0x38] sm:$0xff] 0.0
    %33 = vst [vmem:[#allocation2 + $0x40] sm:$0xff] 0.0
    %34 = vst [vmem:[#allocation2 + $0x48] sm:$0xff] 0.0
    %35 = vst [vmem:[#allocation2 + $0x50] sm:$0xff] 0.0
    %36 = vst [vmem:[#allocation2 + $0x58] sm:$0xff] 0.0
    %37 = vst [vmem:[#allocation2 + $0x60] sm:$0xff] 0.0
    %38 = vst [vmem:[#allocation2 + $0x68] sm:$0xff] 0.0
    %39 = vst [vmem:[#allocation2 + $0x70] sm:$0xff] 0.0
    %40 = vst [vmem:[#allocation2 + $0x78] sm:$0xff] 0.0
    %41 = vst [vmem:[#allocation2 + $0x80] sm:$0xff] 0.0
    %42 = vst [vmem:[#allocation2 + $0x88] sm:$0xff] 0.0
    %43 = vst [vmem:[#allocation2 + $0x90] sm:$0xff] 0.0
    %44 = vst [vmem:[#allocation2 + $0x98] sm:$0xff] 0.0
    %45 = vst [vmem:[#allocation2 + $0xa0] sm:$0xff] 0.0
    %46 = vst [vmem:[#allocation2 + $0xa8] sm:$0xff] 0.0
    %47 = vst [vmem:[#allocation2 + $0xb0] sm:$0xff] 0.0
    %48 = vst [vmem:[#allocation2 + $0xb8] sm:$0xff] 0.0
    %49 = vst [vmem:[#allocation2 + $0xc0] sm:$0xff] 0.0
    %50 = vst [vmem:[#allocation2 + $0xc8] sm:$0xff] 0.0
    %51 = vst [vmem:[#allocation2 + $0xd0] sm:$0xff] 0.0
    %52 = vst [vmem:[#allocation2 + $0xd8] sm:$0xff] 0.0
    %53 = vst [vmem:[#allocation2 + $0xe0] sm:$0xff] 0.0
    %54 = vst [vmem:[#allocation2 + $0xe8] sm:$0xff] 0.0
    %55 = vst [vmem:[#allocation2 + $0xf0] sm:$0xff] 0.0
    %56 = vst [vmem:[#allocation2 + $0xf8] sm:$0xff] 0.0
    %vm57 = vcmask 7168
    %58 = vst.msk [vmem:[#allocation3] sm:$0xff] %vm57, 0.0
    %59 = vst.msk [vmem:[#allocation3 + $0x8] sm:$0xff] %vm57, 0.0
    %60 = vst.msk [vmem:[#allocation3 + $0x10] sm:$0xff] %vm57, 0.0
    %61 = vst.msk [vmem:[#allocation3 + $0x18] sm:$0xff] %vm57, 0.0
    %62 = vst.msk [vmem:[#allocation3 + $0x20] sm:$0xff] %vm57, 0.0
    %63 = vst.msk [vmem:[#allocation3 + $0x28] sm:$0xff] %vm57, 0.0
    %64 = vst.msk [vmem:[#allocation3 + $0x30] sm:$0xff] %vm57, 0.0
    %65 = vst.msk [vmem:[#allocation3 + $0x38] sm:$0xff] %vm57, 0.0
    %66 = vst.msk [vmem:[#allocation3 + $0x40] sm:$0xff] %vm57, 0.0
    %67 = vst.msk [vmem:[#allocation3 + $0x48] sm:$0xff] %vm57, 0.0
    %68 = vst.msk [vmem:[#allocation3 + $0x50] sm:$0xff] %vm57, 0.0
    %69 = vst.msk [vmem:[#allocation3 + $0x58] sm:$0xff] %vm57, 0.0
    %70 = vst.msk [vmem:[#allocation3 + $0x60] sm:$0xff] %vm57, 0.0
    %71 = vst.msk [vmem:[#allocation3 + $0x68] sm:$0xff] %vm57, 0.0
    %72 = vst.msk [vmem:[#allocation3 + $0x70] sm:$0xff] %vm57, 0.0
    %73 = vst.msk [vmem:[#allocation3 + $0x78] sm:$0xff] %vm57, 0.0
    %74 = vst.msk [vmem:[#allocation3 + $0x80] sm:$0xff] %vm57, 0.0
    %75 = vst.msk [vmem:[#allocation3 + $0x88] sm:$0xff] %vm57, 0.0
    %76 = vst.msk [vmem:[#allocation3 + $0x90] sm:$0xff] %vm57, 0.0
    %77 = vst.msk [vmem:[#allocation3 + $0x98] sm:$0xff] %vm57, 0.0
    %78 = vst.msk [vmem:[#allocation3 + $0xa0] sm:$0xff] %vm57, 0.0
    %79 = vst.msk [vmem:[#allocation3 + $0xa8] sm:$0xff] %vm57, 0.0
    %80 = vst.msk [vmem:[#allocation3 + $0xb0] sm:$0xff] %vm57, 0.0
    %81 = vst.msk [vmem:[#allocation3 + $0xb8] sm:$0xff] %vm57, 0.0
    %82 = vst.msk [vmem:[#allocation3 + $0xc0] sm:$0xff] %vm57, 0.0
    %83 = vst.msk [vmem:[#allocation3 + $0xc8] sm:$0xff] %vm57, 0.0
    %84 = vst.msk [vmem:[#allocation3 + $0xd0] sm:$0xff] %vm57, 0.0
    %85 = vst.msk [vmem:[#allocation3 + $0xd8] sm:$0xff] %vm57, 0.0
    %86 = vst.msk [vmem:[#allocation3 + $0xe0] sm:$0xff] %vm57, 0.0
    %87 = vst.msk [vmem:[#allocation3 + $0xe8] sm:$0xff] %vm57, 0.0
    %88 = vst.msk [vmem:[#allocation3 + $0xf0] sm:$0xff] %vm57, 0.0
    %89 = vst.msk [vmem:[#allocation3 + $0xf8] sm:$0xff] %vm57, 0.0
  $region25: #{sage_forward.3} parent=0 // pred_fallthru
    _
  %v90 = vld [vmem:[%s0] sm:$0xff]
  %v91 = vld [vmem:[%s0 + $0x8] sm:$0xff]
  %v92 = vld [vmem:[%s0 + $0x10] sm:$0xff]
  %v93 = vld [vmem:[%s0 + $0x18] sm:$0xff]
  %v94 = vld [vmem:[%s0 + $0x20] sm:$0xff]
  %v95 = vld [vmem:[%s0 + $0x28] sm:$0xff]
  %v96 = vld [vmem:[%s0 + $0x30] sm:$0xff]
  %v97 = vld [vmem:[%s0 + $0x38] sm:$0xff]
  %v98 = vld [vmem:[%s0 + $0x40] sm:$0xff]
  %v99 = vld [vmem:[%s0 + $0x48] sm:$0xff]
  %v100 = vld [vmem:[%s0 + $0x50] sm:$0xff]
  %v101 = vld [vmem:[%s0 + $0x58] sm:$0xff]
  %v102 = vld [vmem:[%s0 + $0x60] sm:$0xff]
  %v103 = vld [vmem:[%s0 + $0x68] sm:$0xff]
  %v104 = vld [vmem:[%s0 + $0x70] sm:$0xff]
  %v105 = vld [vmem:[%s0 + $0x78] sm:$0xff]
  %v106 = vunpack.c.0.s8 %v90
  %v107 = vunpack.c.0.s8 %v91
  %v108 = vunpack.c.1.s8 %v90
  %v109 = vunpack.c.1.s8 %v91
  %v110 = vunpack.c.2.s8 %v90
  %v111 = vunpack.c.2.s8 %v91
  %v112 = vunpack.c.3.s8 %v90
  %v113 = vunpack.c.3.s8 %v91
  %v114 = vunpack.c.0.s8 %v92
  %v115 = vunpack.c.0.s8 %v93
  %v116 = vunpack.c.1.s8 %v92
  %v117 = vunpack.c.1.s8 %v93
  %v118 = vunpack.c.2.s8 %v92
  %v119 = vunpack.c.2.s8 %v93
  %v120 = vunpack.c.3.s8 %v92
  %v121 = vunpack.c.3.s8 %v93
  %v122 = vunpack.c.0.s8 %v94
  %v123 = vunpack.c.0.s8 %v95
  %v124 = vunpack.c.1.s8 %v94
  %v125 = vunpack.c.1.s8 %v95
  %v126 = vunpack.c.2.s8 %v94
  %v127 = vunpack.c.2.s8 %v95
  %v128 = vunpack.c.3.s8 %v94
  %v129 = vunpack.c.3.s8 %v95
  %v130 = vunpack.c.0.s8 %v96
  %v131 = vunpack.c.0.s8 %v97
  %v132 = vunpack.c.1.s8 %v96
  %v133 = vunpack.c.1.s8 %v97
  %v134 = vunpack.c.2.s8 %v96
  %v135 = vunpack.c.2.s8 %v97
  %v136 = vunpack.c.3.s8 %v96
  %v137 = vunpack.c.3.s8 %v97
  %v138 = vunpack.c.0.s8 %v98
  %v139 = vunpack.c.0.s8 %v99
  %v140 = vunpack.c.1.s8 %v98
  %v141 = vunpack.c.1.s8 %v99
  %v142 = vunpack.c.2.s8 %v98
  %v143 = vunpack.c.2.s8 %v99
  %v144 = vunpack.c.3.s8 %v98
  %v145 = vunpack.c.3.s8 %v99
  %v146 = vunpack.c.0.s8 %v100
  %v147 = vunpack.c.0.s8 %v101
  %v148 = vunpack.c.1.s8 %v100
  %v149 = vunpack.c.1.s8 %v101
  %v150 = vunpack.c.2.s8 %v100
  %v151 = vunpack.c.2.s8 %v101
  %v152 = vunpack.c.3.s8 %v100
  %v153 = vunpack.c.3.s8 %v101
  %v154 = vunpack.c.0.s8 %v102
  %v155 = vunpack.c.0.s8 %v103
  %v156 = vunpack.c.1.s8 %v102
  %v157 = vunpack.c.1.s8 %v103
  %v158 = vunpack.c.2.s8 %v102
  %v159 = vunpack.c.2.s8 %v103
  %v160 = vunpack.c.3.s8 %v102
  %v161 = vunpack.c.3.s8 %v103
  %v162 = vunpack.c.0.s8 %v104
  %v163 = vunpack.c.0.s8 %v105
  %v164 = vunpack.c.1.s8 %v104
  %v165 = vunpack.c.1.s8 %v105
  %v166 = vunpack.c.2.s8 %v104
  %v167 = vunpack.c.2.s8 %v105
  %v168 = vunpack.c.3.s8 %v104
  %v169 = vunpack.c.3.s8 %v105
  %v170 = vcvt.s32.f32 %v106
  %v171 = vcvt.s32.f32 %v107
  %v172 = vcvt.s32.f32 %v108
  %v173 = vcvt.s32.f32 %v109
  %v174 = vcvt.s32.f32 %v110
  %v175 = vcvt.s32.f32 %v111
  %v176 = vcvt.s32.f32 %v112
  %v177 = vcvt.s32.f32 %v113
  %v178 = vcvt.s32.f32 %v114
  %v179 = vcvt.s32.f32 %v115
  %v180 = vcvt.s32.f32 %v116
  %v181 = vcvt.s32.f32 %v117
  %v182 = vcvt.s32.f32 %v118
  %v183 = vcvt.s32.f32 %v119
  %v184 = vcvt.s32.f32 %v120
  %v185 = vcvt.s32.f32 %v121
  %v186 = vcvt.s32.f32 %v122
  %v187 = vcvt.s32.f32 %v123
  %v188 = vcvt.s32.f32 %v124
  %v189 = vcvt.s32.f32 %v125
  %v190 = vcvt.s32.f32 %v126
  %v191 = vcvt.s32.f32 %v127
  %v192 = vcvt.s32.f32 %v128
  %v193 = vcvt.s32.f32 %v129
  %v194 = vcvt.s32.f32 %v130
  %v195 = vcvt.s32.f32 %v131
  %v196 = vcvt.s32.f32 %v132
  %v197 = vcvt.s32.f32 %v133
  %v198 = vcvt.s32.f32 %v134
  %v199 = vcvt.s32.f32 %v135
  %v200 = vcvt.s32.f32 %v136
  %v201 = vcvt.s32.f32 %v137
  %v202 = vcvt.s32.f32 %v138
  %v203 = vcvt.s32.f32 %v139
  %v204 = vcvt.s32.f32 %v140
  %v205 = vcvt.s32.f32 %v141
  %v206 = vcvt.s32.f32 %v142
  %v207 = vcvt.s32.f32 %v143
  %v208 = vcvt.s32.f32 %v144
  %v209 = vcvt.s32.f32 %v145
  %v210 = vcvt.s32.f32 %v146
  %v211 = vcvt.s32.f32 %v147
  %v212 = vcvt.s32.f32 %v148
  %v213 = vcvt.s32.f32 %v149
  %v214 = vcvt.s32.f32 %v150
  %v215 = vcvt.s32.f32 %v151
  %v216 = vcvt.s32.f32 %v152
  %v217 = vcvt.s32.f32 %v153
  %v218 = vcvt.s32.f32 %v154
  %v219 = vcvt.s32.f32 %v155
  %v220 = vcvt.s32.f32 %v156
  %v221 = vcvt.s32.f32 %v157
  %v222 = vcvt.s32.f32 %v158
  %v223 = vcvt.s32.f32 %v159
  %v224 = vcvt.s32.f32 %v160
  %v225 = vcvt.s32.f32 %v161
  %v226 = vcvt.s32.f32 %v162
  %v227 = vcvt.s32.f32 %v163
  %v228 = vcvt.s32.f32 %v164
  %v229 = vcvt.s32.f32 %v165
  %v230 = vcvt.s32.f32 %v166
  %v231 = vcvt.s32.f32 %v167
  %v232 = vcvt.s32.f32 %v168
  %v233 = vcvt.s32.f32 %v169
  %v234 = vld [vmem:[#allocation3] sm:$0xff]
  %v235 = vld [vmem:[#allocation3 + $0x8] sm:$0xff]
  %v236 = vld [vmem:[#allocation3 + $0x10] sm:$0xff]
  %v237 = vld [vmem:[#allocation3 + $0x18] sm:$0xff]
  %v238 = vld [vmem:[#allocation3 + $0x20] sm:$0xff]
  %v239 = vld [vmem:[#allocation3 + $0x28] sm:$0xff]
  %v240 = vld [vmem:[#allocation3 + $0x30] sm:$0xff]
  %v241 = vld [vmem:[#allocation3 + $0x38] sm:$0xff]
  %v242 = vld [vmem:[#allocation3 + $0x40] sm:$0xff]
  %v243 = vld [vmem:[#allocation3 + $0x48] sm:$0xff]
  %v244 = vld [vmem:[#allocation3 + $0x50] sm:$0xff]
  %v245 = vld [vmem:[#allocation3 + $0x58] sm:$0xff]
  %v246 = vld [vmem:[#allocation3 + $0x60] sm:$0xff]
  %v247 = vld [vmem:[#allocation3 + $0x68] sm:$0xff]
  %v248 = vld [vmem:[#allocation3 + $0x70] sm:$0xff]
  %v249 = vld [vmem:[#allocation3 + $0x78] sm:$0xff]
  %v250 = vld [vmem:[#allocation3 + $0x80] sm:$0xff]
  %v251 = vld [vmem:[#allocation3 + $0x88] sm:$0xff]
  %v252 = vld [vmem:[#allocation3 + $0x90] sm:$0xff]
  %v253 = vld [vmem:[#allocation3 + $0x98] sm:$0xff]
  %v254 = vld [vmem:[#allocation3 + $0xa0] sm:$0xff]
  %v255 = vld [vmem:[#allocation3 + $0xa8] sm:$0xff]
  %v256 = vld [vmem:[#allocation3 + $0xb0] sm:$0xff]
  %v257 = vld [vmem:[#allocation3 + $0xb8] sm:$0xff]
  %v258 = vld [vmem:[#allocation3 + $0xc0] sm:$0xff]
  %v259 = vld [vmem:[#allocation3 + $0xc8] sm:$0xff]
  %v260 = vld [vmem:[#allocation3 + $0xd0] sm:$0xff]
  %v261 = vld [vmem:[#allocation3 + $0xd8] sm:$0xff]
  %v262 = vld [vmem:[#allocation3 + $0xe0] sm:$0xff]
  %v263 = vld [vmem:[#allocation3 + $0xe8] sm:$0xff]
  %v264 = vld [vmem:[#allocation3 + $0xf0] sm:$0xff]
  %v265 = vld [vmem:[#allocation3 + $0xf8] sm:$0xff]
  %v266 = vadd.f32 %v170, %v171
  %267 = vadd.xlane.f32.xlu0 %v266
  %v268 = vpop.xlane.xlu0 %267
  %v269 = vadd.f32 %v172, %v173
  %270 = vadd.xlane.f32.xlu0 %v269
  %v271 = vpop.xlane.xlu0 %270
  %v272 = vadd.f32 %v174, %v175
  %273 = vadd.xlane.f32.xlu0 %v272
  %v274 = vpop.xlane.xlu0 %273
  %v275 = vadd.f32 %v176, %v177
  %276 = vadd.xlane.f32.xlu0 %v275
  %v277 = vpop.xlane.xlu0 %276
  %v278 = vadd.f32 %v178, %v179
  %279 = vadd.xlane.f32.xlu0 %v278
  %v280 = vpop.xlane.xlu0 %279
  %v281 = vadd.f32 %v180, %v181
  %282 = vadd.xlane.f32.xlu0 %v281
  %v283 = vpop.xlane.xlu0 %282
  %v284 = vadd.f32 %v182, %v183
  %285 = vadd.xlane.f32.xlu0 %v284
  %v286 = vpop.xlane.xlu0 %285
  %v287 = vadd.f32 %v184, %v185
  %288 = vadd.xlane.f32.xlu0 %v287
  %v289 = vpop.xlane.xlu0 %288
  %v290 = vadd.f32 %v186, %v187
  %291 = vadd.xlane.f32.xlu0 %v290
  %v292 = vpop.xlane.xlu0 %291
  %v293 = vadd.f32 %v188, %v189
  %294 = vadd.xlane.f32.xlu0 %v293
  %v295 = vpop.xlane.xlu0 %294
  %v296 = vadd.f32 %v190, %v191
  %297 = vadd.xlane.f32.xlu0 %v296
  %v298 = vpop.xlane.xlu0 %297
  %v299 = vadd.f32 %v192, %v193
  %300 = vadd.xlane.f32.xlu0 %v299
  %v301 = vpop.xlane.xlu0 %300
  %v302 = vadd.f32 %v194, %v195
  %303 = vadd.xlane.f32.xlu0 %v302
  %v304 = vpop.xlane.xlu0 %303
  %v305 = vadd.f32 %v196, %v197
  %306 = vadd.xlane.f32.xlu0 %v305
  %v307 = vpop.xlane.xlu0 %306
  %v308 = vadd.f32 %v198, %v199
  %309 = vadd.xlane.f32.xlu0 %v308
  %v310 = vpop.xlane.xlu0 %309
  %v311 = vadd.f32 %v200, %v201
  %312 = vadd.xlane.f32.xlu0 %v311
  %v313 = vpop.xlane.xlu0 %312
  %v314 = vadd.f32 %v202, %v203
  %315 = vadd.xlane.f32.xlu0 %v314
  %v316 = vpop.xlane.xlu0 %315
  %v317 = vadd.f32 %v204, %v205
  %318 = vadd.xlane.f32.xlu0 %v317
  %v319 = vpop.xlane.xlu0 %318
  %v320 = vadd.f32 %v206, %v207
  %321 = vadd.xlane.f32.xlu0 %v320
  %v322 = vpop.xlane.xlu0 %321
  %v323 = vadd.f32 %v208, %v209
  %324 = vadd.xlane.f32.xlu0 %v323
  %v325 = vpop.xlane.xlu0 %324
  %v326 = vadd.f32 %v210, %v211
  %327 = vadd.xlane.f32.xlu0 %v326
  %v328 = vpop.xlane.xlu0 %327
  %v329 = vadd.f32 %v212, %v213
  %330 = vadd.xlane.f32.xlu0 %v329
  %v331 = vpop.xlane.xlu0 %330
  %v332 = vadd.f32 %v214, %v215
  %333 = vadd.xlane.f32.xlu0 %v332
  %v334 = vpop.xlane.xlu0 %333
  %v335 = vadd.f32 %v216, %v217
  %336 = vadd.xlane.f32.xlu0 %v335
  %v337 = vpop.xlane.xlu0 %336
  %v338 = vadd.f32 %v218, %v219
  %339 = vadd.xlane.f32.xlu0 %v338
  %v340 = vpop.xlane.xlu0 %339
  %v341 = vadd.f32 %v220, %v221
  %342 = vadd.xlane.f32.xlu0 %v341
  %v343 = vpop.xlane.xlu0 %342
  %v344 = vadd.f32 %v222, %v223
  %345 = vadd.xlane.f32.xlu0 %v344
  %v346 = vpop.xlane.xlu0 %345
  %v347 = vadd.f32 %v224, %v225
  %348 = vadd.xlane.f32.xlu0 %v347
  %v349 = vpop.xlane.xlu0 %348
  %v350 = vadd.f32 %v226, %v227
  %351 = vadd.xlane.f32.xlu0 %v350
  %v352 = vpop.xlane.xlu0 %351
  %v353 = vadd.f32 %v228, %v229
  %354 = vadd.xlane.f32.xlu0 %v353
  %v355 = vpop.xlane.xlu0 %354
  %v356 = vadd.f32 %v230, %v231
  %357 = vadd.xlane.f32.xlu0 %v356
  %v358 = vpop.xlane.xlu0 %357
  %v359 = vadd.f32 %v232, %v233
  %360 = vadd.xlane.f32.xlu0 %v359
  %v361 = vpop.xlane.xlu0 %360
  %v362 = vadd.f32 %v234, %v268
  %v363 = vadd.f32 %v235, %v271
  %v364 = vadd.f32 %v236, %v274
  %v365 = vadd.f32 %v237, %v277
  %v366 = vadd.f32 %v238, %v280
  %v367 = vadd.f32 %v239, %v283
  %v368 = vadd.f32 %v240, %v286
  %v369 = vadd.f32 %v241, %v289
  %v370 = vadd.f32 %v242, %v292
  %v371 = vadd.f32 %v243, %v295
  %v372 = vadd.f32 %v244, %v298
  %v373 = vadd.f32 %v245, %v301
  %v374 = vadd.f32 %v246, %v304
  %v375 = vadd.f32 %v247, %v307
  %v376 = vadd.f32 %v248, %v310
  %v377 = vadd.f32 %v249, %v313
  %v378 = vadd.f32 %v250, %v316
  %v379 = vadd.f32 %v251, %v319
  %v380 = vadd.f32 %v252, %v322
  %v381 = vadd.f32 %v253, %v325
  %v382 = vadd.f32 %v254, %v328
  %v383 = vadd.f32 %v255, %v331
  %v384 = vadd.f32 %v256, %v334
  %v385 = vadd.f32 %v257, %v337
  %v386 = vadd.f32 %v258, %v340
  %v387 = vadd.f32 %v259, %v343
  %v388 = vadd.f32 %v260, %v346
  %v389 = vadd.f32 %v261, %v349
  %v390 = vadd.f32 %v262, %v352
  %v391 = vadd.f32 %v263, %v355
  %v392 = vadd.f32 %v264, %v358
  %v393 = vadd.f32 %v265, %v361
  %vm394 = vcmask 7168
  %395 = vst.msk [vmem:[#allocation3] sm:$0xff] %vm394, %v362
  %396 = vst.msk [vmem:[#allocation3 + $0x8] sm:$0xff] %vm394, %v363
  %397 = vst.msk [vmem:[#allocation3 + $0x10] sm:$0xff] %vm394, %v364
  %398 = vst.msk [vmem:[#allocation3 + $0x18] sm:$0xff] %vm394, %v365
  %399 = vst.msk [vmem:[#allocation3 + $0x20] sm:$0xff] %vm394, %v366
  %400 = vst.msk [vmem:[#allocation3 + $0x28] sm:$0xff] %vm394, %v367
  %401 = vst.msk [vmem:[#allocation3 + $0x30] sm:$0xff] %vm394, %v368
  %402 = vst.msk [vmem:[#allocation3 + $0x38] sm:$0xff] %vm394, %v369
  %403 = vst.msk [vmem:[#allocation3 + $0x40] sm:$0xff] %vm394, %v370
  %404 = vst.msk [vmem:[#allocation3 + $0x48] sm:$0xff] %vm394, %v371
  %405 = vst.msk [vmem:[#allocation3 + $0x50] sm:$0xff] %vm394, %v372
  %406 = vst.msk [vmem:[#allocation3 + $0x58] sm:$0xff] %vm394, %v373
  %407 = vst.msk [vmem:[#allocation3 + $0x60] sm:$0xff] %vm394, %v374
  %408 = vst.msk [vmem:[#allocation3 + $0x68] sm:$0xff] %vm394, %v375
  %409 = vst.msk [vmem:[#allocation3 + $0x70] sm:$0xff] %vm394, %v376
  %410 = vst.msk [vmem:[#allocation3 + $0x78] sm:$0xff] %vm394, %v377
  %411 = vst.msk [vmem:[#allocation3 + $0x80] sm:$0xff] %vm394, %v378
  %412 = vst.msk [vmem:[#allocation3 + $0x88] sm:$0xff] %vm394, %v379
  %413 = vst.msk [vmem:[#allocation3 + $0x90] sm:$0xff] %vm394, %v380
  %414 = vst.msk [vmem:[#allocation3 + $0x98] sm:$0xff] %vm394, %v381
  %415 = vst.msk [vmem:[#allocation3 + $0xa0] sm:$0xff] %vm394, %v382
  %416 = vst.msk [vmem:[#allocation3 + $0xa8] sm:$0xff] %vm394, %v383
  %417 = vst.msk [vmem:[#allocation3 + $0xb0] sm:$0xff] %vm394, %v384
  %418 = vst.msk [vmem:[#allocation3 + $0xb8] sm:$0xff] %vm394, %v385
  %419 = vst.msk [vmem:[#allocation3 + $0xc0] sm:$0xff] %vm394, %v386
  %420 = vst.msk [vmem:[#allocation3 + $0xc8] sm:$0xff] %vm394, %v387
  %421 = vst.msk [vmem:[#allocation3 + $0xd0] sm:$0xff] %vm394, %v388
  %422 = vst.msk [vmem:[#allocation3 + $0xd8] sm:$0xff] %vm394, %v389
  %423 = vst.msk [vmem:[#allocation3 + $0xe0] sm:$0xff] %vm394, %v390
  %424 = vst.msk [vmem:[#allocation3 + $0xe8] sm:$0xff] %vm394, %v391
  %425 = vst.msk [vmem:[#allocation3 + $0xf0] sm:$0xff] %vm394, %v392
  %426 = vst.msk [vmem:[#allocation3 + $0xf8] sm:$0xff] %vm394, %v393
  %v427 = vld [vmem:[#allocation2] sm:$0xff]
  %v428 = vld [vmem:[#allocation2 + $0x8] sm:$0xff]
  %v429 = vld [vmem:[#allocation2 + $0x10] sm:$0xff]
  %v430 = vld [vmem:[#allocation2 + $0x18] sm:$0xff]
  %v431 = vld [vmem:[#allocation2 + $0x20] sm:$0xff]
  %v432 = vld [vmem:[#allocation2 + $0x28] sm:$0xff]
  %v433 = vld [vmem:[#allocation2 + $0x30] sm:$0xff]
  %v434 = vld [vmem:[#allocation2 + $0x38] sm:$0xff]
  %v435 = vld [vmem:[#allocation2 + $0x40] sm:$0xff]
  %v436 = vld [vmem:[#allocation2 + $0x48] sm:$0xff]
  %v437 = vld [vmem:[#allocation2 + $0x50] sm:$0xff]
  %v438 = vld [vmem:[#allocation2 + $0x58] sm:$0xff]
  %v439 = vld [vmem:[#allocation2 + $0x60] sm:$0xff]
  %v440 = vld [vmem:[#allocation2 + $0x68] sm:$0xff]
  %v441 = vld [vmem:[#allocation2 + $0x70] sm:$0xff]
  %v442 = vld [vmem:[#allocation2 + $0x78] sm:$0xff]
  %v443 = vld [vmem:[#allocation2 + $0x80] sm:$0xff]
  %v444 = vld [vmem:[#allocation2 + $0x88] sm:$0xff]
  %v445 = vld [vmem:[#allocation2 + $0x90] sm:$0xff]
  %v446 = vld [vmem:[#allocation2 + $0x98] sm:$0xff]
  %v447 = vld [vmem:[#allocation2 + $0xa0] sm:$0xff]
  %v448 = vld [vmem:[#allocation2 + $0xa8] sm:$0xff]
  %v449 = vld [vmem:[#allocation2 + $0xb0] sm:$0xff]
  %v450 = vld [vmem:[#allocation2 + $0xb8] sm:$0xff]
  %v451 = vld [vmem:[#allocation2 + $0xc0] sm:$0xff]
  %v452 = vld [vmem:[#allocation2 + $0xc8] sm:$0xff]
  %v453 = vld [vmem:[#allocation2 + $0xd0] sm:$0xff]
  %v454 = vld [vmem:[#allocation2 + $0xd8] sm:$0xff]
  %v455 = vld [vmem:[#allocation2 + $0xe0] sm:$0xff]
  %v456 = vld [vmem:[#allocation2 + $0xe8] sm:$0xff]
  %v457 = vld [vmem:[#allocation2 + $0xf0] sm:$0xff]
  %v458 = vld [vmem:[#allocation2 + $0xf8] sm:$0xff]
  %v459 = vunpack.c.l.s8.bf16 %v90
  %v460 = vunpack.c.l.s8.bf16 %v91
  %v461 = vunpack.c.h.s8.bf16 %v90
  %v462 = vunpack.c.h.s8.bf16 %v91
  %v463 = vunpack.c.l.s8.bf16 %v92
  %v464 = vunpack.c.l.s8.bf16 %v93
  %v465 = vunpack.c.h.s8.bf16 %v92
  %v466 = vunpack.c.h.s8.bf16 %v93
  %v467 = vunpack.c.l.s8.bf16 %v94
  %v468 = vunpack.c.l.s8.bf16 %v95
  %v469 = vunpack.c.h.s8.bf16 %v94
  %v470 = vunpack.c.h.s8.bf16 %v95
  %v471 = vunpack.c.l.s8.bf16 %v96
  %v472 = vunpack.c.l.s8.bf16 %v97
  %v473 = vunpack.c.h.s8.bf16 %v96
  %v474 = vunpack.c.h.s8.bf16 %v97
  %v475 = vunpack.c.l.s8.bf16 %v98
  %v476 = vunpack.c.l.s8.bf16 %v99
  %v477 = vunpack.c.h.s8.bf16 %v98
  %v478 = vunpack.c.h.s8.bf16 %v99
  %v479 = vunpack.c.l.s8.bf16 %v100
  %v480 = vunpack.c.l.s8.bf16 %v101
  %v481 = vunpack.c.h.s8.bf16 %v100
  %v482 = vunpack.c.h.s8.bf16 %v101
  %v483 = vunpack.c.l.s8.bf16 %v102
  %v484 = vunpack.c.l.s8.bf16 %v103
  %v485 = vunpack.c.h.s8.bf16 %v102
  %v486 = vunpack.c.h.s8.bf16 %v103
  %v487 = vunpack.c.l.s8.bf16 %v104
  %v488 = vunpack.c.l.s8.bf16 %v105
  %v489 = vunpack.c.h.s8.bf16 %v104
  %v490 = vunpack.c.h.s8.bf16 %v105
  %v491 = vld [vmem:[%s1] sm:$0xf]
  %v492 = vld [vmem:[%s1 + $0x4] sm:$0xf]
  %v493 = vld [vmem:[%s1 + $0x8] sm:$0xf]
  %v494 = vld [vmem:[%s1 + $0xc] sm:$0xf]
  %v495 = vld [vmem:[%s1 + $0x10] sm:$0xf]
  %v496 = vld [vmem:[%s1 + $0x14] sm:$0xf]
  %v497 = vld [vmem:[%s1 + $0x18] sm:$0xf]
  %v498 = vld [vmem:[%s1 + $0x1c] sm:$0xf]
  %v499 = vld [vmem:[%s1 + $0x20] sm:$0xf]
  %v500 = vld [vmem:[%s1 + $0x24] sm:$0xf]
  %v501 = vld [vmem:[%s1 + $0x28] sm:$0xf]
  %v502 = vld [vmem:[%s1 + $0x2c] sm:$0xf]
  %v503 = vld [vmem:[%s1 + $0x30] sm:$0xf]
  %v504 = vld [vmem:[%s1 + $0x34] sm:$0xf]
  %v505 = vld [vmem:[%s1 + $0x38] sm:$0xf]
  %v506 = vld [vmem:[%s1 + $0x3c] sm:$0xf]
  %v507 = vld [vmem:[%s1 + $0x40] sm:$0xf]
  %v508 = vld [vmem:[%s1 + $0x44] sm:$0xf]
  %v509 = vld [vmem:[%s1 + $0x48] sm:$0xf]
  %v510 = vld [vmem:[%s1 + $0x4c] sm:$0xf]
  %v511 = vld [vmem:[%s1 + $0x50] sm:$0xf]
  %v512 = vld [vmem:[%s1 + $0x54] sm:$0xf]
  %v513 = vld [vmem:[%s1 + $0x58] sm:$0xf]
  %v514 = vld [vmem:[%s1 + $0x5c] sm:$0xf]
  %v515 = vld [vmem:[%s1 + $0x60] sm:$0xf]
  %v516 = vld [vmem:[%s1 + $0x64] sm:$0xf]
  %v517 = vld [vmem:[%s1 + $0x68] sm:$0xf]
  %v518 = vld [vmem:[%s1 + $0x6c] sm:$0xf]
  %v519 = vld [vmem:[%s1 + $0x70] sm:$0xf]
  %v520 = vld [vmem:[%s1 + $0x74] sm:$0xf]
  %v521 = vld [vmem:[%s1 + $0x78] sm:$0xf]
  %v522 = vld [vmem:[%s1 + $0x7c] sm:$0xf]
  %v555 = vunpack.c.l.b16 %v491
  %v556 = vunpack.c.l.b16 %v492
  %v557 = vunpack.c.l.b16 %v493
  %v558 = vunpack.c.l.b16 %v494
  %v559 = vunpack.c.l.b16 %v495
  %v560 = vunpack.c.l.b16 %v496
  %v561 = vunpack.c.l.b16 %v497
  %v562 = vunpack.c.l.b16 %v498
  %v563 = vunpack.c.l.b16 %v499
  %v564 = vunpack.c.l.b16 %v500
  %v565 = vunpack.c.l.b16 %v501
  %v566 = vunpack.c.l.b16 %v502
  %v567 = vunpack.c.l.b16 %v503
  %v568 = vunpack.c.l.b16 %v504
  %v569 = vunpack.c.l.b16 %v505
  %v570 = vunpack.c.l.b16 %v506
  %v571 = vunpack.c.l.b16 %v507
  %v572 = vunpack.c.l.b16 %v508
  %v573 = vunpack.c.l.b16 %v509
  %v574 = vunpack.c.l.b16 %v510
  %v575 = vunpack.c.l.b16 %v511
  %v576 = vunpack.c.l.b16 %v512
  %v577 = vunpack.c.l.b16 %v513
  %v578 = vunpack.c.l.b16 %v514
  %v579 = vunpack.c.l.b16 %v515
  %v580 = vunpack.c.l.b16 %v516
  %v581 = vunpack.c.l.b16 %v517
  %v582 = vunpack.c.l.b16 %v518
  %v583 = vunpack.c.l.b16 %v519
  %v584 = vunpack.c.l.b16 %v520
  %v585 = vunpack.c.l.b16 %v521
  %v586 = vunpack.c.l.b16 %v522
  %v587 = vpack.c.b16 %v556, %v555
  %v588 = vpack.c.b16 %v558, %v557
  %v589 = vpack.c.b16 %v560, %v559
  %v590 = vpack.c.b16 %v562, %v561
  %v591 = vpack.c.b16 %v564, %v563
  %v592 = vpack.c.b16 %v566, %v565
  %v593 = vpack.c.b16 %v568, %v567
  %v594 = vpack.c.b16 %v570, %v569
  %v595 = vpack.c.b16 %v572, %v571
  %v596 = vpack.c.b16 %v574, %v573
  %v597 = vpack.c.b16 %v576, %v575
  %v598 = vpack.c.b16 %v578, %v577
  %v599 = vpack.c.b16 %v580, %v579
  %v600 = vpack.c.b16 %v582, %v581
  %v601 = vpack.c.b16 %v584, %v583
  %v602 = vpack.c.b16 %v586, %v585
  %619 = vmatprep.subr.bf16.mxu0 0
  %620 = vmatpush1.bf16.msra.mxu0 %v587
  %621 = vmatprep.subr.bf16.mxu0 0
  %622 = vmatpush1.bf16.msra.mxu0 %v588
  %623 = vmatprep.subr.bf16.mxu0 0
  %624 = vmatpush1.bf16.msra.mxu0 %v589
  %625 = vmatprep.subr.bf16.mxu0 0
  %626 = vmatpush1.bf16.msra.mxu0 %v590
  %627 = vmatprep.subr.bf16.mxu0 0
  %628 = vmatpush1.bf16.msra.mxu0 %v591
  %629 = vmatprep.subr.bf16.mxu0 0
  %630 = vmatpush1.bf16.msra.mxu0 %v592
  %631 = vmatprep.subr.bf16.mxu0 0
  %632 = vmatpush1.bf16.msra.mxu0 %v593
  %633 = vmatprep.subr.bf16.mxu0 0
  %634 = vmatpush1.bf16.msra.mxu0 %v594
  %635 = vmatprep.subr.bf16.mxu0 0
  %636 = vmatpush1.bf16.msra.mxu0 %v595
  %637 = vmatprep.subr.bf16.mxu0 0
  %638 = vmatpush1.bf16.msra.mxu0 %v596
  %639 = vmatprep.subr.bf16.mxu0 0
  %640 = vmatpush1.bf16.msra.mxu0 %v597
  %641 = vmatprep.subr.bf16.mxu0 0
  %642 = vmatpush1.bf16.msra.mxu0 %v598
  %643 = vmatprep.subr.bf16.mxu0 0
  %644 = vmatpush1.bf16.msra.mxu0 %v599
  %645 = vmatprep.subr.bf16.mxu0 0
  %646 = vmatpush1.bf16.msra.mxu0 %v600
  %647 = vmatprep.subr.bf16.mxu0 0
  %648 = vmatpush1.bf16.msra.mxu0 %v601
  %649 = vmatprep.subr.bf16.mxu0 0
  %650 = vmatpush1.bf16.msra.mxu0 %v602
  %651 = vmatprep.mubr.bf16.mxu0 %v460
  %652 = vmatmul.mubr.bf16.gmra.mrb[0].mxu0 %v459
  %v653 = vpop.f32.mrb[0].mxu0
  %v654 = vadd.f32 0.0, %v653
  %v655 = vpop.f32.mrb[0].mxu0
  %v656 = vpop.f32.mrb[0].mxu0
  %v657 = vadd.f32 0.0, %v656
  %v658 = vpop.f32.mrb[0].mxu0
  %659 = vmatprep.mubr.bf16.mxu0 %v462
  %660 = vmatmul.mubr.bf16.gmra.mrb[0].mxu0 %v461
  %v661 = vpop.f32.mrb[0].mxu0
  %v662 = vadd.f32 0.0, %v661
  %v663 = vpop.f32.mrb[0].mxu0
  %v664 = vpop.f32.mrb[0].mxu0
  %v665 = vadd.f32 0.0, %v664
  %v666 = vpop.f32.mrb[0].mxu0
  %667 = vmatprep.mubr.bf16.mxu0 %v464
  %668 = vmatmul.mubr.bf16.gmra.mrb[0].mxu0 %v463
  %v669 = vpop.f32.mrb[0].mxu0
  %v670 = vadd.f32 0.0, %v669
  %v671 = vpop.f32.mrb[0].mxu0
  %v672 = vpop.f32.mrb[0].mxu0
  %v673 = vadd.f32 0.0, %v672
  %v674 = vpop.f32.mrb[0].mxu0
  %675 = vmatprep.mubr.bf16.mxu0 %v466
  %676 = vmatmul.mubr.bf16.gmra.mrb[0].mxu0 %v465
  %v677 = vpop.f32.mrb[0].mxu0
  %v678 = vadd.f32 0.0, %v677
  %v679 = vpop.f32.mrb[0].mxu0
  %v680 = vpop.f32.mrb[0].mxu0
  %v681 = vadd.f32 0.0, %v680
  %v682 = vpop.f32.mrb[0].mxu0
  %683 = vmatprep.mubr.bf16.mxu0 %v468
  %684 = vmatmul.mubr.bf16.gmra.mrb[0].mxu0 %v467
  %v685 = vpop.f32.mrb[0].mxu0
  %v686 = vadd.f32 0.0, %v685
  %v687 = vpop.f32.mrb[0].mxu0
  %v688 = vpop.f32.mrb[0].mxu0
  %v689 = vadd.f32 0.0, %v688
  %v690 = vpop.f32.mrb[0].mxu0
  %691 = vmatprep.mubr.bf16.mxu0 %v470
  %692 = vmatmul.mubr.bf16.gmra.mrb[0].mxu0 %v469
  %v693 = vpop.f32.mrb[0].mxu0
  %v694 = vadd.f32 0.0, %v693
  %v695 = vpop.f32.mrb[0].mxu0
  %v696 = vpop.f32.mrb[0].mxu0
  %v697 = vadd.f32 0.0, %v696
  %v698 = vpop.f32.mrb[0].mxu0
  %699 = vmatprep.mubr.bf16.mxu0 %v472
  %700 = vmatmul.mubr.bf16.gmra.mrb[0].mxu0 %v471
  %v701 = vpop.f32.mrb[0].mxu0
  %v702 = vadd.f32 0.0, %v701
  %v703 = vpop.f32.mrb[0].mxu0
  %v704 = vpop.f32.mrb[0].mxu0
  %v705 = vadd.f32 0.0, %v704
  %v706 = vpop.f32.mrb[0].mxu0
  %707 = vmatprep.mubr.bf16.mxu0 %v474
  %708 = vmatmul.mubr.bf16.gmra.mrb[0].mxu0 %v473
  %v709 = vpop.f32.mrb[0].mxu0
  %v710 = vadd.f32 0.0, %v709
  %v711 = vpop.f32.mrb[0].mxu0
  %v712 = vpop.f32.mrb[0].mxu0
  %v713 = vadd.f32 0.0, %v712
  %v714 = vpop.f32.mrb[0].mxu0
  %715 = vmatprep.mubr.bf16.mxu0 %v476
  %716 = vmatmul.mubr.bf16.gmra.mrb[0].mxu0 %v475
  %v717 = vpop.f32.mrb[0].mxu0
  %v718 = vadd.f32 0.0, %v717
  %v719 = vpop.f32.mrb[0].mxu0
  %v720 = vpop.f32.mrb[0].mxu0
  %v721 = vadd.f32 0.0, %v720
  %v722 = vpop.f32.mrb[0].mxu0
  %723 = vmatprep.mubr.bf16.mxu0 %v478
  %724 = vmatmul.mubr.bf16.gmra.mrb[0].mxu0 %v477
  %v725 = vpop.f32.mrb[0].mxu0
  %v726 = vadd.f32 0.0, %v725
  %v727 = vpop.f32.mrb[0].mxu0
  %v728 = vpop.f32.mrb[0].mxu0
  %v729 = vadd.f32 0.0, %v728
  %v730 = vpop.f32.mrb[0].mxu0
  %731 = vmatprep.mubr.bf16.mxu0 %v480
  %732 = vmatmul.mubr.bf16.gmra.mrb[0].mxu0 %v479
  %v733 = vpop.f32.mrb[0].mxu0
  %v734 = vadd.f32 0.0, %v733
  %v735 = vpop.f32.mrb[0].mxu0
  %v736 = vpop.f32.mrb[0].mxu0
  %v737 = vadd.f32 0.0, %v736
  %v738 = vpop.f32.mrb[0].mxu0
  %739 = vmatprep.mubr.bf16.mxu0 %v482
  %740 = vmatmul.mubr.bf16.gmra.mrb[0].mxu0 %v481
  %v741 = vpop.f32.mrb[0].mxu0
  %v742 = vadd.f32 0.0, %v741
  %v743 = vpop.f32.mrb[0].mxu0
  %v744 = vpop.f32.mrb[0].mxu0
  %v745 = vadd.f32 0.0, %v744
  %v746 = vpop.f32.mrb[0].mxu0
  %747 = vmatprep.mubr.bf16.mxu0 %v484
  %748 = vmatmul.mubr.bf16.gmra.mrb[0].mxu0 %v483
  %v749 = vpop.f32.mrb[0].mxu0
  %v750 = vadd.f32 0.0, %v749
  %v751 = vpop.f32.mrb[0].mxu0
  %v752 = vpop.f32.mrb[0].mxu0
  %v753 = vadd.f32 0.0, %v752
  %v754 = vpop.f32.mrb[0].mxu0
  %755 = vmatprep.mubr.bf16.mxu0 %v486
  %756 = vmatmul.mubr.bf16.gmra.mrb[0].mxu0 %v485
  %v757 = vpop.f32.mrb[0].mxu0
  %v758 = vadd.f32 0.0, %v757
  %v759 = vpop.f32.mrb[0].mxu0
  %v760 = vpop.f32.mrb[0].mxu0
  %v761 = vadd.f32 0.0, %v760
  %v762 = vpop.f32.mrb[0].mxu0
  %763 = vmatprep.mubr.bf16.mxu0 %v488
  %764 = vmatmul.mubr.bf16.gmra.mrb[0].mxu0 %v487
  %v765 = vpop.f32.mrb[0].mxu0
  %v766 = vadd.f32 0.0, %v765
  %v767 = vpop.f32.mrb[0].mxu0
  %v768 = vpop.f32.mrb[0].mxu0
  %v769 = vadd.f32 0.0, %v768
  %v770 = vpop.f32.mrb[0].mxu0
  %771 = vmatprep.mubr.bf16.mxu0 %v490
  %772 = vmatmul.mubr.bf16.gmra.mrb[0].mxu0 %v489
  %v773 = vpop.f32.mrb[0].mxu0
  %v774 = vadd.f32 0.0, %v773
  %v775 = vpop.f32.mrb[0].mxu0
  %v776 = vpop.f32.mrb[0].mxu0
  %v777 = vadd.f32 0.0, %v776
  %v778 = vpop.f32.mrb[0].mxu0
  %779 = vdwg.mxu0
  %v780 = vadd.f32 %v427, %v654
  %v781 = vadd.f32 %v428, %v657
  %v782 = vadd.f32 %v429, %v662
  %v783 = vadd.f32 %v430, %v665
  %v784 = vadd.f32 %v431, %v670
  %v785 = vadd.f32 %v432, %v673
  %v786 = vadd.f32 %v433, %v678
  %v787 = vadd.f32 %v434, %v681
  %v788 = vadd.f32 %v435, %v686
  %v789 = vadd.f32 %v436, %v689
  %v790 = vadd.f32 %v437, %v694
  %v791 = vadd.f32 %v438, %v697
  %v792 = vadd.f32 %v439, %v702
  %v793 = vadd.f32 %v440, %v705
  %v794 = vadd.f32 %v441, %v710
  %v795 = vadd.f32 %v442, %v713
  %v796 = vadd.f32 %v443, %v718
  %v797 = vadd.f32 %v444, %v721
  %v798 = vadd.f32 %v445, %v726
  %v799 = vadd.f32 %v446, %v729
  %v800 = vadd.f32 %v447, %v734
  %v801 = vadd.f32 %v448, %v737
  %v802 = vadd.f32 %v449, %v742
  %v803 = vadd.f32 %v450, %v745
  %v804 = vadd.f32 %v451, %v750
  %v805 = vadd.f32 %v452, %v753
  %v806 = vadd.f32 %v453, %v758
  %v807 = vadd.f32 %v454, %v761
  %v808 = vadd.f32 %v455, %v766
  %v809 = vadd.f32 %v456, %v769
  %v810 = vadd.f32 %v457, %v774
  %v811 = vadd.f32 %v458, %v777
  %812 = vst [vmem:[#allocation2] sm:$0xff] %v780
  %813 = vst [vmem:[#allocation2 + $0x8] sm:$0xff] %v781
  %814 = vst [vmem:[#allocation2 + $0x10] sm:$0xff] %v782
  %815 = vst [vmem:[#allocation2 + $0x18] sm:$0xff] %v783
  %816 = vst [vmem:[#allocation2 + $0x20] sm:$0xff] %v784
  %817 = vst [vmem:[#allocation2 + $0x28] sm:$0xff] %v785
  %818 = vst [vmem:[#allocation2 + $0x30] sm:$0xff] %v786
  %819 = vst [vmem:[#allocation2 + $0x38] sm:$0xff] %v787
  %820 = vst [vmem:[#allocation2 + $0x40] sm:$0xff] %v788
  %821 = vst [vmem:[#allocation2 + $0x48] sm:$0xff] %v789
  %822 = vst [vmem:[#allocation2 + $0x50] sm:$0xff] %v790
  %823 = vst [vmem:[#allocation2 + $0x58] sm:$0xff] %v791
  %824 = vst [vmem:[#allocation2 + $0x60] sm:$0xff] %v792
  %825 = vst [vmem:[#allocation2 + $0x68] sm:$0xff] %v793
  %826 = vst [vmem:[#allocation2 + $0x70] sm:$0xff] %v794
  %827 = vst [vmem:[#allocation2 + $0x78] sm:$0xff] %v795
  %828 = vst [vmem:[#allocation2 + $0x80] sm:$0xff] %v796
  %829 = vst [vmem:[#allocation2 + $0x88] sm:$0xff] %v797
  %830 = vst [vmem:[#allocation2 + $0x90] sm:$0xff] %v798
  %831 = vst [vmem:[#allocation2 + $0x98] sm:$0xff] %v799
  %832 = vst [vmem:[#allocation2 + $0xa0] sm:$0xff] %v800
  %833 = vst [vmem:[#allocation2 + $0xa8] sm:$0xff] %v801
  %834 = vst [vmem:[#allocation2 + $0xb0] sm:$0xff] %v802
  %835 = vst [vmem:[#allocation2 + $0xb8] sm:$0xff] %v803
  %836 = vst [vmem:[#allocation2 + $0xc0] sm:$0xff] %v804
  %837 = vst [vmem:[#allocation2 + $0xc8] sm:$0xff] %v805
  %838 = vst [vmem:[#allocation2 + $0xd0] sm:$0xff] %v806
  %839 = vst [vmem:[#allocation2 + $0xd8] sm:$0xff] %v807
  %840 = vst [vmem:[#allocation2 + $0xe0] sm:$0xff] %v808
  %841 = vst [vmem:[#allocation2 + $0xe8] sm:$0xff] %v809
  %842 = vst [vmem:[#allocation2 + $0xf0] sm:$0xff] %v810
  %843 = vst [vmem:[#allocation2 + $0xf8] sm:$0xff] %v811
  // Predicated region
  $region26: #{sage_forward.3} parent=0 // pred_check
    %p844 = pneg %p21
  $region27: #{sage_forward.3} parent=0 // pred_check_branch
    %846 = sbr.rel (%p844) target = $region29
  $region28: #{sage_forward.3} parent=0 // pred_region
    %v847 = vld [vmem:[#allocation3] sm:$0xff]
    %v848 = vld [vmem:[#allocation3 + $0x8] sm:$0xff]
    %v849 = vld [vmem:[#allocation3 + $0x10] sm:$0xff]
    %v850 = vld [vmem:[#allocation3 + $0x18] sm:$0xff]
    %v851 = vld [vmem:[#allocation3 + $0x20] sm:$0xff]
    %v852 = vld [vmem:[#allocation3 + $0x28] sm:$0xff]
    %v853 = vld [vmem:[#allocation3 + $0x30] sm:$0xff]
    %v854 = vld [vmem:[#allocation3 + $0x38] sm:$0xff]
    %v855 = vld [vmem:[#allocation3 + $0x40] sm:$0xff]
    %v856 = vld [vmem:[#allocation3 + $0x48] sm:$0xff]
    %v857 = vld [vmem:[#allocation3 + $0x50] sm:$0xff]
    %v858 = vld [vmem:[#allocation3 + $0x58] sm:$0xff]
    %v859 = vld [vmem:[#allocation3 + $0x60] sm:$0xff]
    %v860 = vld [vmem:[#allocation3 + $0x68] sm:$0xff]
    %v861 = vld [vmem:[#allocation3 + $0x70] sm:$0xff]
    %v862 = vld [vmem:[#allocation3 + $0x78] sm:$0xff]
    %v863 = vld [vmem:[#allocation3 + $0x80] sm:$0xff]
    %v864 = vld [vmem:[#allocation3 + $0x88] sm:$0xff]
    %v865 = vld [vmem:[#allocation3 + $0x90] sm:$0xff]
    %v866 = vld [vmem:[#allocation3 + $0x98] sm:$0xff]
    %v867 = vld [vmem:[#allocation3 + $0xa0] sm:$0xff]
    %v868 = vld [vmem:[#allocation3 + $0xa8] sm:$0xff]
    %v869 = vld [vmem:[#allocation3 + $0xb0] sm:$0xff]
    %v870 = vld [vmem:[#allocation3 + $0xb8] sm:$0xff]
    %v871 = vld [vmem:[#allocation3 + $0xc0] sm:$0xff]
    %v872 = vld [vmem:[#allocation3 + $0xc8] sm:$0xff]
    %v873 = vld [vmem:[#allocation3 + $0xd0] sm:$0xff]
    %v874 = vld [vmem:[#allocation3 + $0xd8] sm:$0xff]
    %v875 = vld [vmem:[#allocation3 + $0xe0] sm:$0xff]
    %v876 = vld [vmem:[#allocation3 + $0xe8] sm:$0xff]
    %v877 = vld [vmem:[#allocation3 + $0xf0] sm:$0xff]
    %v878 = vld [vmem:[#allocation3 + $0xf8] sm:$0xff]
    %v879 = vmax.f32 %v847, 1.0
    %v880 = vmax.f32 %v848, 1.0
    %v881 = vmax.f32 %v849, 1.0
    %v882 = vmax.f32 %v850, 1.0
    %v883 = vmax.f32 %v851, 1.0
    %v884 = vmax.f32 %v852, 1.0
    %v885 = vmax.f32 %v853, 1.0
    %v886 = vmax.f32 %v854, 1.0
    %v887 = vmax.f32 %v855, 1.0
    %v888 = vmax.f32 %v856, 1.0
    %v889 = vmax.f32 %v857, 1.0
    %v890 = vmax.f32 %v858, 1.0
    %v891 = vmax.f32 %v859, 1.0
    %v892 = vmax.f32 %v860, 1.0
    %v893 = vmax.f32 %v861, 1.0
    %v894 = vmax.f32 %v862, 1.0
    %v895 = vmax.f32 %v863, 1.0
    %v896 = vmax.f32 %v864, 1.0
    %v897 = vmax.f32 %v865, 1.0
    %v898 = vmax.f32 %v866, 1.0
    %v899 = vmax.f32 %v867, 1.0
    %v900 = vmax.f32 %v868, 1.0
    %v901 = vmax.f32 %v869, 1.0
    %v902 = vmax.f32 %v870, 1.0
    %v903 = vmax.f32 %v871, 1.0
    %v904 = vmax.f32 %v872, 1.0
    %v905 = vmax.f32 %v873, 1.0
    %v906 = vmax.f32 %v874, 1.0
    %v907 = vmax.f32 %v875, 1.0
    %v908 = vmax.f32 %v876, 1.0
    %v909 = vmax.f32 %v877, 1.0
    %v910 = vmax.f32 %v878, 1.0
    %v911 = vrcp.pop %v879
    %v912 = vmul.f32 1.0, %v911
    %v913 = vrcp.pop %v880
    %v914 = vmul.f32 1.0, %v913
    %v915 = vrcp.pop %v881
    %v916 = vmul.f32 1.0, %v915
    %v917 = vrcp.pop %v882
    %v918 = vmul.f32 1.0, %v917
    %v919 = vrcp.pop %v883
    %v920 = vmul.f32 1.0, %v919
    %v921 = vrcp.pop %v884
    %v922 = vmul.f32 1.0, %v921
    %v923 = vrcp.pop %v885
    %v924 = vmul.f32 1.0, %v923
    %v925 = vrcp.pop %v886
    %v926 = vmul.f32 1.0, %v925
    %v927 = vrcp.pop %v887
    %v928 = vmul.f32 1.0, %v927
    %v929 = vrcp.pop %v888
    %v930 = vmul.f32 1.0, %v929
    %v931 = vrcp.pop %v889
    %v932 = vmul.f32 1.0, %v931
    %v933 = vrcp.pop %v890
    %v934 = vmul.f32 1.0, %v933
    %v935 = vrcp.pop %v891
    %v936 = vmul.f32 1.0, %v935
    %v937 = vrcp.pop %v892
    %v938 = vmul.f32 1.0, %v937
    %v939 = vrcp.pop %v893
    %v940 = vmul.f32 1.0, %v939
    %v941 = vrcp.pop %v894
    %v942 = vmul.f32 1.0, %v941
    %v943 = vrcp.pop %v895
    %v944 = vmul.f32 1.0, %v943
    %v945 = vrcp.pop %v896
    %v946 = vmul.f32 1.0, %v945
    %v947 = vrcp.pop %v897
    %v948 = vmul.f32 1.0, %v947
    %v949 = vrcp.pop %v898
    %v950 = vmul.f32 1.0, %v949
    %v951 = vrcp.pop %v899
    %v952 = vmul.f32 1.0, %v951
    %v953 = vrcp.pop %v900
    %v954 = vmul.f32 1.0, %v953
    %v955 = vrcp.pop %v901
    %v956 = vmul.f32 1.0, %v955
    %v957 = vrcp.pop %v902
    %v958 = vmul.f32 1.0, %v957
    %v959 = vrcp.pop %v903
    %v960 = vmul.f32 1.0, %v959
    %v961 = vrcp.pop %v904
    %v962 = vmul.f32 1.0, %v961
    %v963 = vrcp.pop %v905
    %v964 = vmul.f32 1.0, %v963
    %v965 = vrcp.pop %v906
    %v966 = vmul.f32 1.0, %v965
    %v967 = vrcp.pop %v907
    %v968 = vmul.f32 1.0, %v967
    %v969 = vrcp.pop %v908
    %v970 = vmul.f32 1.0, %v969
    %v971 = vrcp.pop %v909
    %v972 = vmul.f32 1.0, %v971
    %v973 = vrcp.pop %v910
    %v974 = vmul.f32 1.0, %v973
    %v975 = vld [vmem:[%s2] sm:$0xf]
    %v976 = vld [vmem:[%s2 + $0x4] sm:$0xf]
    %v977 = vld [vmem:[%s2 + $0x8] sm:$0xf]
    %v978 = vld [vmem:[%s2 + $0xc] sm:$0xf]
    %v979 = vld [vmem:[%s2 + $0x10] sm:$0xf]
    %v980 = vld [vmem:[%s2 + $0x14] sm:$0xf]
    %v981 = vld [vmem:[%s2 + $0x18] sm:$0xf]
    %v982 = vld [vmem:[%s2 + $0x1c] sm:$0xf]
    %v983 = vld [vmem:[%s2 + $0x20] sm:$0xf]
    %v984 = vld [vmem:[%s2 + $0x24] sm:$0xf]
    %v985 = vld [vmem:[%s2 + $0x28] sm:$0xf]
    %v986 = vld [vmem:[%s2 + $0x2c] sm:$0xf]
    %v987 = vld [vmem:[%s2 + $0x30] sm:$0xf]
    %v988 = vld [vmem:[%s2 + $0x34] sm:$0xf]
    %v989 = vld [vmem:[%s2 + $0x38] sm:$0xf]
    %v990 = vld [vmem:[%s2 + $0x3c] sm:$0xf]
    %v991 = vld [vmem:[%s2 + $0x40] sm:$0xf]
    %v992 = vld [vmem:[%s2 + $0x44] sm:$0xf]
    %v993 = vld [vmem:[%s2 + $0x48] sm:$0xf]
    %v994 = vld [vmem:[%s2 + $0x4c] sm:$0xf]
    %v995 = vld [vmem:[%s2 + $0x50] sm:$0xf]
    %v996 = vld [vmem:[%s2 + $0x54] sm:$0xf]
    %v997 = vld [vmem:[%s2 + $0x58] sm:$0xf]
    %v998 = vld [vmem:[%s2 + $0x5c] sm:$0xf]
    %v999 = vld [vmem:[%s2 + $0x60] sm:$0xf]
    %v1000 = vld [vmem:[%s2 + $0x64] sm:$0xf]
    %v1001 = vld [vmem:[%s2 + $0x68] sm:$0xf]
    %v1002 = vld [vmem:[%s2 + $0x6c] sm:$0xf]
    %v1003 = vld [vmem:[%s2 + $0x70] sm:$0xf]
    %v1004 = vld [vmem:[%s2 + $0x74] sm:$0xf]
    %v1005 = vld [vmem:[%s2 + $0x78] sm:$0xf]
    %v1006 = vld [vmem:[%s2 + $0x7c] sm:$0xf]
    %v1007 = vld [vmem:[%s3] sm:$0xf]
    %v1008 = vld [vmem:[%s3 + $0x4] sm:$0xf]
    %v1009 = vld [vmem:[%s3 + $0x8] sm:$0xf]
    %v1010 = vld [vmem:[%s3 + $0xc] sm:$0xf]
    %v1011 = vld [vmem:[%s3 + $0x10] sm:$0xf]
    %v1012 = vld [vmem:[%s3 + $0x14] sm:$0xf]
    %v1013 = vld [vmem:[%s3 + $0x18] sm:$0xf]
    %v1014 = vld [vmem:[%s3 + $0x1c] sm:$0xf]
    %v1015 = vld [vmem:[%s3 + $0x20] sm:$0xf]
    %v1016 = vld [vmem:[%s3 + $0x24] sm:$0xf]
    %v1017 = vld [vmem:[%s3 + $0x28] sm:$0xf]
    %v1018 = vld [vmem:[%s3 + $0x2c] sm:$0xf]
    %v1019 = vld [vmem:[%s3 + $0x30] sm:$0xf]
    %v1020 = vld [vmem:[%s3 + $0x34] sm:$0xf]
    %v1021 = vld [vmem:[%s3 + $0x38] sm:$0xf]
    %v1022 = vld [vmem:[%s3 + $0x3c] sm:$0xf]
    %v1023 = vld [vmem:[#allocation2] sm:$0xff]
    %v1024 = vld [vmem:[#allocation2 + $0x8] sm:$0xff]
    %v1025 = vld [vmem:[#allocation2 + $0x10] sm:$0xff]
    %v1026 = vld [vmem:[#allocation2 + $0x18] sm:$0xff]
    %v1027 = vld [vmem:[#allocation2 + $0x20] sm:$0xff]
    %v1028 = vld [vmem:[#allocation2 + $0x28] sm:$0xff]
    %v1029 = vld [vmem:[#allocation2 + $0x30] sm:$0xff]
    %v1030 = vld [vmem:[#allocation2 + $0x38] sm:$0xff]
    %v1031 = vld [vmem:[#allocation2 + $0x40] sm:$0xff]
    %v1032 = vld [vmem:[#allocation2 + $0x48] sm:$0xff]
    %v1033 = vld [vmem:[#allocation2 + $0x50] sm:$0xff]
    %v1034 = vld [vmem:[#allocation2 + $0x58] sm:$0xff]
    %v1035 = vld [vmem:[#allocation2 + $0x60] sm:$0xff]
    %v1036 = vld [vmem:[#allocation2 + $0x68] sm:$0xff]
    %v1037 = vld [vmem:[#allocation2 + $0x70] sm:$0xff]
    %v1038 = vld [vmem:[#allocation2 + $0x78] sm:$0xff]
    %v1039 = vld [vmem:[#allocation2 + $0x80] sm:$0xff]
    %v1040 = vld [vmem:[#allocation2 + $0x88] sm:$0xff]
    %v1041 = vld [vmem:[#allocation2 + $0x90] sm:$0xff]
    %v1042 = vld [vmem:[#allocation2 + $0x98] sm:$0xff]
    %v1043 = vld [vmem:[#allocation2 + $0xa0] sm:$0xff]
    %v1044 = vld [vmem:[#allocation2 + $0xa8] sm:$0xff]
    %v1045 = vld [vmem:[#allocation2 + $0xb0] sm:$0xff]
    %v1046 = vld [vmem:[#allocation2 + $0xb8] sm:$0xff]
    %v1047 = vld [vmem:[#allocation2 + $0xc0] sm:$0xff]
    %v1048 = vld [vmem:[#allocation2 + $0xc8] sm:$0xff]
    %v1049 = vld [vmem:[#allocation2 + $0xd0] sm:$0xff]
    %v1050 = vld [vmem:[#allocation2 + $0xd8] sm:$0xff]
    %v1051 = vld [vmem:[#allocation2 + $0xe0] sm:$0xff]
    %v1052 = vld [vmem:[#allocation2 + $0xe8] sm:$0xff]
    %v1053 = vld [vmem:[#allocation2 + $0xf0] sm:$0xff]
    %v1054 = vld [vmem:[#allocation2 + $0xf8] sm:$0xff]
    %1056 = vset.pattern.permute.xlu0 0
    %1057 = vperm.xlu0 %1056, %v912
    %v1058 = vpop.permute.xlu0 %1057
    %1061 = vset.pattern.permute.xlu0 0
    %1062 = vperm.xlu0 %1061, %v914
    %v1063 = vpop.permute.xlu0 %1062
    %1066 = vset.pattern.permute.xlu0 0
    %1067 = vperm.xlu0 %1066, %v916
    %v1068 = vpop.permute.xlu0 %1067
    %1071 = vset.pattern.permute.xlu0 0
    %1072 = vperm.xlu0 %1071, %v918
    %v1073 = vpop.permute.xlu0 %1072
    %1076 = vset.pattern.permute.xlu0 0
    %1077 = vperm.xlu0 %1076, %v920
    %v1078 = vpop.permute.xlu0 %1077
    %1081 = vset.pattern.permute.xlu0 0
    %1082 = vperm.xlu0 %1081, %v922
    %v1083 = vpop.permute.xlu0 %1082
    %1086 = vset.pattern.permute.xlu0 0
    %1087 = vperm.xlu0 %1086, %v924
    %v1088 = vpop.permute.xlu0 %1087
    %1091 = vset.pattern.permute.xlu0 0
    %1092 = vperm.xlu0 %1091, %v926
    %v1093 = vpop.permute.xlu0 %1092
    %1096 = vset.pattern.permute.xlu0 0
    %1097 = vperm.xlu0 %1096, %v928
    %v1098 = vpop.permute.xlu0 %1097
    %1101 = vset.pattern.permute.xlu0 0
    %1102 = vperm.xlu0 %1101, %v930
    %v1103 = vpop.permute.xlu0 %1102
    %1106 = vset.pattern.permute.xlu0 0
    %1107 = vperm.xlu0 %1106, %v932
    %v1108 = vpop.permute.xlu0 %1107
    %1111 = vset.pattern.permute.xlu0 0
    %1112 = vperm.xlu0 %1111, %v934
    %v1113 = vpop.permute.xlu0 %1112
    %1116 = vset.pattern.permute.xlu0 0
    %1117 = vperm.xlu0 %1116, %v936
    %v1118 = vpop.permute.xlu0 %1117
    %1121 = vset.pattern.permute.xlu0 0
    %1122 = vperm.xlu0 %1121, %v938
    %v1123 = vpop.permute.xlu0 %1122
    %1126 = vset.pattern.permute.xlu0 0
    %1127 = vperm.xlu0 %1126, %v940
    %v1128 = vpop.permute.xlu0 %1127
    %1131 = vset.pattern.permute.xlu0 0
    %1132 = vperm.xlu0 %1131, %v942
    %v1133 = vpop.permute.xlu0 %1132
    %1136 = vset.pattern.permute.xlu0 0
    %1137 = vperm.xlu0 %1136, %v944
    %v1138 = vpop.permute.xlu0 %1137
    %1141 = vset.pattern.permute.xlu0 0
    %1142 = vperm.xlu0 %1141, %v946
    %v1143 = vpop.permute.xlu0 %1142
    %1146 = vset.pattern.permute.xlu0 0
    %1147 = vperm.xlu0 %1146, %v948
    %v1148 = vpop.permute.xlu0 %1147
    %1151 = vset.pattern.permute.xlu0 0
    %1152 = vperm.xlu0 %1151, %v950
    %v1153 = vpop.permute.xlu0 %1152
    %1156 = vset.pattern.permute.xlu0 0
    %1157 = vperm.xlu0 %1156, %v952
    %v1158 = vpop.permute.xlu0 %1157
    %1161 = vset.pattern.permute.xlu0 0
    %1162 = vperm.xlu0 %1161, %v954
    %v1163 = vpop.permute.xlu0 %1162
    %1166 = vset.pattern.permute.xlu0 0
    %1167 = vperm.xlu0 %1166, %v956
    %v1168 = vpop.permute.xlu0 %1167
    %1171 = vset.pattern.permute.xlu0 0
    %1172 = vperm.xlu0 %1171, %v958
    %v1173 = vpop.permute.xlu0 %1172
    %1176 = vset.pattern.permute.xlu0 0
    %1177 = vperm.xlu0 %1176, %v960
    %v1178 = vpop.permute.xlu0 %1177
    %1181 = vset.pattern.permute.xlu0 0
    %1182 = vperm.xlu0 %1181, %v962
    %v1183 = vpop.permute.xlu0 %1182
    %1186 = vset.pattern.permute.xlu0 0
    %1187 = vperm.xlu0 %1186, %v964
    %v1188 = vpop.permute.xlu0 %1187
    %1191 = vset.pattern.permute.xlu0 0
    %1192 = vperm.xlu0 %1191, %v966
    %v1193 = vpop.permute.xlu0 %1192
    %1196 = vset.pattern.permute.xlu0 0
    %1197 = vperm.xlu0 %1196, %v968
    %v1198 = vpop.permute.xlu0 %1197
    %1201 = vset.pattern.permute.xlu0 0
    %1202 = vperm.xlu0 %1201, %v970
    %v1203 = vpop.permute.xlu0 %1202
    %1206 = vset.pattern.permute.xlu0 0
    %1207 = vperm.xlu0 %1206, %v972
    %v1208 = vpop.permute.xlu0 %1207
    %1211 = vset.pattern.permute.xlu0 0
    %1212 = vperm.xlu0 %1211, %v974
    %v1213 = vpop.permute.xlu0 %1212
    %v1215 = vmul.f32 %v1023, %v1058
    %v1216 = vmul.f32 %v1024, %v1063
    %v1217 = vmul.f32 %v1025, %v1068
    %v1218 = vmul.f32 %v1026, %v1073
    %v1219 = vmul.f32 %v1027, %v1078
    %v1220 = vmul.f32 %v1028, %v1083
    %v1221 = vmul.f32 %v1029, %v1088
    %v1222 = vmul.f32 %v1030, %v1093
    %v1223 = vmul.f32 %v1031, %v1098
    %v1224 = vmul.f32 %v1032, %v1103
    %v1225 = vmul.f32 %v1033, %v1108
    %v1226 = vmul.f32 %v1034, %v1113
    %v1227 = vmul.f32 %v1035, %v1118
    %v1228 = vmul.f32 %v1036, %v1123
    %v1229 = vmul.f32 %v1037, %v1128
    %v1230 = vmul.f32 %v1038, %v1133
    %v1231 = vmul.f32 %v1039, %v1138
    %v1232 = vmul.f32 %v1040, %v1143
    %v1233 = vmul.f32 %v1041, %v1148
    %v1234 = vmul.f32 %v1042, %v1153
    %v1235 = vmul.f32 %v1043, %v1158
    %v1236 = vmul.f32 %v1044, %v1163
    %v1237 = vmul.f32 %v1045, %v1168
    %v1238 = vmul.f32 %v1046, %v1173
    %v1239 = vmul.f32 %v1047, %v1178
    %v1240 = vmul.f32 %v1048, %v1183
    %v1241 = vmul.f32 %v1049, %v1188
    %v1242 = vmul.f32 %v1050, %v1193
    %v1243 = vmul.f32 %v1051, %v1198
    %v1244 = vmul.f32 %v1052, %v1203
    %v1245 = vmul.f32 %v1053, %v1208
    %v1246 = vmul.f32 %v1054, %v1213
    %v1279 = vunpack.c.l.b16 %v975
    %v1280 = vunpack.c.l.b16 %v976
    %v1281 = vunpack.c.l.b16 %v977
    %v1282 = vunpack.c.l.b16 %v978
    %v1283 = vunpack.c.l.b16 %v979
    %v1284 = vunpack.c.l.b16 %v980
    %v1285 = vunpack.c.l.b16 %v981
    %v1286 = vunpack.c.l.b16 %v982
    %v1287 = vunpack.c.l.b16 %v983
    %v1288 = vunpack.c.l.b16 %v984
    %v1289 = vunpack.c.l.b16 %v985
    %v1290 = vunpack.c.l.b16 %v986
    %v1291 = vunpack.c.l.b16 %v987
    %v1292 = vunpack.c.l.b16 %v988
    %v1293 = vunpack.c.l.b16 %v989
    %v1294 = vunpack.c.l.b16 %v990
    %v1295 = vunpack.c.l.b16 %v991
    %v1296 = vunpack.c.l.b16 %v992
    %v1297 = vunpack.c.l.b16 %v993
    %v1298 = vunpack.c.l.b16 %v994
    %v1299 = vunpack.c.l.b16 %v995
    %v1300 = vunpack.c.l.b16 %v996
    %v1301 = vunpack.c.l.b16 %v997
    %v1302 = vunpack.c.l.b16 %v998
    %v1303 = vunpack.c.l.b16 %v999
    %v1304 = vunpack.c.l.b16 %v1000
    %v1305 = vunpack.c.l.b16 %v1001
    %v1306 = vunpack.c.l.b16 %v1002
    %v1307 = vunpack.c.l.b16 %v1003
    %v1308 = vunpack.c.l.b16 %v1004
    %v1309 = vunpack.c.l.b16 %v1005
    %v1310 = vunpack.c.l.b16 %v1006
    %v1311 = vpack.c.b16 %v1280, %v1279
    %v1312 = vpack.c.b16 %v1282, %v1281
    %v1313 = vpack.c.b16 %v1284, %v1283
    %v1314 = vpack.c.b16 %v1286, %v1285
    %v1315 = vpack.c.b16 %v1288, %v1287
    %v1316 = vpack.c.b16 %v1290, %v1289
    %v1317 = vpack.c.b16 %v1292, %v1291
    %v1318 = vpack.c.b16 %v1294, %v1293
    %v1319 = vpack.c.b16 %v1296, %v1295
    %v1320 = vpack.c.b16 %v1298, %v1297
    %v1321 = vpack.c.b16 %v1300, %v1299
    %v1322 = vpack.c.b16 %v1302, %v1301
    %v1323 = vpack.c.b16 %v1304, %v1303
    %v1324 = vpack.c.b16 %v1306, %v1305
    %v1325 = vpack.c.b16 %v1308, %v1307
    %v1326 = vpack.c.b16 %v1310, %v1309
    %v1359 = vunpack.c.l.b16 %v1007
    %v1360 = vunpack.c.l.b16 %v1008
    %v1361 = vunpack.c.l.b16 %v1009
    %v1362 = vunpack.c.l.b16 %v1010
    %v1363 = vunpack.c.l.b16 %v1011
    %v1364 = vunpack.c.l.b16 %v1012
    %v1365 = vunpack.c.l.b16 %v1013
    %v1366 = vunpack.c.l.b16 %v1014
    %v1367 = vunpack.c.l.b16 %v1015
    %v1368 = vunpack.c.l.b16 %v1016
    %v1369 = vunpack.c.l.b16 %v1017
    %v1370 = vunpack.c.l.b16 %v1018
    %v1371 = vunpack.c.l.b16 %v1019
    %v1372 = vunpack.c.l.b16 %v1020
    %v1373 = vunpack.c.l.b16 %v1021
    %v1374 = vunpack.c.l.b16 %v1022
    %v1375 = vpack.c.b16 %v1360, %v1359
    %v1376 = vpack.c.b16 %v1362, %v1361
    %v1377 = vpack.c.b16 %v1364, %v1363
    %v1378 = vpack.c.b16 %v1366, %v1365
    %v1379 = vpack.c.b16 %v1368, %v1367
    %v1380 = vpack.c.b16 %v1370, %v1369
    %v1381 = vpack.c.b16 %v1372, %v1371
    %v1382 = vpack.c.b16 %v1374, %v1373
    %1391 = vmatprep.subr.bf16.mxu0 0
    %1392 = vmatpush1.bf16.msra.mxu0 %v1375
    %1393 = vmatprep.subr.bf16.mxu0 0
    %1394 = vmatpush1.bf16.msra.mxu0 %v1376
    %1395 = vmatprep.subr.bf16.mxu0 0
    %1396 = vmatpush1.bf16.msra.mxu0 %v1377
    %1397 = vmatprep.subr.bf16.mxu0 0
    %1398 = vmatpush1.bf16.msra.mxu0 %v1378
    %1399 = vmatprep.subr.bf16.mxu0 0
    %1400 = vmatpush1.bf16.msra.mxu0 %v1379
    %1401 = vmatprep.subr.bf16.mxu0 0
    %1402 = vmatpush1.bf16.msra.mxu0 %v1380
    %1403 = vmatprep.subr.bf16.mxu0 0
    %1404 = vmatpush1.bf16.msra.mxu0 %v1381
    %1405 = vmatprep.subr.bf16.mxu0 0
    %1406 = vmatpush1.bf16.msra.mxu0 %v1382
    %1407 = vmatprep.subr.bf16.mxu0 0
    %1408 = vmatpush1.bf16.msra.mxu0 0
    %1409 = vmatprep.subr.bf16.mxu0 0
    %1410 = vmatpush1.bf16.msra.mxu0 0
    %1411 = vmatprep.subr.bf16.mxu0 0
    %1412 = vmatpush1.bf16.msra.mxu0 0
    %1413 = vmatprep.subr.bf16.mxu0 0
    %1414 = vmatpush1.bf16.msra.mxu0 0
    %1415 = vmatprep.subr.bf16.mxu0 0
    %1416 = vmatpush1.bf16.msra.mxu0 0
    %1417 = vmatprep.subr.bf16.mxu0 0
    %1418 = vmatpush1.bf16.msra.mxu0 0
    %1419 = vmatprep.subr.bf16.mxu0 0
    %1420 = vmatpush1.bf16.msra.mxu0 0
    %1421 = vmatprep.subr.bf16.mxu0 0
    %1422 = vmatpush1.bf16.msra.mxu0 0
    %1423 = vmatprep.mubr.bf16.mxu0 0
    %1424 = vmatmul.mubr.bf16.gmra.mrb[0].mxu0 %v1311
    %v1425 = vpop.f32.mrb[0].mxu0
    %v1426 = vadd.f32 %v1215, %v1425
    %v1427 = vpop.f32.mrb[0].mxu0
    %v1428 = vpop.f32.mrb[0].mxu0
    %v1429 = vadd.f32 %v1216, %v1428
    %v1430 = vpop.f32.mrb[0].mxu0
    %1431 = vmatprep.mubr.bf16.mxu0 0
    %1432 = vmatmul.mubr.bf16.gmra.mrb[0].mxu0 %v1312
    %v1433 = vpop.f32.mrb[0].mxu0
    %v1434 = vadd.f32 %v1217, %v1433
    %v1435 = vpop.f32.mrb[0].mxu0
    %v1436 = vpop.f32.mrb[0].mxu0
    %v1437 = vadd.f32 %v1218, %v1436
    %v1438 = vpop.f32.mrb[0].mxu0
    %1439 = vmatprep.mubr.bf16.mxu0 0
    %1440 = vmatmul.mubr.bf16.gmra.mrb[0].mxu0 %v1313
    %v1441 = vpop.f32.mrb[0].mxu0
    %v1442 = vadd.f32 %v1219, %v1441
    %v1443 = vpop.f32.mrb[0].mxu0
    %v1444 = vpop.f32.mrb[0].mxu0
    %v1445 = vadd.f32 %v1220, %v1444
    %v1446 = vpop.f32.mrb[0].mxu0
    %1447 = vmatprep.mubr.bf16.mxu0 0
    %1448 = vmatmul.mubr.bf16.gmra.mrb[0].mxu0 %v1314
    %v1449 = vpop.f32.mrb[0].mxu0
    %v1450 = vadd.f32 %v1221, %v1449
    %v1451 = vpop.f32.mrb[0].mxu0
    %v1452 = vpop.f32.mrb[0].mxu0
    %v1453 = vadd.f32 %v1222, %v1452
    %v1454 = vpop.f32.mrb[0].mxu0
    %1455 = vmatprep.mubr.bf16.mxu0 0
    %1456 = vmatmul.mubr.bf16.gmra.mrb[0].mxu0 %v1315
    %v1457 = vpop.f32.mrb[0].mxu0
    %v1458 = vadd.f32 %v1223, %v1457
    %v1459 = vpop.f32.mrb[0].mxu0
    %v1460 = vpop.f32.mrb[0].mxu0
    %v1461 = vadd.f32 %v1224, %v1460
    %v1462 = vpop.f32.mrb[0].mxu0
    %1463 = vmatprep.mubr.bf16.mxu0 0
    %1464 = vmatmul.mubr.bf16.gmra.mrb[0].mxu0 %v1316
    %v1465 = vpop.f32.mrb[0].mxu0
    %v1466 = vadd.f32 %v1225, %v1465
    %v1467 = vpop.f32.mrb[0].mxu0
    %v1468 = vpop.f32.mrb[0].mxu0
    %v1469 = vadd.f32 %v1226, %v1468
    %v1470 = vpop.f32.mrb[0].mxu0
    %1471 = vmatprep.mubr.bf16.mxu0 0
    %1472 = vmatmul.mubr.bf16.gmra.mrb[0].mxu0 %v1317
    %v1473 = vpop.f32.mrb[0].mxu0
    %v1474 = vadd.f32 %v1227, %v1473
    %v1475 = vpop.f32.mrb[0].mxu0
    %v1476 = vpop.f32.mrb[0].mxu0
    %v1477 = vadd.f32 %v1228, %v1476
    %v1478 = vpop.f32.mrb[0].mxu0
    %1479 = vmatprep.mubr.bf16.mxu0 0
    %1480 = vmatmul.mubr.bf16.gmra.mrb[0].mxu0 %v1318
    %v1481 = vpop.f32.mrb[0].mxu0
    %v1482 = vadd.f32 %v1229, %v1481
    %v1483 = vpop.f32.mrb[0].mxu0
    %v1484 = vpop.f32.mrb[0].mxu0
    %v1485 = vadd.f32 %v1230, %v1484
    %v1486 = vpop.f32.mrb[0].mxu0
    %1487 = vmatprep.mubr.bf16.mxu0 0
    %1488 = vmatmul.mubr.bf16.gmra.mrb[0].mxu0 %v1319
    %v1489 = vpop.f32.mrb[0].mxu0
    %v1490 = vadd.f32 %v1231, %v1489
    %v1491 = vpop.f32.mrb[0].mxu0
    %v1492 = vpop.f32.mrb[0].mxu0
    %v1493 = vadd.f32 %v1232, %v1492
    %v1494 = vpop.f32.mrb[0].mxu0
    %1495 = vmatprep.mubr.bf16.mxu0 0
    %1496 = vmatmul.mubr.bf16.gmra.mrb[0].mxu0 %v1320
    %v1497 = vpop.f32.mrb[0].mxu0
    %v1498 = vadd.f32 %v1233, %v1497
    %v1499 = vpop.f32.mrb[0].mxu0
    %v1500 = vpop.f32.mrb[0].mxu0
    %v1501 = vadd.f32 %v1234, %v1500
    %v1502 = vpop.f32.mrb[0].mxu0
    %1503 = vmatprep.mubr.bf16.mxu0 0
    %1504 = vmatmul.mubr.bf16.gmra.mrb[0].mxu0 %v1321
    %v1505 = vpop.f32.mrb[0].mxu0
    %v1506 = vadd.f32 %v1235, %v1505
    %v1507 = vpop.f32.mrb[0].mxu0
    %v1508 = vpop.f32.mrb[0].mxu0
    %v1509 = vadd.f32 %v1236, %v1508
    %v1510 = vpop.f32.mrb[0].mxu0
    %1511 = vmatprep.mubr.bf16.mxu0 0
    %1512 = vmatmul.mubr.bf16.gmra.mrb[0].mxu0 %v1322
    %v1513 = vpop.f32.mrb[0].mxu0
    %v1514 = vadd.f32 %v1237, %v1513
    %v1515 = vpop.f32.mrb[0].mxu0
    %v1516 = vpop.f32.mrb[0].mxu0
    %v1517 = vadd.f32 %v1238, %v1516
    %v1518 = vpop.f32.mrb[0].mxu0
    %1519 = vmatprep.mubr.bf16.mxu0 0
    %1520 = vmatmul.mubr.bf16.gmra.mrb[0].mxu0 %v1323
    %v1521 = vpop.f32.mrb[0].mxu0
    %v1522 = vadd.f32 %v1239, %v1521
    %v1523 = vpop.f32.mrb[0].mxu0
    %v1524 = vpop.f32.mrb[0].mxu0
    %v1525 = vadd.f32 %v1240, %v1524
    %v1526 = vpop.f32.mrb[0].mxu0
    %1527 = vmatprep.mubr.bf16.mxu0 0
    %1528 = vmatmul.mubr.bf16.gmra.mrb[0].mxu0 %v1324
    %v1529 = vpop.f32.mrb[0].mxu0
    %v1530 = vadd.f32 %v1241, %v1529
    %v1531 = vpop.f32.mrb[0].mxu0
    %v1532 = vpop.f32.mrb[0].mxu0
    %v1533 = vadd.f32 %v1242, %v1532
    %v1534 = vpop.f32.mrb[0].mxu0
    %1535 = vmatprep.mubr.bf16.mxu0 0
    %1536 = vmatmul.mubr.bf16.gmra.mrb[0].mxu0 %v1325
    %v1537 = vpop.f32.mrb[0].mxu0
    %v1538 = vadd.f32 %v1243, %v1537
    %v1539 = vpop.f32.mrb[0].mxu0
    %v1540 = vpop.f32.mrb[0].mxu0
    %v1541 = vadd.f32 %v1244, %v1540
    %v1542 = vpop.f32.mrb[0].mxu0
    %1543 = vmatprep.mubr.bf16.mxu0 0
    %1544 = vmatmul.mubr.bf16.gmra.mrb[0].mxu0 %v1326
    %v1545 = vpop.f32.mrb[0].mxu0
    %v1546 = vadd.f32 %v1245, %v1545
    %v1547 = vpop.f32.mrb[0].mxu0
    %v1548 = vpop.f32.mrb[0].mxu0
    %v1549 = vadd.f32 %v1246, %v1548
    %v1550 = vpop.f32.mrb[0].mxu0
    %1551 = vdwg.mxu0
    %v1552 = vld [vmem:[%s4] sm:$0x1]
    %v1554 = vlaneseq
    %v1555 = vshrl.u32 %v1554, 7
    %v1556 = vsub.s32 0, %v1555
    %v1557 = vrot.slane %v1552, %v1556
    %v1559 = vadd.f32 %v1426, %v1557
    %v1560 = vadd.f32 %v1429, %v1557
    %v1561 = vadd.f32 %v1434, %v1557
    %v1562 = vadd.f32 %v1437, %v1557
    %v1563 = vadd.f32 %v1442, %v1557
    %v1564 = vadd.f32 %v1445, %v1557
    %v1565 = vadd.f32 %v1450, %v1557
    %v1566 = vadd.f32 %v1453, %v1557
    %v1567 = vadd.f32 %v1458, %v1557
    %v1568 = vadd.f32 %v1461, %v1557
    %v1569 = vadd.f32 %v1466, %v1557
    %v1570 = vadd.f32 %v1469, %v1557
    %v1571 = vadd.f32 %v1474, %v1557
    %v1572 = vadd.f32 %v1477, %v1557
    %v1573 = vadd.f32 %v1482, %v1557
    %v1574 = vadd.f32 %v1485, %v1557
    %v1575 = vadd.f32 %v1490, %v1557
    %v1576 = vadd.f32 %v1493, %v1557
    %v1577 = vadd.f32 %v1498, %v1557
    %v1578 = vadd.f32 %v1501, %v1557
    %v1579 = vadd.f32 %v1506, %v1557
    %v1580 = vadd.f32 %v1509, %v1557
    %v1581 = vadd.f32 %v1514, %v1557
    %v1582 = vadd.f32 %v1517, %v1557
    %v1583 = vadd.f32 %v1522, %v1557
    %v1584 = vadd.f32 %v1525, %v1557
    %v1585 = vadd.f32 %v1530, %v1557
    %v1586 = vadd.f32 %v1533, %v1557
    %v1587 = vadd.f32 %v1538, %v1557
    %v1588 = vadd.f32 %v1541, %v1557
    %v1589 = vadd.f32 %v1546, %v1557
    %v1590 = vadd.f32 %v1549, %v1557
    %1591 = vst [vmem:[%s5] sm:$0xff] %v1559
    %1592 = vst [vmem:[%s5 + $0x8] sm:$0xff] %v1560
    %1593 = vst [vmem:[%s5 + $0x10] sm:$0xff] %v1561
    %1594 = vst [vmem:[%s5 + $0x18] sm:$0xff] %v1562
    %1595 = vst [vmem:[%s5 + $0x20] sm:$0xff] %v1563
    %1596 = vst [vmem:[%s5 + $0x28] sm:$0xff] %v1564
    %1597 = vst [vmem:[%s5 + $0x30] sm:$0xff] %v1565
    %1598 = vst [vmem:[%s5 + $0x38] sm:$0xff] %v1566
    %1599 = vst [vmem:[%s5 + $0x40] sm:$0xff] %v1567
    %1600 = vst [vmem:[%s5 + $0x48] sm:$0xff] %v1568
    %1601 = vst [vmem:[%s5 + $0x50] sm:$0xff] %v1569
    %1602 = vst [vmem:[%s5 + $0x58] sm:$0xff] %v1570
    %1603 = vst [vmem:[%s5 + $0x60] sm:$0xff] %v1571
    %1604 = vst [vmem:[%s5 + $0x68] sm:$0xff] %v1572
    %1605 = vst [vmem:[%s5 + $0x70] sm:$0xff] %v1573
    %1606 = vst [vmem:[%s5 + $0x78] sm:$0xff] %v1574
    %1607 = vst [vmem:[%s5 + $0x80] sm:$0xff] %v1575
    %1608 = vst [vmem:[%s5 + $0x88] sm:$0xff] %v1576
    %1609 = vst [vmem:[%s5 + $0x90] sm:$0xff] %v1577
    %1610 = vst [vmem:[%s5 + $0x98] sm:$0xff] %v1578
    %1611 = vst [vmem:[%s5 + $0xa0] sm:$0xff] %v1579
    %1612 = vst [vmem:[%s5 + $0xa8] sm:$0xff] %v1580
    %1613 = vst [vmem:[%s5 + $0xb0] sm:$0xff] %v1581
    %1614 = vst [vmem:[%s5 + $0xb8] sm:$0xff] %v1582
    %1615 = vst [vmem:[%s5 + $0xc0] sm:$0xff] %v1583
    %1616 = vst [vmem:[%s5 + $0xc8] sm:$0xff] %v1584
    %1617 = vst [vmem:[%s5 + $0xd0] sm:$0xff] %v1585
    %1618 = vst [vmem:[%s5 + $0xd8] sm:$0xff] %v1586
    %1619 = vst [vmem:[%s5 + $0xe0] sm:$0xff] %v1587
    %1620 = vst [vmem:[%s5 + $0xe8] sm:$0xff] %v1588
    %1621 = vst [vmem:[%s5 + $0xf0] sm:$0xff] %v1589
    %1622 = vst [vmem:[%s5 + $0xf8] sm:$0xff] %v1590
  $region29: #{sage_forward.3} parent=0 // pred_fallthru
    _
  // Predicated region
  $region30: #{sage_forward.3} parent=0 // pred_check
    _
  $region31: #{sage_forward.3} parent=0 // pred_check_branch
    %1624 = sbr.rel (0) target = $region33
  $region32: #{sage_forward.3} parent=0 // pred_region
    _
  $region33: #{sage_forward.3} parent=0 // pred_fallthru
    _
  // Predicated region
  $region34: #{sage_forward.3} parent=0 // pred_check
    _
  $region35: #{sage_forward.3} parent=0 // pred_check_branch
    %1626 = sbr.rel (0) target = $region37
  $region36: #{sage_forward.3} parent=0 // pred_region
    _
  $region37: #{sage_forward.3} parent=0 // pred_fallthru
    _

// kernel: sage_forward.2
$region0: #{sage_forward.2}
  #allocation0 [shape = 'u32[]', space=smem, size = 0x4, offset = 0x4, fixed_abs, tag = 'smem constant byte address 0x4 - core index']
  #allocation1 [shape = 'u32[144,128]{1,0:T(1,128)}', space=vmem, size = 0x12000, scoped, tag = 'internal scratch']
  #allocation2 [shape = 'f32[256,128]{1,0:T(8,128)}', space=vmem, size = 0x20000, scoped, tag = 'scratch operand']
  #allocation3 [shape = 'f32[256,1]{1,0:T(8,128)}', space=vmem, size = 0x20000, scoped, tag = 'scratch operand']
  %s0 = inlined_call_operand.vmem [shape: s8[256,256], index: 0, kind: input, shape index: {}]
  %s1 = inlined_call_operand.vmem [shape: bf16[256,128], index: 1, kind: input, shape index: {}]
  %s2 = inlined_call_operand.vmem [shape: bf16[256,128], index: 2, kind: input, shape index: {}]
  %s3 = inlined_call_operand.vmem [shape: bf16[128,128], index: 3, kind: input, shape index: {}]
  %s4 = inlined_call_operand.vmem [shape: f32[1,128], index: 4, kind: input, shape index: {}]
  %s5 = inlined_call_operand.vmem [shape: bf16[256,128], index: 5, kind: output, shape index: {}]
  %s6 = sld [smem:[#allocation0]]
  $region38: #{sage_forward.2} parent=0
    _
  %s8 = ssub.s32 1, %s6
  %s9 = scalar_select 0, %s8, %s6
  // Predicated region
  $region2: #{sage_forward.2} parent=0 // pred_check
    _
  $region3: #{sage_forward.2} parent=0 // pred_check_branch
    %11 = sbr.rel (0) target = $region5
  $region4: #{sage_forward.2} parent=0 // pred_region
    _
  $region5: #{sage_forward.2} parent=0 // pred_fallthru
    _
  // Predicated region
  $region6: #{sage_forward.2} parent=0 // pred_check
    _
  $region7: #{sage_forward.2} parent=0 // pred_check_branch
    %13 = sbr.rel (0) target = $region9
  $region8: #{sage_forward.2} parent=0 // pred_region
    _
  $region9: #{sage_forward.2} parent=0 // pred_fallthru
    _
  // Predicated region
  $region10: #{sage_forward.2} parent=0 // pred_check
    _
  $region11: #{sage_forward.2} parent=0 // pred_check_branch
    %15 = sbr.rel (0) target = $region13
  $region12: #{sage_forward.2} parent=0 // pred_region
    _
  $region13: #{sage_forward.2} parent=0 // pred_fallthru
    _
  // Predicated region
  $region14: #{sage_forward.2} parent=0 // pred_check
    _
  $region15: #{sage_forward.2} parent=0 // pred_check_branch
    %17 = sbr.rel (0) target = $region17
  $region16: #{sage_forward.2} parent=0 // pred_region
    _
  $region17: #{sage_forward.2} parent=0 // pred_fallthru
    _
  // Predicated region
  $region18: #{sage_forward.2} parent=0 // pred_check
    _
  $region19: #{sage_forward.2} parent=0 // pred_check_branch
    %19 = sbr.rel (0) target = $region21
  $region20: #{sage_forward.2} parent=0 // pred_region
    _
  $region21: #{sage_forward.2} parent=0 // pred_fallthru
    _
  %p21 = scmp.eq.s32.totalorder 0, 0
  // Predicated region
  $region22: #{sage_forward.2} parent=0 // pred_check
    %p22 = pneg %p21
  $region23: #{sage_forward.2} parent=0 // pred_check_branch
    %24 = sbr.rel (%p22) target = $region25
  $region24: #{sage_forward.2} parent=0 // pred_region
    %25 = vst [vmem:[#allocation2] sm:$0xff] 0.0
    %26 = vst [vmem:[#allocation2 + $0x8] sm:$0xff] 0.0
    %27 = vst [vmem:[#allocation2 + $0x10] sm:$0xff] 0.0
    %28 = vst [vmem:[#allocation2 + $0x18] sm:$0xff] 0.0
    %29 = vst [vmem:[#allocation2 + $0x20] sm:$0xff] 0.0
    %30 = vst [vmem:[#allocation2 + $0x28] sm:$0xff] 0.0
    %31 = vst [vmem:[#allocation2 + $0x30] sm:$0xff] 0.0
    %32 = vst [vmem:[#allocation2 + $0x38] sm:$0xff] 0.0
    %33 = vst [vmem:[#allocation2 + $0x40] sm:$0xff] 0.0
    %34 = vst [vmem:[#allocation2 + $0x48] sm:$0xff] 0.0
    %35 = vst [vmem:[#allocation2 + $0x50] sm:$0xff] 0.0
    %36 = vst [vmem:[#allocation2 + $0x58] sm:$0xff] 0.0
    %37 = vst [vmem:[#allocation2 + $0x60] sm:$0xff] 0.0
    %38 = vst [vmem:[#allocation2 + $0x68] sm:$0xff] 0.0
    %39 = vst [vmem:[#allocation2 + $0x70] sm:$0xff] 0.0
    %40 = vst [vmem:[#allocation2 + $0x78] sm:$0xff] 0.0
    %41 = vst [vmem:[#allocation2 + $0x80] sm:$0xff] 0.0
    %42 = vst [vmem:[#allocation2 + $0x88] sm:$0xff] 0.0
    %43 = vst [vmem:[#allocation2 + $0x90] sm:$0xff] 0.0
    %44 = vst [vmem:[#allocation2 + $0x98] sm:$0xff] 0.0
    %45 = vst [vmem:[#allocation2 + $0xa0] sm:$0xff] 0.0
    %46 = vst [vmem:[#allocation2 + $0xa8] sm:$0xff] 0.0
    %47 = vst [vmem:[#allocation2 + $0xb0] sm:$0xff] 0.0
    %48 = vst [vmem:[#allocation2 + $0xb8] sm:$0xff] 0.0
    %49 = vst [vmem:[#allocation2 + $0xc0] sm:$0xff] 0.0
    %50 = vst [vmem:[#allocation2 + $0xc8] sm:$0xff] 0.0
    %51 = vst [vmem:[#allocation2 + $0xd0] sm:$0xff] 0.0
    %52 = vst [vmem:[#allocation2 + $0xd8] sm:$0xff] 0.0
    %53 = vst [vmem:[#allocation2 + $0xe0] sm:$0xff] 0.0
    %54 = vst [vmem:[#allocation2 + $0xe8] sm:$0xff] 0.0
    %55 = vst [vmem:[#allocation2 + $0xf0] sm:$0xff] 0.0
    %56 = vst [vmem:[#allocation2 + $0xf8] sm:$0xff] 0.0
    %vm57 = vcmask 7168
    %58 = vst.msk [vmem:[#allocation3] sm:$0xff] %vm57, 0.0
    %59 = vst.msk [vmem:[#allocation3 + $0x8] sm:$0xff] %vm57, 0.0
    %60 = vst.msk [vmem:[#allocation3 + $0x10] sm:$0xff] %vm57, 0.0
    %61 = vst.msk [vmem:[#allocation3 + $0x18] sm:$0xff] %vm57, 0.0
    %62 = vst.msk [vmem:[#allocation3 + $0x20] sm:$0xff] %vm57, 0.0
    %63 = vst.msk [vmem:[#allocation3 + $0x28] sm:$0xff] %vm57, 0.0
    %64 = vst.msk [vmem:[#allocation3 + $0x30] sm:$0xff] %vm57, 0.0
    %65 = vst.msk [vmem:[#allocation3 + $0x38] sm:$0xff] %vm57, 0.0
    %66 = vst.msk [vmem:[#allocation3 + $0x40] sm:$0xff] %vm57, 0.0
    %67 = vst.msk [vmem:[#allocation3 + $0x48] sm:$0xff] %vm57, 0.0
    %68 = vst.msk [vmem:[#allocation3 + $0x50] sm:$0xff] %vm57, 0.0
    %69 = vst.msk [vmem:[#allocation3 + $0x58] sm:$0xff] %vm57, 0.0
    %70 = vst.msk [vmem:[#allocation3 + $0x60] sm:$0xff] %vm57, 0.0
    %71 = vst.msk [vmem:[#allocation3 + $0x68] sm:$0xff] %vm57, 0.0
    %72 = vst.msk [vmem:[#allocation3 + $0x70] sm:$0xff] %vm57, 0.0
    %73 = vst.msk [vmem:[#allocation3 + $0x78] sm:$0xff] %vm57, 0.0
    %74 = vst.msk [vmem:[#allocation3 + $0x80] sm:$0xff] %vm57, 0.0
    %75 = vst.msk [vmem:[#allocation3 + $0x88] sm:$0xff] %vm57, 0.0
    %76 = vst.msk [vmem:[#allocation3 + $0x90] sm:$0xff] %vm57, 0.0
    %77 = vst.msk [vmem:[#allocation3 + $0x98] sm:$0xff] %vm57, 0.0
    %78 = vst.msk [vmem:[#allocation3 + $0xa0] sm:$0xff] %vm57, 0.0
    %79 = vst.msk [vmem:[#allocation3 + $0xa8] sm:$0xff] %vm57, 0.0
    %80 = vst.msk [vmem:[#allocation3 + $0xb0] sm:$0xff] %vm57, 0.0
    %81 = vst.msk [vmem:[#allocation3 + $0xb8] sm:$0xff] %vm57, 0.0
    %82 = vst.msk [vmem:[#allocation3 + $0xc0] sm:$0xff] %vm57, 0.0
    %83 = vst.msk [vmem:[#allocation3 + $0xc8] sm:$0xff] %vm57, 0.0
    %84 = vst.msk [vmem:[#allocation3 + $0xd0] sm:$0xff] %vm57, 0.0
    %85 = vst.msk [vmem:[#allocation3 + $0xd8] sm:$0xff] %vm57, 0.0
    %86 = vst.msk [vmem:[#allocation3 + $0xe0] sm:$0xff] %vm57, 0.0
    %87 = vst.msk [vmem:[#allocation3 + $0xe8] sm:$0xff] %vm57, 0.0
    %88 = vst.msk [vmem:[#allocation3 + $0xf0] sm:$0xff] %vm57, 0.0
    %89 = vst.msk [vmem:[#allocation3 + $0xf8] sm:$0xff] %vm57, 0.0
  $region25: #{sage_forward.2} parent=0 // pred_fallthru
    _
  %v90 = vld [vmem:[%s0] sm:$0xff]
  %v91 = vld [vmem:[%s0 + $0x8] sm:$0xff]
  %v92 = vld [vmem:[%s0 + $0x10] sm:$0xff]
  %v93 = vld [vmem:[%s0 + $0x18] sm:$0xff]
  %v94 = vld [vmem:[%s0 + $0x20] sm:$0xff]
  %v95 = vld [vmem:[%s0 + $0x28] sm:$0xff]
  %v96 = vld [vmem:[%s0 + $0x30] sm:$0xff]
  %v97 = vld [vmem:[%s0 + $0x38] sm:$0xff]
  %v98 = vld [vmem:[%s0 + $0x40] sm:$0xff]
  %v99 = vld [vmem:[%s0 + $0x48] sm:$0xff]
  %v100 = vld [vmem:[%s0 + $0x50] sm:$0xff]
  %v101 = vld [vmem:[%s0 + $0x58] sm:$0xff]
  %v102 = vld [vmem:[%s0 + $0x60] sm:$0xff]
  %v103 = vld [vmem:[%s0 + $0x68] sm:$0xff]
  %v104 = vld [vmem:[%s0 + $0x70] sm:$0xff]
  %v105 = vld [vmem:[%s0 + $0x78] sm:$0xff]
  %v106 = vunpack.c.0.s8 %v90
  %v107 = vunpack.c.0.s8 %v91
  %v108 = vunpack.c.1.s8 %v90
  %v109 = vunpack.c.1.s8 %v91
  %v110 = vunpack.c.2.s8 %v90
  %v111 = vunpack.c.2.s8 %v91
  %v112 = vunpack.c.3.s8 %v90
  %v113 = vunpack.c.3.s8 %v91
  %v114 = vunpack.c.0.s8 %v92
  %v115 = vunpack.c.0.s8 %v93
  %v116 = vunpack.c.1.s8 %v92
  %v117 = vunpack.c.1.s8 %v93
  %v118 = vunpack.c.2.s8 %v92
  %v119 = vunpack.c.2.s8 %v93
  %v120 = vunpack.c.3.s8 %v92
  %v121 = vunpack.c.3.s8 %v93
  %v122 = vunpack.c.0.s8 %v94
  %v123 = vunpack.c.0.s8 %v95
  %v124 = vunpack.c.1.s8 %v94
  %v125 = vunpack.c.1.s8 %v95
  %v126 = vunpack.c.2.s8 %v94
  %v127 = vunpack.c.2.s8 %v95
  %v128 = vunpack.c.3.s8 %v94
  %v129 = vunpack.c.3.s8 %v95
  %v130 = vunpack.c.0.s8 %v96
  %v131 = vunpack.c.0.s8 %v97
  %v132 = vunpack.c.1.s8 %v96
  %v133 = vunpack.c.1.s8 %v97
  %v134 = vunpack.c.2.s8 %v96
  %v135 = vunpack.c.2.s8 %v97
  %v136 = vunpack.c.3.s8 %v96
  %v137 = vunpack.c.3.s8 %v97
  %v138 = vunpack.c.0.s8 %v98
  %v139 = vunpack.c.0.s8 %v99
  %v140 = vunpack.c.1.s8 %v98
  %v141 = vunpack.c.1.s8 %v99
  %v142 = vunpack.c.2.s8 %v98
  %v143 = vunpack.c.2.s8 %v99
  %v144 = vunpack.c.3.s8 %v98
  %v145 = vunpack.c.3.s8 %v99
  %v146 = vunpack.c.0.s8 %v100
  %v147 = vunpack.c.0.s8 %v101
  %v148 = vunpack.c.1.s8 %v100
  %v149 = vunpack.c.1.s8 %v101
  %v150 = vunpack.c.2.s8 %v100
  %v151 = vunpack.c.2.s8 %v101
  %v152 = vunpack.c.3.s8 %v100
  %v153 = vunpack.c.3.s8 %v101
  %v154 = vunpack.c.0.s8 %v102
  %v155 = vunpack.c.0.s8 %v103
  %v156 = vunpack.c.1.s8 %v102
  %v157 = vunpack.c.1.s8 %v103
  %v158 = vunpack.c.2.s8 %v102
  %v159 = vunpack.c.2.s8 %v103
  %v160 = vunpack.c.3.s8 %v102
  %v161 = vunpack.c.3.s8 %v103
  %v162 = vunpack.c.0.s8 %v104
  %v163 = vunpack.c.0.s8 %v105
  %v164 = vunpack.c.1.s8 %v104
  %v165 = vunpack.c.1.s8 %v105
  %v166 = vunpack.c.2.s8 %v104
  %v167 = vunpack.c.2.s8 %v105
  %v168 = vunpack.c.3.s8 %v104
  %v169 = vunpack.c.3.s8 %v105
  %v170 = vcvt.s32.f32 %v106
  %v171 = vcvt.s32.f32 %v107
  %v172 = vcvt.s32.f32 %v108
  %v173 = vcvt.s32.f32 %v109
  %v174 = vcvt.s32.f32 %v110
  %v175 = vcvt.s32.f32 %v111
  %v176 = vcvt.s32.f32 %v112
  %v177 = vcvt.s32.f32 %v113
  %v178 = vcvt.s32.f32 %v114
  %v179 = vcvt.s32.f32 %v115
  %v180 = vcvt.s32.f32 %v116
  %v181 = vcvt.s32.f32 %v117
  %v182 = vcvt.s32.f32 %v118
  %v183 = vcvt.s32.f32 %v119
  %v184 = vcvt.s32.f32 %v120
  %v185 = vcvt.s32.f32 %v121
  %v186 = vcvt.s32.f32 %v122
  %v187 = vcvt.s32.f32 %v123
  %v188 = vcvt.s32.f32 %v124
  %v189 = vcvt.s32.f32 %v125
  %v190 = vcvt.s32.f32 %v126
  %v191 = vcvt.s32.f32 %v127
  %v192 = vcvt.s32.f32 %v128
  %v193 = vcvt.s32.f32 %v129
  %v194 = vcvt.s32.f32 %v130
  %v195 = vcvt.s32.f32 %v131
  %v196 = vcvt.s32.f32 %v132
  %v197 = vcvt.s32.f32 %v133
  %v198 = vcvt.s32.f32 %v134
  %v199 = vcvt.s32.f32 %v135
  %v200 = vcvt.s32.f32 %v136
  %v201 = vcvt.s32.f32 %v137
  %v202 = vcvt.s32.f32 %v138
  %v203 = vcvt.s32.f32 %v139
  %v204 = vcvt.s32.f32 %v140
  %v205 = vcvt.s32.f32 %v141
  %v206 = vcvt.s32.f32 %v142
  %v207 = vcvt.s32.f32 %v143
  %v208 = vcvt.s32.f32 %v144
  %v209 = vcvt.s32.f32 %v145
  %v210 = vcvt.s32.f32 %v146
  %v211 = vcvt.s32.f32 %v147
  %v212 = vcvt.s32.f32 %v148
  %v213 = vcvt.s32.f32 %v149
  %v214 = vcvt.s32.f32 %v150
  %v215 = vcvt.s32.f32 %v151
  %v216 = vcvt.s32.f32 %v152
  %v217 = vcvt.s32.f32 %v153
  %v218 = vcvt.s32.f32 %v154
  %v219 = vcvt.s32.f32 %v155
  %v220 = vcvt.s32.f32 %v156
  %v221 = vcvt.s32.f32 %v157
  %v222 = vcvt.s32.f32 %v158
  %v223 = vcvt.s32.f32 %v159
  %v224 = vcvt.s32.f32 %v160
  %v225 = vcvt.s32.f32 %v161
  %v226 = vcvt.s32.f32 %v162
  %v227 = vcvt.s32.f32 %v163
  %v228 = vcvt.s32.f32 %v164
  %v229 = vcvt.s32.f32 %v165
  %v230 = vcvt.s32.f32 %v166
  %v231 = vcvt.s32.f32 %v167
  %v232 = vcvt.s32.f32 %v168
  %v233 = vcvt.s32.f32 %v169
  %v234 = vld [vmem:[#allocation3] sm:$0xff]
  %v235 = vld [vmem:[#allocation3 + $0x8] sm:$0xff]
  %v236 = vld [vmem:[#allocation3 + $0x10] sm:$0xff]
  %v237 = vld [vmem:[#allocation3 + $0x18] sm:$0xff]
  %v238 = vld [vmem:[#allocation3 + $0x20] sm:$0xff]
  %v239 = vld [vmem:[#allocation3 + $0x28] sm:$0xff]
  %v240 = vld [vmem:[#allocation3 + $0x30] sm:$0xff]
  %v241 = vld [vmem:[#allocation3 + $0x38] sm:$0xff]
  %v242 = vld [vmem:[#allocation3 + $0x40] sm:$0xff]
  %v243 = vld [vmem:[#allocation3 + $0x48] sm:$0xff]
  %v244 = vld [vmem:[#allocation3 + $0x50] sm:$0xff]
  %v245 = vld [vmem:[#allocation3 + $0x58] sm:$0xff]
  %v246 = vld [vmem:[#allocation3 + $0x60] sm:$0xff]
  %v247 = vld [vmem:[#allocation3 + $0x68] sm:$0xff]
  %v248 = vld [vmem:[#allocation3 + $0x70] sm:$0xff]
  %v249 = vld [vmem:[#allocation3 + $0x78] sm:$0xff]
  %v250 = vld [vmem:[#allocation3 + $0x80] sm:$0xff]
  %v251 = vld [vmem:[#allocation3 + $0x88] sm:$0xff]
  %v252 = vld [vmem:[#allocation3 + $0x90] sm:$0xff]
  %v253 = vld [vmem:[#allocation3 + $0x98] sm:$0xff]
  %v254 = vld [vmem:[#allocation3 + $0xa0] sm:$0xff]
  %v255 = vld [vmem:[#allocation3 + $0xa8] sm:$0xff]
  %v256 = vld [vmem:[#allocation3 + $0xb0] sm:$0xff]
  %v257 = vld [vmem:[#allocation3 + $0xb8] sm:$0xff]
  %v258 = vld [vmem:[#allocation3 + $0xc0] sm:$0xff]
  %v259 = vld [vmem:[#allocation3 + $0xc8] sm:$0xff]
  %v260 = vld [vmem:[#allocation3 + $0xd0] sm:$0xff]
  %v261 = vld [vmem:[#allocation3 + $0xd8] sm:$0xff]
  %v262 = vld [vmem:[#allocation3 + $0xe0] sm:$0xff]
  %v263 = vld [vmem:[#allocation3 + $0xe8] sm:$0xff]
  %v264 = vld [vmem:[#allocation3 + $0xf0] sm:$0xff]
  %v265 = vld [vmem:[#allocation3 + $0xf8] sm:$0xff]
  %v266 = vadd.f32 %v170, %v171
  %267 = vadd.xlane.f32.xlu0 %v266
  %v268 = vpop.xlane.xlu0 %267
  %v269 = vadd.f32 %v172, %v173
  %270 = vadd.xlane.f32.xlu0 %v269
  %v271 = vpop.xlane.xlu0 %270
  %v272 = vadd.f32 %v174, %v175
  %273 = vadd.xlane.f32.xlu0 %v272
  %v274 = vpop.xlane.xlu0 %273
  %v275 = vadd.f32 %v176, %v177
  %276 = vadd.xlane.f32.xlu0 %v275
  %v277 = vpop.xlane.xlu0 %276
  %v278 = vadd.f32 %v178, %v179
  %279 = vadd.xlane.f32.xlu0 %v278
  %v280 = vpop.xlane.xlu0 %279
  %v281 = vadd.f32 %v180, %v181
  %282 = vadd.xlane.f32.xlu0 %v281
  %v283 = vpop.xlane.xlu0 %282
  %v284 = vadd.f32 %v182, %v183
  %285 = vadd.xlane.f32.xlu0 %v284
  %v286 = vpop.xlane.xlu0 %285
  %v287 = vadd.f32 %v184, %v185
  %288 = vadd.xlane.f32.xlu0 %v287
  %v289 = vpop.xlane.xlu0 %288
  %v290 = vadd.f32 %v186, %v187
  %291 = vadd.xlane.f32.xlu0 %v290
  %v292 = vpop.xlane.xlu0 %291
  %v293 = vadd.f32 %v188, %v189
  %294 = vadd.xlane.f32.xlu0 %v293
  %v295 = vpop.xlane.xlu0 %294
  %v296 = vadd.f32 %v190, %v191
  %297 = vadd.xlane.f32.xlu0 %v296
  %v298 = vpop.xlane.xlu0 %297
  %v299 = vadd.f32 %v192, %v193
  %300 = vadd.xlane.f32.xlu0 %v299
  %v301 = vpop.xlane.xlu0 %300
  %v302 = vadd.f32 %v194, %v195
  %303 = vadd.xlane.f32.xlu0 %v302
  %v304 = vpop.xlane.xlu0 %303
  %v305 = vadd.f32 %v196, %v197
  %306 = vadd.xlane.f32.xlu0 %v305
  %v307 = vpop.xlane.xlu0 %306
  %v308 = vadd.f32 %v198, %v199
  %309 = vadd.xlane.f32.xlu0 %v308
  %v310 = vpop.xlane.xlu0 %309
  %v311 = vadd.f32 %v200, %v201
  %312 = vadd.xlane.f32.xlu0 %v311
  %v313 = vpop.xlane.xlu0 %312
  %v314 = vadd.f32 %v202, %v203
  %315 = vadd.xlane.f32.xlu0 %v314
  %v316 = vpop.xlane.xlu0 %315
  %v317 = vadd.f32 %v204, %v205
  %318 = vadd.xlane.f32.xlu0 %v317
  %v319 = vpop.xlane.xlu0 %318
  %v320 = vadd.f32 %v206, %v207
  %321 = vadd.xlane.f32.xlu0 %v320
  %v322 = vpop.xlane.xlu0 %321
  %v323 = vadd.f32 %v208, %v209
  %324 = vadd.xlane.f32.xlu0 %v323
  %v325 = vpop.xlane.xlu0 %324
  %v326 = vadd.f32 %v210, %v211
  %327 = vadd.xlane.f32.xlu0 %v326
  %v328 = vpop.xlane.xlu0 %327
  %v329 = vadd.f32 %v212, %v213
  %330 = vadd.xlane.f32.xlu0 %v329
  %v331 = vpop.xlane.xlu0 %330
  %v332 = vadd.f32 %v214, %v215
  %333 = vadd.xlane.f32.xlu0 %v332
  %v334 = vpop.xlane.xlu0 %333
  %v335 = vadd.f32 %v216, %v217
  %336 = vadd.xlane.f32.xlu0 %v335
  %v337 = vpop.xlane.xlu0 %336
  %v338 = vadd.f32 %v218, %v219
  %339 = vadd.xlane.f32.xlu0 %v338
  %v340 = vpop.xlane.xlu0 %339
  %v341 = vadd.f32 %v220, %v221
  %342 = vadd.xlane.f32.xlu0 %v341
  %v343 = vpop.xlane.xlu0 %342
  %v344 = vadd.f32 %v222, %v223
  %345 = vadd.xlane.f32.xlu0 %v344
  %v346 = vpop.xlane.xlu0 %345
  %v347 = vadd.f32 %v224, %v225
  %348 = vadd.xlane.f32.xlu0 %v347
  %v349 = vpop.xlane.xlu0 %348
  %v350 = vadd.f32 %v226, %v227
  %351 = vadd.xlane.f32.xlu0 %v350
  %v352 = vpop.xlane.xlu0 %351
  %v353 = vadd.f32 %v228, %v229
  %354 = vadd.xlane.f32.xlu0 %v353
  %v355 = vpop.xlane.xlu0 %354
  %v356 = vadd.f32 %v230, %v231
  %357 = vadd.xlane.f32.xlu0 %v356
  %v358 = vpop.xlane.xlu0 %357
  %v359 = vadd.f32 %v232, %v233
  %360 = vadd.xlane.f32.xlu0 %v359
  %v361 = vpop.xlane.xlu0 %360
  %v362 = vadd.f32 %v234, %v268
  %v363 = vadd.f32 %v235, %v271
  %v364 = vadd.f32 %v236, %v274
  %v365 = vadd.f32 %v237, %v277
  %v366 = vadd.f32 %v238, %v280
  %v367 = vadd.f32 %v239, %v283
  %v368 = vadd.f32 %v240, %v286
  %v369 = vadd.f32 %v241, %v289
  %v370 = vadd.f32 %v242, %v292
  %v371 = vadd.f32 %v243, %v295
  %v372 = vadd.f32 %v244, %v298
  %v373 = vadd.f32 %v245, %v301
  %v374 = vadd.f32 %v246, %v304
  %v375 = vadd.f32 %v247, %v307
  %v376 = vadd.f32 %v248, %v310
  %v377 = vadd.f32 %v249, %v313
  %v378 = vadd.f32 %v250, %v316
  %v379 = vadd.f32 %v251, %v319
  %v380 = vadd.f32 %v252, %v322
  %v381 = vadd.f32 %v253, %v325
  %v382 = vadd.f32 %v254, %v328
  %v383 = vadd.f32 %v255, %v331
  %v384 = vadd.f32 %v256, %v334
  %v385 = vadd.f32 %v257, %v337
  %v386 = vadd.f32 %v258, %v340
  %v387 = vadd.f32 %v259, %v343
  %v388 = vadd.f32 %v260, %v346
  %v389 = vadd.f32 %v261, %v349
  %v390 = vadd.f32 %v262, %v352
  %v391 = vadd.f32 %v263, %v355
  %v392 = vadd.f32 %v264, %v358
  %v393 = vadd.f32 %v265, %v361
  %vm394 = vcmask 7168
  %395 = vst.msk [vmem:[#allocation3] sm:$0xff] %vm394, %v362
  %396 = vst.msk [vmem:[#allocation3 + $0x8] sm:$0xff] %vm394, %v363
  %397 = vst.msk [vmem:[#allocation3 + $0x10] sm:$0xff] %vm394, %v364
  %398 = vst.msk [vmem:[#allocation3 + $0x18] sm:$0xff] %vm394, %v365
  %399 = vst.msk [vmem:[#allocation3 + $0x20] sm:$0xff] %vm394, %v366
  %400 = vst.msk [vmem:[#allocation3 + $0x28] sm:$0xff] %vm394, %v367
  %401 = vst.msk [vmem:[#allocation3 + $0x30] sm:$0xff] %vm394, %v368
  %402 = vst.msk [vmem:[#allocation3 + $0x38] sm:$0xff] %vm394, %v369
  %403 = vst.msk [vmem:[#allocation3 + $0x40] sm:$0xff] %vm394, %v370
  %404 = vst.msk [vmem:[#allocation3 + $0x48] sm:$0xff] %vm394, %v371
  %405 = vst.msk [vmem:[#allocation3 + $0x50] sm:$0xff] %vm394, %v372
  %406 = vst.msk [vmem:[#allocation3 + $0x58] sm:$0xff] %vm394, %v373
  %407 = vst.msk [vmem:[#allocation3 + $0x60] sm:$0xff] %vm394, %v374
  %408 = vst.msk [vmem:[#allocation3 + $0x68] sm:$0xff] %vm394, %v375
  %409 = vst.msk [vmem:[#allocation3 + $0x70] sm:$0xff] %vm394, %v376
  %410 = vst.msk [vmem:[#allocation3 + $0x78] sm:$0xff] %vm394, %v377
  %411 = vst.msk [vmem:[#allocation3 + $0x80] sm:$0xff] %vm394, %v378
  %412 = vst.msk [vmem:[#allocation3 + $0x88] sm:$0xff] %vm394, %v379
  %413 = vst.msk [vmem:[#allocation3 + $0x90] sm:$0xff] %vm394, %v380
  %414 = vst.msk [vmem:[#allocation3 + $0x98] sm:$0xff] %vm394, %v381
  %415 = vst.msk [vmem:[#allocation3 + $0xa0] sm:$0xff] %vm394, %v382
  %416 = vst.msk [vmem:[#allocation3 + $0xa8] sm:$0xff] %vm394, %v383
  %417 = vst.msk [vmem:[#allocation3 + $0xb0] sm:$0xff] %vm394, %v384
  %418 = vst.msk [vmem:[#allocation3 + $0xb8] sm:$0xff] %vm394, %v385
  %419 = vst.msk [vmem:[#allocation3 + $0xc0] sm:$0xff] %vm394, %v386
  %420 = vst.msk [vmem:[#allocation3 + $0xc8] sm:$0xff] %vm394, %v387
  %421 = vst.msk [vmem:[#allocation3 + $0xd0] sm:$0xff] %vm394, %v388
  %422 = vst.msk [vmem:[#allocation3 + $0xd8] sm:$0xff] %vm394, %v389
  %423 = vst.msk [vmem:[#allocation3 + $0xe0] sm:$0xff] %vm394, %v390
  %424 = vst.msk [vmem:[#allocation3 + $0xe8] sm:$0xff] %vm394, %v391
  %425 = vst.msk [vmem:[#allocation3 + $0xf0] sm:$0xff] %vm394, %v392
  %426 = vst.msk [vmem:[#allocation3 + $0xf8] sm:$0xff] %vm394, %v393
  %v427 = vld [vmem:[#allocation2] sm:$0xff]
  %v428 = vld [vmem:[#allocation2 + $0x8] sm:$0xff]
  %v429 = vld [vmem:[#allocation2 + $0x10] sm:$0xff]
  %v430 = vld [vmem:[#allocation2 + $0x18] sm:$0xff]
  %v431 = vld [vmem:[#allocation2 + $0x20] sm:$0xff]
  %v432 = vld [vmem:[#allocation2 + $0x28] sm:$0xff]
  %v433 = vld [vmem:[#allocation2 + $0x30] sm:$0xff]
  %v434 = vld [vmem:[#allocation2 + $0x38] sm:$0xff]
  %v435 = vld [vmem:[#allocation2 + $0x40] sm:$0xff]
  %v436 = vld [vmem:[#allocation2 + $0x48] sm:$0xff]
  %v437 = vld [vmem:[#allocation2 + $0x50] sm:$0xff]
  %v438 = vld [vmem:[#allocation2 + $0x58] sm:$0xff]
  %v439 = vld [vmem:[#allocation2 + $0x60] sm:$0xff]
  %v440 = vld [vmem:[#allocation2 + $0x68] sm:$0xff]
  %v441 = vld [vmem:[#allocation2 + $0x70] sm:$0xff]
  %v442 = vld [vmem:[#allocation2 + $0x78] sm:$0xff]
  %v443 = vld [vmem:[#allocation2 + $0x80] sm:$0xff]
  %v444 = vld [vmem:[#allocation2 + $0x88] sm:$0xff]
  %v445 = vld [vmem:[#allocation2 + $0x90] sm:$0xff]
  %v446 = vld [vmem:[#allocation2 + $0x98] sm:$0xff]
  %v447 = vld [vmem:[#allocation2 + $0xa0] sm:$0xff]
  %v448 = vld [vmem:[#allocation2 + $0xa8] sm:$0xff]
  %v449 = vld [vmem:[#allocation2 + $0xb0] sm:$0xff]
  %v450 = vld [vmem:[#allocation2 + $0xb8] sm:$0xff]
  %v451 = vld [vmem:[#allocation2 + $0xc0] sm:$0xff]
  %v452 = vld [vmem:[#allocation2 + $0xc8] sm:$0xff]
  %v453 = vld [vmem:[#allocation2 + $0xd0] sm:$0xff]
  %v454 = vld [vmem:[#allocation2 + $0xd8] sm:$0xff]
  %v455 = vld [vmem:[#allocation2 + $0xe0] sm:$0xff]
  %v456 = vld [vmem:[#allocation2 + $0xe8] sm:$0xff]
  %v457 = vld [vmem:[#allocation2 + $0xf0] sm:$0xff]
  %v458 = vld [vmem:[#allocation2 + $0xf8] sm:$0xff]
  %v459 = vunpack.c.l.s8.bf16 %v90
  %v460 = vunpack.c.l.s8.bf16 %v91
  %v461 = vunpack.c.h.s8.bf16 %v90
  %v462 = vunpack.c.h.s8.bf16 %v91
  %v463 = vunpack.c.l.s8.bf16 %v92
  %v464 = vunpack.c.l.s8.bf16 %v93
  %v465 = vunpack.c.h.s8.bf16 %v92
  %v466 = vunpack.c.h.s8.bf16 %v93
  %v467 = vunpack.c.l.s8.bf16 %v94
  %v468 = vunpack.c.l.s8.bf16 %v95
  %v469 = vunpack.c.h.s8.bf16 %v94
  %v470 = vunpack.c.h.s8.bf16 %v95
  %v471 = vunpack.c.l.s8.bf16 %v96
  %v472 = vunpack.c.l.s8.bf16 %v97
  %v473 = vunpack.c.h.s8.bf16 %v96
  %v474 = vunpack.c.h.s8.bf16 %v97
  %v475 = vunpack.c.l.s8.bf16 %v98
  %v476 = vunpack.c.l.s8.bf16 %v99
  %v477 = vunpack.c.h.s8.bf16 %v98
  %v478 = vunpack.c.h.s8.bf16 %v99
  %v479 = vunpack.c.l.s8.bf16 %v100
  %v480 = vunpack.c.l.s8.bf16 %v101
  %v481 = vunpack.c.h.s8.bf16 %v100
  %v482 = vunpack.c.h.s8.bf16 %v101
  %v483 = vunpack.c.l.s8.bf16 %v102
  %v484 = vunpack.c.l.s8.bf16 %v103
  %v485 = vunpack.c.h.s8.bf16 %v102
  %v486 = vunpack.c.h.s8.bf16 %v103
  %v487 = vunpack.c.l.s8.bf16 %v104
  %v488 = vunpack.c.l.s8.bf16 %v105
  %v489 = vunpack.c.h.s8.bf16 %v104
  %v490 = vunpack.c.h.s8.bf16 %v105
  %v491 = vld [vmem:[%s1] sm:$0xf]
  %v492 = vld [vmem:[%s1 + $0x4] sm:$0xf]
  %v493 = vld [vmem:[%s1 + $0x8] sm:$0xf]
  %v494 = vld [vmem:[%s1 + $0xc] sm:$0xf]
  %v495 = vld [vmem:[%s1 + $0x10] sm:$0xf]
  %v496 = vld [vmem:[%s1 + $0x14] sm:$0xf]
  %v497 = vld [vmem:[%s1 + $0x18] sm:$0xf]
  %v498 = vld [vmem:[%s1 + $0x1c] sm:$0xf]
  %v499 = vld [vmem:[%s1 + $0x20] sm:$0xf]
  %v500 = vld [vmem:[%s1 + $0x24] sm:$0xf]
  %v501 = vld [vmem:[%s1 + $0x28] sm:$0xf]
  %v502 = vld [vmem:[%s1 + $0x2c] sm:$0xf]
  %v503 = vld [vmem:[%s1 + $0x30] sm:$0xf]
  %v504 = vld [vmem:[%s1 + $0x34] sm:$0xf]
  %v505 = vld [vmem:[%s1 + $0x38] sm:$0xf]
  %v506 = vld [vmem:[%s1 + $0x3c] sm:$0xf]
  %v507 = vld [vmem:[%s1 + $0x40] sm:$0xf]
  %v508 = vld [vmem:[%s1 + $0x44] sm:$0xf]
  %v509 = vld [vmem:[%s1 + $0x48] sm:$0xf]
  %v510 = vld [vmem:[%s1 + $0x4c] sm:$0xf]
  %v511 = vld [vmem:[%s1 + $0x50] sm:$0xf]
  %v512 = vld [vmem:[%s1 + $0x54] sm:$0xf]
  %v513 = vld [vmem:[%s1 + $0x58] sm:$0xf]
  %v514 = vld [vmem:[%s1 + $0x5c] sm:$0xf]
  %v515 = vld [vmem:[%s1 + $0x60] sm:$0xf]
  %v516 = vld [vmem:[%s1 + $0x64] sm:$0xf]
  %v517 = vld [vmem:[%s1 + $0x68] sm:$0xf]
  %v518 = vld [vmem:[%s1 + $0x6c] sm:$0xf]
  %v519 = vld [vmem:[%s1 + $0x70] sm:$0xf]
  %v520 = vld [vmem:[%s1 + $0x74] sm:$0xf]
  %v521 = vld [vmem:[%s1 + $0x78] sm:$0xf]
  %v522 = vld [vmem:[%s1 + $0x7c] sm:$0xf]
  %v555 = vunpack.c.l.b16 %v491
  %v556 = vunpack.c.l.b16 %v492
  %v557 = vunpack.c.l.b16 %v493
  %v558 = vunpack.c.l.b16 %v494
  %v559 = vunpack.c.l.b16 %v495
  %v560 = vunpack.c.l.b16 %v496
  %v561 = vunpack.c.l.b16 %v497
  %v562 = vunpack.c.l.b16 %v498
  %v563 = vunpack.c.l.b16 %v499
  %v564 = vunpack.c.l.b16 %v500
  %v565 = vunpack.c.l.b16 %v501
  %v566 = vunpack.c.l.b16 %v502
  %v567 = vunpack.c.l.b16 %v503
  %v568 = vunpack.c.l.b16 %v504
  %v569 = vunpack.c.l.b16 %v505
  %v570 = vunpack.c.l.b16 %v506
  %v571 = vunpack.c.l.b16 %v507
  %v572 = vunpack.c.l.b16 %v508
  %v573 = vunpack.c.l.b16 %v509
  %v574 = vunpack.c.l.b16 %v510
  %v575 = vunpack.c.l.b16 %v511
  %v576 = vunpack.c.l.b16 %v512
  %v577 = vunpack.c.l.b16 %v513
  %v578 = vunpack.c.l.b16 %v514
  %v579 = vunpack.c.l.b16 %v515
  %v580 = vunpack.c.l.b16 %v516
  %v581 = vunpack.c.l.b16 %v517
  %v582 = vunpack.c.l.b16 %v518
  %v583 = vunpack.c.l.b16 %v519
  %v584 = vunpack.c.l.b16 %v520
  %v585 = vunpack.c.l.b16 %v521
  %v586 = vunpack.c.l.b16 %v522
  %v587 = vpack.c.b16 %v556, %v555
  %v588 = vpack.c.b16 %v558, %v557
  %v589 = vpack.c.b16 %v560, %v559
  %v590 = vpack.c.b16 %v562, %v561
  %v591 = vpack.c.b16 %v564, %v563
  %v592 = vpack.c.b16 %v566, %v565
  %v593 = vpack.c.b16 %v568, %v567
  %v594 = vpack.c.b16 %v570, %v569
  %v595 = vpack.c.b16 %v572, %v571
  %v596 = vpack.c.b16 %v574, %v573
  %v597 = vpack.c.b16 %v576, %v575
  %v598 = vpack.c.b16 %v578, %v577
  %v599 = vpack.c.b16 %v580, %v579
  %v600 = vpack.c.b16 %v582, %v581
  %v601 = vpack.c.b16 %v584, %v583
  %v602 = vpack.c.b16 %v586, %v585
  %619 = vmatprep.subr.bf16.mxu0 0
  %620 = vmatpush1.bf16.msra.mxu0 %v587
  %621 = vmatprep.subr.bf16.mxu0 0
  %622 = vmatpush1.bf16.msra.mxu0 %v588
  %623 = vmatprep.subr.bf16.mxu0 0
  %624 = vmatpush1.bf16.msra.mxu0 %v589
  %625 = vmatprep.subr.bf16.mxu0 0
  %626 = vmatpush1.bf16.msra.mxu0 %v590
  %627 = vmatprep.subr.bf16.mxu0 0
  %628 = vmatpush1.bf16.msra.mxu0 %v591
  %629 = vmatprep.subr.bf16.mxu0 0
  %630 = vmatpush1.bf16.msra.mxu0 %v592
  %631 = vmatprep.subr.bf16.mxu0 0
  %632 = vmatpush1.bf16.msra.mxu0 %v593
  %633 = vmatprep.subr.bf16.mxu0 0
  %634 = vmatpush1.bf16.msra.mxu0 %v594
  %635 = vmatprep.subr.bf16.mxu0 0
  %636 = vmatpush1.bf16.msra.mxu0 %v595
  %637 = vmatprep.subr.bf16.mxu0 0
  %638 = vmatpush1.bf16.msra.mxu0 %v596
  %639 = vmatprep.subr.bf16.mxu0 0
  %640 = vmatpush1.bf16.msra.mxu0 %v597
  %641 = vmatprep.subr.bf16.mxu0 0
  %642 = vmatpush1.bf16.msra.mxu0 %v598
  %643 = vmatprep.subr.bf16.mxu0 0
  %644 = vmatpush1.bf16.msra.mxu0 %v599
  %645 = vmatprep.subr.bf16.mxu0 0
  %646 = vmatpush1.bf16.msra.mxu0 %v600
  %647 = vmatprep.subr.bf16.mxu0 0
  %648 = vmatpush1.bf16.msra.mxu0 %v601
  %649 = vmatprep.subr.bf16.mxu0 0
  %650 = vmatpush1.bf16.msra.mxu0 %v602
  %651 = vmatprep.mubr.bf16.mxu0 %v460
  %652 = vmatmul.mubr.bf16.gmra.mrb[0].mxu0 %v459
  %v653 = vpop.f32.mrb[0].mxu0
  %v654 = vadd.f32 0.0, %v653
  %v655 = vpop.f32.mrb[0].mxu0
  %v656 = vpop.f32.mrb[0].mxu0
  %v657 = vadd.f32 0.0, %v656
  %v658 = vpop.f32.mrb[0].mxu0
  %659 = vmatprep.mubr.bf16.mxu0 %v462
  %660 = vmatmul.mubr.bf16.gmra.mrb[0].mxu0 %v461
  %v661 = vpop.f32.mrb[0].mxu0
  %v662 = vadd.f32 0.0, %v661
  %v663 = vpop.f32.mrb[0].mxu0
  %v664 = vpop.f32.mrb[0].mxu0
  %v665 = vadd.f32 0.0, %v664
  %v666 = vpop.f32.mrb[0].mxu0
  %667 = vmatprep.mubr.bf16.mxu0 %v464
  %668 = vmatmul.mubr.bf16.gmra.mrb[0].mxu0 %v463
  %v669 = vpop.f32.mrb[0].mxu0
  %v670 = vadd.f32 0.0, %v669
  %v671 = vpop.f32.mrb[0].mxu0
  %v672 = vpop.f32.mrb[0].mxu0
  %v673 = vadd.f32 0.0, %v672
  %v674 = vpop.f32.mrb[0].mxu0
  %675 = vmatprep.mubr.bf16.mxu0 %v466
  %676 = vmatmul.mubr.bf16.gmra.mrb[0].mxu0 %v465
  %v677 = vpop.f32.mrb[0].mxu0
  %v678 = vadd.f32 0.0, %v677
  %v679 = vpop.f32.mrb[0].mxu0
  %v680 = vpop.f32.mrb[0].mxu0
  %v681 = vadd.f32 0.0, %v680
  %v682 = vpop.f32.mrb[0].mxu0
  %683 = vmatprep.mubr.bf16.mxu0 %v468
  %684 = vmatmul.mubr.bf16.gmra.mrb[0].mxu0 %v467
  %v685 = vpop.f32.mrb[0].mxu0
  %v686 = vadd.f32 0.0, %v685
  %v687 = vpop.f32.mrb[0].mxu0
  %v688 = vpop.f32.mrb[0].mxu0
  %v689 = vadd.f32 0.0, %v688
  %v690 = vpop.f32.mrb[0].mxu0
  %691 = vmatprep.mubr.bf16.mxu0 %v470
  %692 = vmatmul.mubr.bf16.gmra.mrb[0].mxu0 %v469
  %v693 = vpop.f32.mrb[0].mxu0
  %v694 = vadd.f32 0.0, %v693
  %v695 = vpop.f32.mrb[0].mxu0
  %v696 = vpop.f32.mrb[0].mxu0
  %v697 = vadd.f32 0.0, %v696
  %v698 = vpop.f32.mrb[0].mxu0
  %699 = vmatprep.mubr.bf16.mxu0 %v472
  %700 = vmatmul.mubr.bf16.gmra.mrb[0].mxu0 %v471
  %v701 = vpop.f32.mrb[0].mxu0
  %v702 = vadd.f32 0.0, %v701
  %v703 = vpop.f32.mrb[0].mxu0
  %v704 = vpop.f32.mrb[0].mxu0
  %v705 = vadd.f32 0.0, %v704
  %v706 = vpop.f32.mrb[0].mxu0
  %707 = vmatprep.mubr.bf16.mxu0 %v474
  %708 = vmatmul.mubr.bf16.gmra.mrb[0].mxu0 %v473
  %v709 = vpop.f32.mrb[0].mxu0
  %v710 = vadd.f32 0.0, %v709
  %v711 = vpop.f32.mrb[0].mxu0
  %v712 = vpop.f32.mrb[0].mxu0
  %v713 = vadd.f32 0.0, %v712
  %v714 = vpop.f32.mrb[0].mxu0
  %715 = vmatprep.mubr.bf16.mxu0 %v476
  %716 = vmatmul.mubr.bf16.gmra.mrb[0].mxu0 %v475
  %v717 = vpop.f32.mrb[0].mxu0
  %v718 = vadd.f32 0.0, %v717
  %v719 = vpop.f32.mrb[0].mxu0
  %v720 = vpop.f32.mrb[0].mxu0
  %v721 = vadd.f32 0.0, %v720
  %v722 = vpop.f32.mrb[0].mxu0
  %723 = vmatprep.mubr.bf16.mxu0 %v478
  %724 = vmatmul.mubr.bf16.gmra.mrb[0].mxu0 %v477
  %v725 = vpop.f32.mrb[0].mxu0
  %v726 = vadd.f32 0.0, %v725
  %v727 = vpop.f32.mrb[0].mxu0
  %v728 = vpop.f32.mrb[0].mxu0
  %v729 = vadd.f32 0.0, %v728
  %v730 = vpop.f32.mrb[0].mxu0
  %731 = vmatprep.mubr.bf16.mxu0 %v480
  %732 = vmatmul.mubr.bf16.gmra.mrb[0].mxu0 %v479
  %v733 = vpop.f32.mrb[0].mxu0
  %v734 = vadd.f32 0.0, %v733
  %v735 = vpop.f32.mrb[0].mxu0
  %v736 = vpop.f32.mrb[0].mxu0
  %v737 = vadd.f32 0.0, %v736
  %v738 = vpop.f32.mrb[0].mxu0
  %739 = vmatprep.mubr.bf16.mxu0 %v482
  %740 = vmatmul.mubr.bf16.gmra.mrb[0].mxu0 %v481
  %v741 = vpop.f32.mrb[0].mxu0
  %v742 = vadd.f32 0.0, %v741
  %v743 = vpop.f32.mrb[0].mxu0
  %v744 = vpop.f32.mrb[0].mxu0
  %v745 = vadd.f32 0.0, %v744
  %v746 = vpop.f32.mrb[0].mxu0
  %747 = vmatprep.mubr.bf16.mxu0 %v484
  %748 = vmatmul.mubr.bf16.gmra.mrb[0].mxu0 %v483
  %v749 = vpop.f32.mrb[0].mxu0
  %v750 = vadd.f32 0.0, %v749
  %v751 = vpop.f32.mrb[0].mxu0
  %v752 = vpop.f32.mrb[0].mxu0
  %v753 = vadd.f32 0.0, %v752
  %v754 = vpop.f32.mrb[0].mxu0
  %755 = vmatprep.mubr.bf16.mxu0 %v486
  %756 = vmatmul.mubr.bf16.gmra.mrb[0].mxu0 %v485
  %v757 = vpop.f32.mrb[0].mxu0
  %v758 = vadd.f32 0.0, %v757
  %v759 = vpop.f32.mrb[0].mxu0
  %v760 = vpop.f32.mrb[0].mxu0
  %v761 = vadd.f32 0.0, %v760
  %v762 = vpop.f32.mrb[0].mxu0
  %763 = vmatprep.mubr.bf16.mxu0 %v488
  %764 = vmatmul.mubr.bf16.gmra.mrb[0].mxu0 %v487
  %v765 = vpop.f32.mrb[0].mxu0
  %v766 = vadd.f32 0.0, %v765
  %v767 = vpop.f32.mrb[0].mxu0
  %v768 = vpop.f32.mrb[0].mxu0
  %v769 = vadd.f32 0.0, %v768
  %v770 = vpop.f32.mrb[0].mxu0
  %771 = vmatprep.mubr.bf16.mxu0 %v490
  %772 = vmatmul.mubr.bf16.gmra.mrb[0].mxu0 %v489
  %v773 = vpop.f32.mrb[0].mxu0
  %v774 = vadd.f32 0.0, %v773
  %v775 = vpop.f32.mrb[0].mxu0
  %v776 = vpop.f32.mrb[0].mxu0
  %v777 = vadd.f32 0.0, %v776
  %v778 = vpop.f32.mrb[0].mxu0
  %779 = vdwg.mxu0
  %v780 = vadd.f32 %v427, %v654
  %v781 = vadd.f32 %v428, %v657
  %v782 = vadd.f32 %v429, %v662
  %v783 = vadd.f32 %v430, %v665
  %v784 = vadd.f32 %v431, %v670
  %v785 = vadd.f32 %v432, %v673
  %v786 = vadd.f32 %v433, %v678
  %v787 = vadd.f32 %v434, %v681
  %v788 = vadd.f32 %v435, %v686
  %v789 = vadd.f32 %v436, %v689
  %v790 = vadd.f32 %v437, %v694
  %v791 = vadd.f32 %v438, %v697
  %v792 = vadd.f32 %v439, %v702
  %v793 = vadd.f32 %v440, %v705
  %v794 = vadd.f32 %v441, %v710
  %v795 = vadd.f32 %v442, %v713
  %v796 = vadd.f32 %v443, %v718
  %v797 = vadd.f32 %v444, %v721
  %v798 = vadd.f32 %v445, %v726
  %v799 = vadd.f32 %v446, %v729
  %v800 = vadd.f32 %v447, %v734
  %v801 = vadd.f32 %v448, %v737
  %v802 = vadd.f32 %v449, %v742
  %v803 = vadd.f32 %v450, %v745
  %v804 = vadd.f32 %v451, %v750
  %v805 = vadd.f32 %v452, %v753
  %v806 = vadd.f32 %v453, %v758
  %v807 = vadd.f32 %v454, %v761
  %v808 = vadd.f32 %v455, %v766
  %v809 = vadd.f32 %v456, %v769
  %v810 = vadd.f32 %v457, %v774
  %v811 = vadd.f32 %v458, %v777
  %812 = vst [vmem:[#allocation2] sm:$0xff] %v780
  %813 = vst [vmem:[#allocation2 + $0x8] sm:$0xff] %v781
  %814 = vst [vmem:[#allocation2 + $0x10] sm:$0xff] %v782
  %815 = vst [vmem:[#allocation2 + $0x18] sm:$0xff] %v783
  %816 = vst [vmem:[#allocation2 + $0x20] sm:$0xff] %v784
  %817 = vst [vmem:[#allocation2 + $0x28] sm:$0xff] %v785
  %818 = vst [vmem:[#allocation2 + $0x30] sm:$0xff] %v786
  %819 = vst [vmem:[#allocation2 + $0x38] sm:$0xff] %v787
  %820 = vst [vmem:[#allocation2 + $0x40] sm:$0xff] %v788
  %821 = vst [vmem:[#allocation2 + $0x48] sm:$0xff] %v789
  %822 = vst [vmem:[#allocation2 + $0x50] sm:$0xff] %v790
  %823 = vst [vmem:[#allocation2 + $0x58] sm:$0xff] %v791
  %824 = vst [vmem:[#allocation2 + $0x60] sm:$0xff] %v792
  %825 = vst [vmem:[#allocation2 + $0x68] sm:$0xff] %v793
  %826 = vst [vmem:[#allocation2 + $0x70] sm:$0xff] %v794
  %827 = vst [vmem:[#allocation2 + $0x78] sm:$0xff] %v795
  %828 = vst [vmem:[#allocation2 + $0x80] sm:$0xff] %v796
  %829 = vst [vmem:[#allocation2 + $0x88] sm:$0xff] %v797
  %830 = vst [vmem:[#allocation2 + $0x90] sm:$0xff] %v798
  %831 = vst [vmem:[#allocation2 + $0x98] sm:$0xff] %v799
  %832 = vst [vmem:[#allocation2 + $0xa0] sm:$0xff] %v800
  %833 = vst [vmem:[#allocation2 + $0xa8] sm:$0xff] %v801
  %834 = vst [vmem:[#allocation2 + $0xb0] sm:$0xff] %v802
  %835 = vst [vmem:[#allocation2 + $0xb8] sm:$0xff] %v803
  %836 = vst [vmem:[#allocation2 + $0xc0] sm:$0xff] %v804
  %837 = vst [vmem:[#allocation2 + $0xc8] sm:$0xff] %v805
  %838 = vst [vmem:[#allocation2 + $0xd0] sm:$0xff] %v806
  %839 = vst [vmem:[#allocation2 + $0xd8] sm:$0xff] %v807
  %840 = vst [vmem:[#allocation2 + $0xe0] sm:$0xff] %v808
  %841 = vst [vmem:[#allocation2 + $0xe8] sm:$0xff] %v809
  %842 = vst [vmem:[#allocation2 + $0xf0] sm:$0xff] %v810
  %843 = vst [vmem:[#allocation2 + $0xf8] sm:$0xff] %v811
  // Predicated region
  $region26: #{sage_forward.2} parent=0 // pred_check
    %p844 = pneg %p21
  $region27: #{sage_forward.2} parent=0 // pred_check_branch
    %846 = sbr.rel (%p844) target = $region29
  $region28: #{sage_forward.2} parent=0 // pred_region
    %v847 = vld [vmem:[#allocation3] sm:$0xff]
    %v848 = vld [vmem:[#allocation3 + $0x8] sm:$0xff]
    %v849 = vld [vmem:[#allocation3 + $0x10] sm:$0xff]
    %v850 = vld [vmem:[#allocation3 + $0x18] sm:$0xff]
    %v851 = vld [vmem:[#allocation3 + $0x20] sm:$0xff]
    %v852 = vld [vmem:[#allocation3 + $0x28] sm:$0xff]
    %v853 = vld [vmem:[#allocation3 + $0x30] sm:$0xff]
    %v854 = vld [vmem:[#allocation3 + $0x38] sm:$0xff]
    %v855 = vld [vmem:[#allocation3 + $0x40] sm:$0xff]
    %v856 = vld [vmem:[#allocation3 + $0x48] sm:$0xff]
    %v857 = vld [vmem:[#allocation3 + $0x50] sm:$0xff]
    %v858 = vld [vmem:[#allocation3 + $0x58] sm:$0xff]
    %v859 = vld [vmem:[#allocation3 + $0x60] sm:$0xff]
    %v860 = vld [vmem:[#allocation3 + $0x68] sm:$0xff]
    %v861 = vld [vmem:[#allocation3 + $0x70] sm:$0xff]
    %v862 = vld [vmem:[#allocation3 + $0x78] sm:$0xff]
    %v863 = vld [vmem:[#allocation3 + $0x80] sm:$0xff]
    %v864 = vld [vmem:[#allocation3 + $0x88] sm:$0xff]
    %v865 = vld [vmem:[#allocation3 + $0x90] sm:$0xff]
    %v866 = vld [vmem:[#allocation3 + $0x98] sm:$0xff]
    %v867 = vld [vmem:[#allocation3 + $0xa0] sm:$0xff]
    %v868 = vld [vmem:[#allocation3 + $0xa8] sm:$0xff]
    %v869 = vld [vmem:[#allocation3 + $0xb0] sm:$0xff]
    %v870 = vld [vmem:[#allocation3 + $0xb8] sm:$0xff]
    %v871 = vld [vmem:[#allocation3 + $0xc0] sm:$0xff]
    %v872 = vld [vmem:[#allocation3 + $0xc8] sm:$0xff]
    %v873 = vld [vmem:[#allocation3 + $0xd0] sm:$0xff]
    %v874 = vld [vmem:[#allocation3 + $0xd8] sm:$0xff]
    %v875 = vld [vmem:[#allocation3 + $0xe0] sm:$0xff]
    %v876 = vld [vmem:[#allocation3 + $0xe8] sm:$0xff]
    %v877 = vld [vmem:[#allocation3 + $0xf0] sm:$0xff]
    %v878 = vld [vmem:[#allocation3 + $0xf8] sm:$0xff]
    %v879 = vmax.f32 %v847, 1.0
    %v880 = vmax.f32 %v848, 1.0
    %v881 = vmax.f32 %v849, 1.0
    %v882 = vmax.f32 %v850, 1.0
    %v883 = vmax.f32 %v851, 1.0
    %v884 = vmax.f32 %v852, 1.0
    %v885 = vmax.f32 %v853, 1.0
    %v886 = vmax.f32 %v854, 1.0
    %v887 = vmax.f32 %v855, 1.0
    %v888 = vmax.f32 %v856, 1.0
    %v889 = vmax.f32 %v857, 1.0
    %v890 = vmax.f32 %v858, 1.0
    %v891 = vmax.f32 %v859, 1.0
    %v892 = vmax.f32 %v860, 1.0
    %v893 = vmax.f32 %v861, 1.0
    %v894 = vmax.f32 %v862, 1.0
    %v895 = vmax.f32 %v863, 1.0
    %v896 = vmax.f32 %v864, 1.0
    %v897 = vmax.f32 %v865, 1.0
    %v898 = vmax.f32 %v866, 1.0
    %v899 = vmax.f32 %v867, 1.0
    %v900 = vmax.f32 %v868, 1.0
    %v901 = vmax.f32 %v869, 1.0
    %v902 = vmax.f32 %v870, 1.0
    %v903 = vmax.f32 %v871, 1.0
    %v904 = vmax.f32 %v872, 1.0
    %v905 = vmax.f32 %v873, 1.0
    %v906 = vmax.f32 %v874, 1.0
    %v907 = vmax.f32 %v875, 1.0
    %v908 = vmax.f32 %v876, 1.0
    %v909 = vmax.f32 %v877, 1.0
    %v910 = vmax.f32 %v878, 1.0
    %v911 = vrcp.pop %v879
    %v912 = vmul.f32 1.0, %v911
    %v913 = vrcp.pop %v880
    %v914 = vmul.f32 1.0, %v913
    %v915 = vrcp.pop %v881
    %v916 = vmul.f32 1.0, %v915
    %v917 = vrcp.pop %v882
    %v918 = vmul.f32 1.0, %v917
    %v919 = vrcp.pop %v883
    %v920 = vmul.f32 1.0, %v919
    %v921 = vrcp.pop %v884
    %v922 = vmul.f32 1.0, %v921
    %v923 = vrcp.pop %v885
    %v924 = vmul.f32 1.0, %v923
    %v925 = vrcp.pop %v886
    %v926 = vmul.f32 1.0, %v925
    %v927 = vrcp.pop %v887
    %v928 = vmul.f32 1.0, %v927
    %v929 = vrcp.pop %v888
    %v930 = vmul.f32 1.0, %v929
    %v931 = vrcp.pop %v889
    %v932 = vmul.f32 1.0, %v931
    %v933 = vrcp.pop %v890
    %v934 = vmul.f32 1.0, %v933
    %v935 = vrcp.pop %v891
    %v936 = vmul.f32 1.0, %v935
    %v937 = vrcp.pop %v892
    %v938 = vmul.f32 1.0, %v937
    %v939 = vrcp.pop %v893
    %v940 = vmul.f32 1.0, %v939
    %v941 = vrcp.pop %v894
    %v942 = vmul.f32 1.0, %v941
    %v943 = vrcp.pop %v895
    %v944 = vmul.f32 1.0, %v943
    %v945 = vrcp.pop %v896
    %v946 = vmul.f32 1.0, %v945
    %v947 = vrcp.pop %v897
    %v948 = vmul.f32 1.0, %v947
    %v949 = vrcp.pop %v898
    %v950 = vmul.f32 1.0, %v949
    %v951 = vrcp.pop %v899
    %v952 = vmul.f32 1.0, %v951
    %v953 = vrcp.pop %v900
    %v954 = vmul.f32 1.0, %v953
    %v955 = vrcp.pop %v901
    %v956 = vmul.f32 1.0, %v955
    %v957 = vrcp.pop %v902
    %v958 = vmul.f32 1.0, %v957
    %v959 = vrcp.pop %v903
    %v960 = vmul.f32 1.0, %v959
    %v961 = vrcp.pop %v904
    %v962 = vmul.f32 1.0, %v961
    %v963 = vrcp.pop %v905
    %v964 = vmul.f32 1.0, %v963
    %v965 = vrcp.pop %v906
    %v966 = vmul.f32 1.0, %v965
    %v967 = vrcp.pop %v907
    %v968 = vmul.f32 1.0, %v967
    %v969 = vrcp.pop %v908
    %v970 = vmul.f32 1.0, %v969
    %v971 = vrcp.pop %v909
    %v972 = vmul.f32 1.0, %v971
    %v973 = vrcp.pop %v910
    %v974 = vmul.f32 1.0, %v973
    %v975 = vld [vmem:[%s2] sm:$0xf]
    %v976 = vld [vmem:[%s2 + $0x4] sm:$0xf]
    %v977 = vld [vmem:[%s2 + $0x8] sm:$0xf]
    %v978 = vld [vmem:[%s2 + $0xc] sm:$0xf]
    %v979 = vld [vmem:[%s2 + $0x10] sm:$0xf]
    %v980 = vld [vmem:[%s2 + $0x14] sm:$0xf]
    %v981 = vld [vmem:[%s2 + $0x18] sm:$0xf]
    %v982 = vld [vmem:[%s2 + $0x1c] sm:$0xf]
    %v983 = vld [vmem:[%s2 + $0x20] sm:$0xf]
    %v984 = vld [vmem:[%s2 + $0x24] sm:$0xf]
    %v985 = vld [vmem:[%s2 + $0x28] sm:$0xf]
    %v986 = vld [vmem:[%s2 + $0x2c] sm:$0xf]
    %v987 = vld [vmem:[%s2 + $0x30] sm:$0xf]
    %v988 = vld [vmem:[%s2 + $0x34] sm:$0xf]
    %v989 = vld [vmem:[%s2 + $0x38] sm:$0xf]
    %v990 = vld [vmem:[%s2 + $0x3c] sm:$0xf]
    %v991 = vld [vmem:[%s2 + $0x40] sm:$0xf]
    %v992 = vld [vmem:[%s2 + $0x44] sm:$0xf]
    %v993 = vld [vmem:[%s2 + $0x48] sm:$0xf]
    %v994 = vld [vmem:[%s2 + $0x4c] sm:$0xf]
    %v995 = vld [vmem:[%s2 + $0x50] sm:$0xf]
    %v996 = vld [vmem:[%s2 + $0x54] sm:$0xf]
    %v997 = vld [vmem:[%s2 + $0x58] sm:$0xf]
    %v998 = vld [vmem:[%s2 + $0x5c] sm:$0xf]
    %v999 = vld [vmem:[%s2 + $0x60] sm:$0xf]
    %v1000 = vld [vmem:[%s2 + $0x64] sm:$0xf]
    %v1001 = vld [vmem:[%s2 + $0x68] sm:$0xf]
    %v1002 = vld [vmem:[%s2 + $0x6c] sm:$0xf]
    %v1003 = vld [vmem:[%s2 + $0x70] sm:$0xf]
    %v1004 = vld [vmem:[%s2 + $0x74] sm:$0xf]
    %v1005 = vld [vmem:[%s2 + $0x78] sm:$0xf]
    %v1006 = vld [vmem:[%s2 + $0x7c] sm:$0xf]
    %v1007 = vld [vmem:[%s3] sm:$0xf]
    %v1008 = vld [vmem:[%s3 + $0x4] sm:$0xf]
    %v1009 = vld [vmem:[%s3 + $0x8] sm:$0xf]
    %v1010 = vld [vmem:[%s3 + $0xc] sm:$0xf]
    %v1011 = vld [vmem:[%s3 + $0x10] sm:$0xf]
    %v1012 = vld [vmem:[%s3 + $0x14] sm:$0xf]
    %v1013 = vld [vmem:[%s3 + $0x18] sm:$0xf]
    %v1014 = vld [vmem:[%s3 + $0x1c] sm:$0xf]
    %v1015 = vld [vmem:[%s3 + $0x20] sm:$0xf]
    %v1016 = vld [vmem:[%s3 + $0x24] sm:$0xf]
    %v1017 = vld [vmem:[%s3 + $0x28] sm:$0xf]
    %v1018 = vld [vmem:[%s3 + $0x2c] sm:$0xf]
    %v1019 = vld [vmem:[%s3 + $0x30] sm:$0xf]
    %v1020 = vld [vmem:[%s3 + $0x34] sm:$0xf]
    %v1021 = vld [vmem:[%s3 + $0x38] sm:$0xf]
    %v1022 = vld [vmem:[%s3 + $0x3c] sm:$0xf]
    %v1023 = vld [vmem:[#allocation2] sm:$0xff]
    %v1024 = vld [vmem:[#allocation2 + $0x8] sm:$0xff]
    %v1025 = vld [vmem:[#allocation2 + $0x10] sm:$0xff]
    %v1026 = vld [vmem:[#allocation2 + $0x18] sm:$0xff]
    %v1027 = vld [vmem:[#allocation2 + $0x20] sm:$0xff]
    %v1028 = vld [vmem:[#allocation2 + $0x28] sm:$0xff]
    %v1029 = vld [vmem:[#allocation2 + $0x30] sm:$0xff]
    %v1030 = vld [vmem:[#allocation2 + $0x38] sm:$0xff]
    %v1031 = vld [vmem:[#allocation2 + $0x40] sm:$0xff]
    %v1032 = vld [vmem:[#allocation2 + $0x48] sm:$0xff]
    %v1033 = vld [vmem:[#allocation2 + $0x50] sm:$0xff]
    %v1034 = vld [vmem:[#allocation2 + $0x58] sm:$0xff]
    %v1035 = vld [vmem:[#allocation2 + $0x60] sm:$0xff]
    %v1036 = vld [vmem:[#allocation2 + $0x68] sm:$0xff]
    %v1037 = vld [vmem:[#allocation2 + $0x70] sm:$0xff]
    %v1038 = vld [vmem:[#allocation2 + $0x78] sm:$0xff]
    %v1039 = vld [vmem:[#allocation2 + $0x80] sm:$0xff]
    %v1040 = vld [vmem:[#allocation2 + $0x88] sm:$0xff]
    %v1041 = vld [vmem:[#allocation2 + $0x90] sm:$0xff]
    %v1042 = vld [vmem:[#allocation2 + $0x98] sm:$0xff]
    %v1043 = vld [vmem:[#allocation2 + $0xa0] sm:$0xff]
    %v1044 = vld [vmem:[#allocation2 + $0xa8] sm:$0xff]
    %v1045 = vld [vmem:[#allocation2 + $0xb0] sm:$0xff]
    %v1046 = vld [vmem:[#allocation2 + $0xb8] sm:$0xff]
    %v1047 = vld [vmem:[#allocation2 + $0xc0] sm:$0xff]
    %v1048 = vld [vmem:[#allocation2 + $0xc8] sm:$0xff]
    %v1049 = vld [vmem:[#allocation2 + $0xd0] sm:$0xff]
    %v1050 = vld [vmem:[#allocation2 + $0xd8] sm:$0xff]
    %v1051 = vld [vmem:[#allocation2 + $0xe0] sm:$0xff]
    %v1052 = vld [vmem:[#allocation2 + $0xe8] sm:$0xff]
    %v1053 = vld [vmem:[#allocation2 + $0xf0] sm:$0xff]
    %v1054 = vld [vmem:[#allocation2 + $0xf8] sm:$0xff]
    %1056 = vset.pattern.permute.xlu0 0
    %1057 = vperm.xlu0 %1056, %v912
    %v1058 = vpop.permute.xlu0 %1057
    %1061 = vset.pattern.permute.xlu0 0
    %1062 = vperm.xlu0 %1061, %v914
    %v1063 = vpop.permute.xlu0 %1062
    %1066 = vset.pattern.permute.xlu0 0
    %1067 = vperm.xlu0 %1066, %v916
    %v1068 = vpop.permute.xlu0 %1067
    %1071 = vset.pattern.permute.xlu0 0
    %1072 = vperm.xlu0 %1071, %v918
    %v1073 = vpop.permute.xlu0 %1072
    %1076 = vset.pattern.permute.xlu0 0
    %1077 = vperm.xlu0 %1076, %v920
    %v1078 = vpop.permute.xlu0 %1077
    %1081 = vset.pattern.permute.xlu0 0
    %1082 = vperm.xlu0 %1081, %v922
    %v1083 = vpop.permute.xlu0 %1082
    %1086 = vset.pattern.permute.xlu0 0
    %1087 = vperm.xlu0 %1086, %v924
    %v1088 = vpop.permute.xlu0 %1087
    %1091 = vset.pattern.permute.xlu0 0
    %1092 = vperm.xlu0 %1091, %v926
    %v1093 = vpop.permute.xlu0 %1092
    %1096 = vset.pattern.permute.xlu0 0
    %1097 = vperm.xlu0 %1096, %v928
    %v1098 = vpop.permute.xlu0 %1097
    %1101 = vset.pattern.permute.xlu0 0
    %1102 = vperm.xlu0 %1101, %v930
    %v1103 = vpop.permute.xlu0 %1102
    %1106 = vset.pattern.permute.xlu0 0
    %1107 = vperm.xlu0 %1106, %v932
    %v1108 = vpop.permute.xlu0 %1107
    %1111 = vset.pattern.permute.xlu0 0
    %1112 = vperm.xlu0 %1111, %v934
    %v1113 = vpop.permute.xlu0 %1112
    %1116 = vset.pattern.permute.xlu0 0
    %1117 = vperm.xlu0 %1116, %v936
    %v1118 = vpop.permute.xlu0 %1117
    %1121 = vset.pattern.permute.xlu0 0
    %1122 = vperm.xlu0 %1121, %v938
    %v1123 = vpop.permute.xlu0 %1122
    %1126 = vset.pattern.permute.xlu0 0
    %1127 = vperm.xlu0 %1126, %v940
    %v1128 = vpop.permute.xlu0 %1127
    %1131 = vset.pattern.permute.xlu0 0
    %1132 = vperm.xlu0 %1131, %v942
    %v1133 = vpop.permute.xlu0 %1132
    %1136 = vset.pattern.permute.xlu0 0
    %1137 = vperm.xlu0 %1136, %v944
    %v1138 = vpop.permute.xlu0 %1137
    %1141 = vset.pattern.permute.xlu0 0
    %1142 = vperm.xlu0 %1141, %v946
    %v1143 = vpop.permute.xlu0 %1142
    %1146 = vset.pattern.permute.xlu0 0
    %1147 = vperm.xlu0 %1146, %v948
    %v1148 = vpop.permute.xlu0 %1147
    %1151 = vset.pattern.permute.xlu0 0
    %1152 = vperm.xlu0 %1151, %v950
    %v1153 = vpop.permute.xlu0 %1152
    %1156 = vset.pattern.permute.xlu0 0
    %1157 = vperm.xlu0 %1156, %v952
    %v1158 = vpop.permute.xlu0 %1157
    %1161 = vset.pattern.permute.xlu0 0
    %1162 = vperm.xlu0 %1161, %v954
    %v1163 = vpop.permute.xlu0 %1162
    %1166 = vset.pattern.permute.xlu0 0
    %1167 = vperm.xlu0 %1166, %v956
    %v1168 = vpop.permute.xlu0 %1167
    %1171 = vset.pattern.permute.xlu0 0
    %1172 = vperm.xlu0 %1171, %v958
    %v1173 = vpop.permute.xlu0 %1172
    %1176 = vset.pattern.permute.xlu0 0
    %1177 = vperm.xlu0 %1176, %v960
    %v1178 = vpop.permute.xlu0 %1177
    %1181 = vset.pattern.permute.xlu0 0
    %1182 = vperm.xlu0 %1181, %v962
    %v1183 = vpop.permute.xlu0 %1182
    %1186 = vset.pattern.permute.xlu0 0
    %1187 = vperm.xlu0 %1186, %v964
    %v1188 = vpop.permute.xlu0 %1187
    %1191 = vset.pattern.permute.xlu0 0
    %1192 = vperm.xlu0 %1191, %v966
    %v1193 = vpop.permute.xlu0 %1192
    %1196 = vset.pattern.permute.xlu0 0
    %1197 = vperm.xlu0 %1196, %v968
    %v1198 = vpop.permute.xlu0 %1197
    %1201 = vset.pattern.permute.xlu0 0
    %1202 = vperm.xlu0 %1201, %v970
    %v1203 = vpop.permute.xlu0 %1202
    %1206 = vset.pattern.permute.xlu0 0
    %1207 = vperm.xlu0 %1206, %v972
    %v1208 = vpop.permute.xlu0 %1207
    %1211 = vset.pattern.permute.xlu0 0
    %1212 = vperm.xlu0 %1211, %v974
    %v1213 = vpop.permute.xlu0 %1212
    %v1215 = vmul.f32 %v1023, %v1058
    %v1216 = vmul.f32 %v1024, %v1063
    %v1217 = vmul.f32 %v1025, %v1068
    %v1218 = vmul.f32 %v1026, %v1073
    %v1219 = vmul.f32 %v1027, %v1078
    %v1220 = vmul.f32 %v1028, %v1083
    %v1221 = vmul.f32 %v1029, %v1088
    %v1222 = vmul.f32 %v1030, %v1093
    %v1223 = vmul.f32 %v1031, %v1098
    %v1224 = vmul.f32 %v1032, %v1103
    %v1225 = vmul.f32 %v1033, %v1108
    %v1226 = vmul.f32 %v1034, %v1113
    %v1227 = vmul.f32 %v1035, %v1118
    %v1228 = vmul.f32 %v1036, %v1123
    %v1229 = vmul.f32 %v1037, %v1128
    %v1230 = vmul.f32 %v1038, %v1133
    %v1231 = vmul.f32 %v1039, %v1138
    %v1232 = vmul.f32 %v1040, %v1143
    %v1233 = vmul.f32 %v1041, %v1148
    %v1234 = vmul.f32 %v1042, %v1153
    %v1235 = vmul.f32 %v1043, %v1158
    %v1236 = vmul.f32 %v1044, %v1163
    %v1237 = vmul.f32 %v1045, %v1168
    %v1238 = vmul.f32 %v1046, %v1173
    %v1239 = vmul.f32 %v1047, %v1178
    %v1240 = vmul.f32 %v1048, %v1183
    %v1241 = vmul.f32 %v1049, %v1188
    %v1242 = vmul.f32 %v1050, %v1193
    %v1243 = vmul.f32 %v1051, %v1198
    %v1244 = vmul.f32 %v1052, %v1203
    %v1245 = vmul.f32 %v1053, %v1208
    %v1246 = vmul.f32 %v1054, %v1213
    %v1279 = vunpack.c.l.b16 %v975
    %v1280 = vunpack.c.l.b16 %v976
    %v1281 = vunpack.c.l.b16 %v977
    %v1282 = vunpack.c.l.b16 %v978
    %v1283 = vunpack.c.l.b16 %v979
    %v1284 = vunpack.c.l.b16 %v980
    %v1285 = vunpack.c.l.b16 %v981
    %v1286 = vunpack.c.l.b16 %v982
    %v1287 = vunpack.c.l.b16 %v983
    %v1288 = vunpack.c.l.b16 %v984
    %v1289 = vunpack.c.l.b16 %v985
    %v1290 = vunpack.c.l.b16 %v986
    %v1291 = vunpack.c.l.b16 %v987
    %v1292 = vunpack.c.l.b16 %v988
    %v1293 = vunpack.c.l.b16 %v989
    %v1294 = vunpack.c.l.b16 %v990
    %v1295 = vunpack.c.l.b16 %v991
    %v1296 = vunpack.c.l.b16 %v992
    %v1297 = vunpack.c.l.b16 %v993
    %v1298 = vunpack.c.l.b16 %v994
    %v1299 = vunpack.c.l.b16 %v995
    %v1300 = vunpack.c.l.b16 %v996
    %v1301 = vunpack.c.l.b16 %v997
    %v1302 = vunpack.c.l.b16 %v998
    %v1303 = vunpack.c.l.b16 %v999
    %v1304 = vunpack.c.l.b16 %v1000
    %v1305 = vunpack.c.l.b16 %v1001
    %v1306 = vunpack.c.l.b16 %v1002
    %v1307 = vunpack.c.l.b16 %v1003
    %v1308 = vunpack.c.l.b16 %v1004
    %v1309 = vunpack.c.l.b16 %v1005
    %v1310 = vunpack.c.l.b16 %v1006
    %v1311 = vpack.c.b16 %v1280, %v1279
    %v1312 = vpack.c.b16 %v1282, %v1281
    %v1313 = vpack.c.b16 %v1284, %v1283
    %v1314 = vpack.c.b16 %v1286, %v1285
    %v1315 = vpack.c.b16 %v1288, %v1287
    %v1316 = vpack.c.b16 %v1290, %v1289
    %v1317 = vpack.c.b16 %v1292, %v1291
    %v1318 = vpack.c.b16 %v1294, %v1293
    %v1319 = vpack.c.b16 %v1296, %v1295
    %v1320 = vpack.c.b16 %v1298, %v1297
    %v1321 = vpack.c.b16 %v1300, %v1299
    %v1322 = vpack.c.b16 %v1302, %v1301
    %v1323 = vpack.c.b16 %v1304, %v1303
    %v1324 = vpack.c.b16 %v1306, %v1305
    %v1325 = vpack.c.b16 %v1308, %v1307
    %v1326 = vpack.c.b16 %v1310, %v1309
    %v1359 = vunpack.c.l.b16 %v1007
    %v1360 = vunpack.c.l.b16 %v1008
    %v1361 = vunpack.c.l.b16 %v1009
    %v1362 = vunpack.c.l.b16 %v1010
    %v1363 = vunpack.c.l.b16 %v1011
    %v1364 = vunpack.c.l.b16 %v1012
    %v1365 = vunpack.c.l.b16 %v1013
    %v1366 = vunpack.c.l.b16 %v1014
    %v1367 = vunpack.c.l.b16 %v1015
    %v1368 = vunpack.c.l.b16 %v1016
    %v1369 = vunpack.c.l.b16 %v1017
    %v1370 = vunpack.c.l.b16 %v1018
    %v1371 = vunpack.c.l.b16 %v1019
    %v1372 = vunpack.c.l.b16 %v1020
    %v1373 = vunpack.c.l.b16 %v1021
    %v1374 = vunpack.c.l.b16 %v1022
    %v1375 = vpack.c.b16 %v1360, %v1359
    %v1376 = vpack.c.b16 %v1362, %v1361
    %v1377 = vpack.c.b16 %v1364, %v1363
    %v1378 = vpack.c.b16 %v1366, %v1365
    %v1379 = vpack.c.b16 %v1368, %v1367
    %v1380 = vpack.c.b16 %v1370, %v1369
    %v1381 = vpack.c.b16 %v1372, %v1371
    %v1382 = vpack.c.b16 %v1374, %v1373
    %1391 = vmatprep.subr.bf16.mxu0 0
    %1392 = vmatpush1.bf16.msra.mxu0 %v1375
    %1393 = vmatprep.subr.bf16.mxu0 0
    %1394 = vmatpush1.bf16.msra.mxu0 %v1376
    %1395 = vmatprep.subr.bf16.mxu0 0
    %1396 = vmatpush1.bf16.msra.mxu0 %v1377
    %1397 = vmatprep.subr.bf16.mxu0 0
    %1398 = vmatpush1.bf16.msra.mxu0 %v1378
    %1399 = vmatprep.subr.bf16.mxu0 0
    %1400 = vmatpush1.bf16.msra.mxu0 %v1379
    %1401 = vmatprep.subr.bf16.mxu0 0
    %1402 = vmatpush1.bf16.msra.mxu0 %v1380
    %1403 = vmatprep.subr.bf16.mxu0 0
    %1404 = vmatpush1.bf16.msra.mxu0 %v1381
    %1405 = vmatprep.subr.bf16.mxu0 0
    %1406 = vmatpush1.bf16.msra.mxu0 %v1382
    %1407 = vmatprep.subr.bf16.mxu0 0
    %1408 = vmatpush1.bf16.msra.mxu0 0
    %1409 = vmatprep.subr.bf16.mxu0 0
    %1410 = vmatpush1.bf16.msra.mxu0 0
    %1411 = vmatprep.subr.bf16.mxu0 0
    %1412 = vmatpush1.bf16.msra.mxu0 0
    %1413 = vmatprep.subr.bf16.mxu0 0
    %1414 = vmatpush1.bf16.msra.mxu0 0
    %1415 = vmatprep.subr.bf16.mxu0 0
    %1416 = vmatpush1.bf16.msra.mxu0 0
    %1417 = vmatprep.subr.bf16.mxu0 0
    %1418 = vmatpush1.bf16.msra.mxu0 0
    %1419 = vmatprep.subr.bf16.mxu0 0
    %1420 = vmatpush1.bf16.msra.mxu0 0
    %1421 = vmatprep.subr.bf16.mxu0 0
    %1422 = vmatpush1.bf16.msra.mxu0 0
    %1423 = vmatprep.mubr.bf16.mxu0 0
    %1424 = vmatmul.mubr.bf16.gmra.mrb[0].mxu0 %v1311
    %v1425 = vpop.f32.mrb[0].mxu0
    %v1426 = vadd.f32 %v1215, %v1425
    %v1427 = vpop.f32.mrb[0].mxu0
    %v1428 = vpop.f32.mrb[0].mxu0
    %v1429 = vadd.f32 %v1216, %v1428
    %v1430 = vpop.f32.mrb[0].mxu0
    %1431 = vmatprep.mubr.bf16.mxu0 0
    %1432 = vmatmul.mubr.bf16.gmra.mrb[0].mxu0 %v1312
    %v1433 = vpop.f32.mrb[0].mxu0
    %v1434 = vadd.f32 %v1217, %v1433
    %v1435 = vpop.f32.mrb[0].mxu0
    %v1436 = vpop.f32.mrb[0].mxu0
    %v1437 = vadd.f32 %v1218, %v1436
    %v1438 = vpop.f32.mrb[0].mxu0
    %1439 = vmatprep.mubr.bf16.mxu0 0
    %1440 = vmatmul.mubr.bf16.gmra.mrb[0].mxu0 %v1313
    %v1441 = vpop.f32.mrb[0].mxu0
    %v1442 = vadd.f32 %v1219, %v1441
    %v1443 = vpop.f32.mrb[0].mxu0
    %v1444 = vpop.f32.mrb[0].mxu0
    %v1445 = vadd.f32 %v1220, %v1444
    %v1446 = vpop.f32.mrb[0].mxu0
    %1447 = vmatprep.mubr.bf16.mxu0 0
    %1448 = vmatmul.mubr.bf16.gmra.mrb[0].mxu0 %v1314
    %v1449 = vpop.f32.mrb[0].mxu0
    %v1450 = vadd.f32 %v1221, %v1449
    %v1451 = vpop.f32.mrb[0].mxu0
    %v1452 = vpop.f32.mrb[0].mxu0
    %v1453 = vadd.f32 %v1222, %v1452
    %v1454 = vpop.f32.mrb[0].mxu0
    %1455 = vmatprep.mubr.bf16.mxu0 0
    %1456 = vmatmul.mubr.bf16.gmra.mrb[0].mxu0 %v1315
    %v1457 = vpop.f32.mrb[0].mxu0
    %v1458 = vadd.f32 %v1223, %v1457
    %v1459 = vpop.f32.mrb[0].mxu0
    %v1460 = vpop.f32.mrb[0].mxu0
    %v1461 = vadd.f32 %v1224, %v1460
    %v1462 = vpop.f32.mrb[0].mxu0
    %1463 = vmatprep.mubr.bf16.mxu0 0
    %1464 = vmatmul.mubr.bf16.gmra.mrb[0].mxu0 %v1316
    %v1465 = vpop.f32.mrb[0].mxu0
    %v1466 = vadd.f32 %v1225, %v1465
    %v1467 = vpop.f32.mrb[0].mxu0
    %v1468 = vpop.f32.mrb[0].mxu0
    %v1469 = vadd.f32 %v1226, %v1468
    %v1470 = vpop.f32.mrb[0].mxu0
    %1471 = vmatprep.mubr.bf16.mxu0 0
    %1472 = vmatmul.mubr.bf16.gmra.mrb[0].mxu0 %v1317
    %v1473 = vpop.f32.mrb[0].mxu0
    %v1474 = vadd.f32 %v1227, %v1473
    %v1475 = vpop.f32.mrb[0].mxu0
    %v1476 = vpop.f32.mrb[0].mxu0
    %v1477 = vadd.f32 %v1228, %v1476
    %v1478 = vpop.f32.mrb[0].mxu0
    %1479 = vmatprep.mubr.bf16.mxu0 0
    %1480 = vmatmul.mubr.bf16.gmra.mrb[0].mxu0 %v1318
    %v1481 = vpop.f32.mrb[0].mxu0
    %v1482 = vadd.f32 %v1229, %v1481
    %v1483 = vpop.f32.mrb[0].mxu0
    %v1484 = vpop.f32.mrb[0].mxu0
    %v1485 = vadd.f32 %v1230, %v1484
    %v1486 = vpop.f32.mrb[0].mxu0
    %1487 = vmatprep.mubr.bf16.mxu0 0
    %1488 = vmatmul.mubr.bf16.gmra.mrb[0].mxu0 %v1319
    %v1489 = vpop.f32.mrb[0].mxu0
    %v1490 = vadd.f32 %v1231, %v1489
    %v1491 = vpop.f32.mrb[0].mxu0
    %v1492 = vpop.f32.mrb[0].mxu0
    %v1493 = vadd.f32 %v1232, %v1492
    %v1494 = vpop.f32.mrb[0].mxu0
    %1495 = vmatprep.mubr.bf16.mxu0 0
    %1496 = vmatmul.mubr.bf16.gmra.mrb[0].mxu0 %v1320
    %v1497 = vpop.f32.mrb[0].mxu0
    %v1498 = vadd.f32 %v1233, %v1497
    %v1499 = vpop.f32.mrb[0].mxu0
    %v1500 = vpop.f32.mrb[0].mxu0
    %v1501 = vadd.f32 %v1234, %v1500
    %v1502 = vpop.f32.mrb[0].mxu0
    %1503 = vmatprep.mubr.bf16.mxu0 0
    %1504 = vmatmul.mubr.bf16.gmra.mrb[0].mxu0 %v1321
    %v1505 = vpop.f32.mrb[0].mxu0
    %v1506 = vadd.f32 %v1235, %v1505
    %v1507 = vpop.f32.mrb[0].mxu0
    %v1508 = vpop.f32.mrb[0].mxu0
    %v1509 = vadd.f32 %v1236, %v1508
    %v1510 = vpop.f32.mrb[0].mxu0
    %1511 = vmatprep.mubr.bf16.mxu0 0
    %1512 = vmatmul.mubr.bf16.gmra.mrb[0].mxu0 %v1322
    %v1513 = vpop.f32.mrb[0].mxu0
    %v1514 = vadd.f32 %v1237, %v1513
    %v1515 = vpop.f32.mrb[0].mxu0
    %v1516 = vpop.f32.mrb[0].mxu0
    %v1517 = vadd.f32 %v1238, %v1516
    %v1518 = vpop.f32.mrb[0].mxu0
    %1519 = vmatprep.mubr.bf16.mxu0 0
    %1520 = vmatmul.mubr.bf16.gmra.mrb[0].mxu0 %v1323
    %v1521 = vpop.f32.mrb[0].mxu0
    %v1522 = vadd.f32 %v1239, %v1521
    %v1523 = vpop.f32.mrb[0].mxu0
    %v1524 = vpop.f32.mrb[0].mxu0
    %v1525 = vadd.f32 %v1240, %v1524
    %v1526 = vpop.f32.mrb[0].mxu0
    %1527 = vmatprep.mubr.bf16.mxu0 0
    %1528 = vmatmul.mubr.bf16.gmra.mrb[0].mxu0 %v1324
    %v1529 = vpop.f32.mrb[0].mxu0
    %v1530 = vadd.f32 %v1241, %v1529
    %v1531 = vpop.f32.mrb[0].mxu0
    %v1532 = vpop.f32.mrb[0].mxu0
    %v1533 = vadd.f32 %v1242, %v1532
    %v1534 = vpop.f32.mrb[0].mxu0
    %1535 = vmatprep.mubr.bf16.mxu0 0
    %1536 = vmatmul.mubr.bf16.gmra.mrb[0].mxu0 %v1325
    %v1537 = vpop.f32.mrb[0].mxu0
    %v1538 = vadd.f32 %v1243, %v1537
    %v1539 = vpop.f32.mrb[0].mxu0
    %v1540 = vpop.f32.mrb[0].mxu0
    %v1541 = vadd.f32 %v1244, %v1540
    %v1542 = vpop.f32.mrb[0].mxu0
    %1543 = vmatprep.mubr.bf16.mxu0 0
    %1544 = vmatmul.mubr.bf16.gmra.mrb[0].mxu0 %v1326
    %v1545 = vpop.f32.mrb[0].mxu0
    %v1546 = vadd.f32 %v1245, %v1545
    %v1547 = vpop.f32.mrb[0].mxu0
    %v1548 = vpop.f32.mrb[0].mxu0
    %v1549 = vadd.f32 %v1246, %v1548
    %v1550 = vpop.f32.mrb[0].mxu0
    %1551 = vdwg.mxu0
    %v1552 = vld [vmem:[%s4] sm:$0x1]
    %v1554 = vlaneseq
    %v1555 = vshrl.u32 %v1554, 7
    %v1556 = vsub.s32 0, %v1555
    %v1557 = vrot.slane %v1552, %v1556
    %v1559 = vadd.f32 %v1426, %v1557
    %v1560 = vadd.f32 %v1429, %v1557
    %v1561 = vadd.f32 %v1434, %v1557
    %v1562 = vadd.f32 %v1437, %v1557
    %v1563 = vadd.f32 %v1442, %v1557
    %v1564 = vadd.f32 %v1445, %v1557
    %v1565 = vadd.f32 %v1450, %v1557
    %v1566 = vadd.f32 %v1453, %v1557
    %v1567 = vadd.f32 %v1458, %v1557
    %v1568 = vadd.f32 %v1461, %v1557
    %v1569 = vadd.f32 %v1466, %v1557
    %v1570 = vadd.f32 %v1469, %v1557
    %v1571 = vadd.f32 %v1474, %v1557
    %v1572 = vadd.f32 %v1477, %v1557
    %v1573 = vadd.f32 %v1482, %v1557
    %v1574 = vadd.f32 %v1485, %v1557
    %v1575 = vadd.f32 %v1490, %v1557
    %v1576 = vadd.f32 %v1493, %v1557
    %v1577 = vadd.f32 %v1498, %v1557
    %v1578 = vadd.f32 %v1501, %v1557
    %v1579 = vadd.f32 %v1506, %v1557
    %v1580 = vadd.f32 %v1509, %v1557
    %v1581 = vadd.f32 %v1514, %v1557
    %v1582 = vadd.f32 %v1517, %v1557
    %v1583 = vadd.f32 %v1522, %v1557
    %v1584 = vadd.f32 %v1525, %v1557
    %v1585 = vadd.f32 %v1530, %v1557
    %v1586 = vadd.f32 %v1533, %v1557
    %v1587 = vadd.f32 %v1538, %v1557
    %v1588 = vadd.f32 %v1541, %v1557
    %v1589 = vadd.f32 %v1546, %v1557
    %v1590 = vadd.f32 %v1549, %v1557
    %v1591 = vmax.f32 %v1559, 0.0
    %v1592 = vmax.f32 %v1560, 0.0
    %v1593 = vmax.f32 %v1561, 0.0
    %v1594 = vmax.f32 %v1562, 0.0
    %v1595 = vmax.f32 %v1563, 0.0
    %v1596 = vmax.f32 %v1564, 0.0
    %v1597 = vmax.f32 %v1565, 0.0
    %v1598 = vmax.f32 %v1566, 0.0
    %v1599 = vmax.f32 %v1567, 0.0
    %v1600 = vmax.f32 %v1568, 0.0
    %v1601 = vmax.f32 %v1569, 0.0
    %v1602 = vmax.f32 %v1570, 0.0
    %v1603 = vmax.f32 %v1571, 0.0
    %v1604 = vmax.f32 %v1572, 0.0
    %v1605 = vmax.f32 %v1573, 0.0
    %v1606 = vmax.f32 %v1574, 0.0
    %v1607 = vmax.f32 %v1575, 0.0
    %v1608 = vmax.f32 %v1576, 0.0
    %v1609 = vmax.f32 %v1577, 0.0
    %v1610 = vmax.f32 %v1578, 0.0
    %v1611 = vmax.f32 %v1579, 0.0
    %v1612 = vmax.f32 %v1580, 0.0
    %v1613 = vmax.f32 %v1581, 0.0
    %v1614 = vmax.f32 %v1582, 0.0
    %v1615 = vmax.f32 %v1583, 0.0
    %v1616 = vmax.f32 %v1584, 0.0
    %v1617 = vmax.f32 %v1585, 0.0
    %v1618 = vmax.f32 %v1586, 0.0
    %v1619 = vmax.f32 %v1587, 0.0
    %v1620 = vmax.f32 %v1588, 0.0
    %v1621 = vmax.f32 %v1589, 0.0
    %v1622 = vmax.f32 %v1590, 0.0
    %v1623 = vpack.c.bf16 %v1592, %v1591
    %v1624 = vpack.c.bf16 %v1594, %v1593
    %v1625 = vpack.c.bf16 %v1596, %v1595
    %v1626 = vpack.c.bf16 %v1598, %v1597
    %v1627 = vpack.c.bf16 %v1600, %v1599
    %v1628 = vpack.c.bf16 %v1602, %v1601
    %v1629 = vpack.c.bf16 %v1604, %v1603
    %v1630 = vpack.c.bf16 %v1606, %v1605
    %v1631 = vpack.c.bf16 %v1608, %v1607
    %v1632 = vpack.c.bf16 %v1610, %v1609
    %v1633 = vpack.c.bf16 %v1612, %v1611
    %v1634 = vpack.c.bf16 %v1614, %v1613
    %v1635 = vpack.c.bf16 %v1616, %v1615
    %v1636 = vpack.c.bf16 %v1618, %v1617
    %v1637 = vpack.c.bf16 %v1620, %v1619
    %v1638 = vpack.c.bf16 %v1622, %v1621
    %v1655 = vunpack.c.l.b16 %v1623
    %v1656 = vunpack.c.h.b16 %v1623
    %v1657 = vunpack.c.l.b16 %v1624
    %v1658 = vunpack.c.h.b16 %v1624
    %v1659 = vunpack.c.l.b16 %v1625
    %v1660 = vunpack.c.h.b16 %v1625
    %v1661 = vunpack.c.l.b16 %v1626
    %v1662 = vunpack.c.h.b16 %v1626
    %v1663 = vunpack.c.l.b16 %v1627
    %v1664 = vunpack.c.h.b16 %v1627
    %v1665 = vunpack.c.l.b16 %v1628
    %v1666 = vunpack.c.h.b16 %v1628
    %v1667 = vunpack.c.l.b16 %v1629
    %v1668 = vunpack.c.h.b16 %v1629
    %v1669 = vunpack.c.l.b16 %v1630
    %v1670 = vunpack.c.h.b16 %v1630
    %v1671 = vunpack.c.l.b16 %v1631
    %v1672 = vunpack.c.h.b16 %v1631
    %v1673 = vunpack.c.l.b16 %v1632
    %v1674 = vunpack.c.h.b16 %v1632
    %v1675 = vunpack.c.l.b16 %v1633
    %v1676 = vunpack.c.h.b16 %v1633
    %v1677 = vunpack.c.l.b16 %v1634
    %v1678 = vunpack.c.h.b16 %v1634
    %v1679 = vunpack.c.l.b16 %v1635
    %v1680 = vunpack.c.h.b16 %v1635
    %v1681 = vunpack.c.l.b16 %v1636
    %v1682 = vunpack.c.h.b16 %v1636
    %v1683 = vunpack.c.l.b16 %v1637
    %v1684 = vunpack.c.h.b16 %v1637
    %v1685 = vunpack.c.l.b16 %v1638
    %v1686 = vunpack.c.h.b16 %v1638
    %v1687 = vpack.c.b16 %v1655, %v1655
    %v1688 = vpack.c.b16 %v1656, %v1656
    %v1689 = vpack.c.b16 %v1657, %v1657
    %v1690 = vpack.c.b16 %v1658, %v1658
    %v1691 = vpack.c.b16 %v1659, %v1659
    %v1692 = vpack.c.b16 %v1660, %v1660
    %v1693 = vpack.c.b16 %v1661, %v1661
    %v1694 = vpack.c.b16 %v1662, %v1662
    %v1695 = vpack.c.b16 %v1663, %v1663
    %v1696 = vpack.c.b16 %v1664, %v1664
    %v1697 = vpack.c.b16 %v1665, %v1665
    %v1698 = vpack.c.b16 %v1666, %v1666
    %v1699 = vpack.c.b16 %v1667, %v1667
    %v1700 = vpack.c.b16 %v1668, %v1668
    %v1701 = vpack.c.b16 %v1669, %v1669
    %v1702 = vpack.c.b16 %v1670, %v1670
    %v1703 = vpack.c.b16 %v1671, %v1671
    %v1704 = vpack.c.b16 %v1672, %v1672
    %v1705 = vpack.c.b16 %v1673, %v1673
    %v1706 = vpack.c.b16 %v1674, %v1674
    %v1707 = vpack.c.b16 %v1675, %v1675
    %v1708 = vpack.c.b16 %v1676, %v1676
    %v1709 = vpack.c.b16 %v1677, %v1677
    %v1710 = vpack.c.b16 %v1678, %v1678
    %v1711 = vpack.c.b16 %v1679, %v1679
    %v1712 = vpack.c.b16 %v1680, %v1680
    %v1713 = vpack.c.b16 %v1681, %v1681
    %v1714 = vpack.c.b16 %v1682, %v1682
    %v1715 = vpack.c.b16 %v1683, %v1683
    %v1716 = vpack.c.b16 %v1684, %v1684
    %v1717 = vpack.c.b16 %v1685, %v1685
    %v1718 = vpack.c.b16 %v1686, %v1686
    %1751 = vst [vmem:[%s5] sm:$0xf] %v1687
    %1752 = vst [vmem:[%s5 + $0x4] sm:$0xf] %v1688
    %1753 = vst [vmem:[%s5 + $0x8] sm:$0xf] %v1689
    %1754 = vst [vmem:[%s5 + $0xc] sm:$0xf] %v1690
    %1755 = vst [vmem:[%s5 + $0x10] sm:$0xf] %v1691
    %1756 = vst [vmem:[%s5 + $0x14] sm:$0xf] %v1692
    %1757 = vst [vmem:[%s5 + $0x18] sm:$0xf] %v1693
    %1758 = vst [vmem:[%s5 + $0x1c] sm:$0xf] %v1694
    %1759 = vst [vmem:[%s5 + $0x20] sm:$0xf] %v1695
    %1760 = vst [vmem:[%s5 + $0x24] sm:$0xf] %v1696
    %1761 = vst [vmem:[%s5 + $0x28] sm:$0xf] %v1697
    %1762 = vst [vmem:[%s5 + $0x2c] sm:$0xf] %v1698
    %1763 = vst [vmem:[%s5 + $0x30] sm:$0xf] %v1699
    %1764 = vst [vmem:[%s5 + $0x34] sm:$0xf] %v1700
    %1765 = vst [vmem:[%s5 + $0x38] sm:$0xf] %v1701
    %1766 = vst [vmem:[%s5 + $0x3c] sm:$0xf] %v1702
    %1767 = vst [vmem:[%s5 + $0x40] sm:$0xf] %v1703
    %1768 = vst [vmem:[%s5 + $0x44] sm:$0xf] %v1704
    %1769 = vst [vmem:[%s5 + $0x48] sm:$0xf] %v1705
    %1770 = vst [vmem:[%s5 + $0x4c] sm:$0xf] %v1706
    %1771 = vst [vmem:[%s5 + $0x50] sm:$0xf] %v1707
    %1772 = vst [vmem:[%s5 + $0x54] sm:$0xf] %v1708
    %1773 = vst [vmem:[%s5 + $0x58] sm:$0xf] %v1709
    %1774 = vst [vmem:[%s5 + $0x5c] sm:$0xf] %v1710
    %1775 = vst [vmem:[%s5 + $0x60] sm:$0xf] %v1711
    %1776 = vst [vmem:[%s5 + $0x64] sm:$0xf] %v1712
    %1777 = vst [vmem:[%s5 + $0x68] sm:$0xf] %v1713
    %1778 = vst [vmem:[%s5 + $0x6c] sm:$0xf] %v1714
    %1779 = vst [vmem:[%s5 + $0x70] sm:$0xf] %v1715
    %1780 = vst [vmem:[%s5 + $0x74] sm:$0xf] %v1716
    %1781 = vst [vmem:[%s5 + $0x78] sm:$0xf] %v1717
    %1782 = vst [vmem:[%s5 + $0x7c] sm:$0xf] %v1718
  $region29: #{sage_forward.2} parent=0 // pred_fallthru
    _
  // Predicated region
  $region30: #{sage_forward.2} parent=0 // pred_check
    _
  $region31: #{sage_forward.2} parent=0 // pred_check_branch
    %1784 = sbr.rel (0) target = $region33
  $region32: #{sage_forward.2} parent=0 // pred_region
    _
  $region33: #{sage_forward.2} parent=0 // pred_fallthru
    _
  // Predicated region
  $region34: #{sage_forward.2} parent=0 // pred_check
    _
  $region35: #{sage_forward.2} parent=0 // pred_check_branch
    %1786 = sbr.rel (0) target = $region37
  $region36: #{sage_forward.2} parent=0 // pred_region
    _
  $region37: #{sage_forward.2} parent=0 // pred_fallthru
    _

</llo_original>
